<compile_context>
chip_gen: v5e
topology: v5e:2x2
jax: 0.10.0
libtpu: 0.0.40
codegen_flags: <defaults>
</compile_context>

<pallas_src>
import jax
import jax.numpy as jnp
from jax.experimental import pallas as pl
from jax.experimental.pallas import tpu as pltpu

_LANES = 128
_SUBLANES = 8
_MAX_TW = 2048


def _round_up(a, b):
    return ((a + b - 1) // b) * b


# ---------------------------------------------------------------------------
# Kernels
# ---------------------------------------------------------------------------
def _conv_logsoftmax_store(pooled, w_ref, b_ref, o_ref):
    # 1x1 conv == channel matmul: (Vp, C) @ (C, TW) -> (Vp, TW), f32 accumulate on MXU.
    logits = jnp.dot(w_ref[...], pooled, preferred_element_type=jnp.float32)
    logits = logits + b_ref[...]                       # bias pre-broadcast to (Vp, TW)
    m = jnp.max(logits, axis=0, keepdims=True)         # log_softmax over vocab (sublanes)
    shifted = logits - m
    lse = jnp.log(jnp.sum(jnp.exp(shifted), axis=0, keepdims=True))
    o_ref[0] = (shifted - lse).astype(o_ref.dtype)


def _kernel_single_h(x_ref, w_ref, b_ref, o_ref):
    # x_ref: (1, C, H, TW) -> AdaptiveMaxPool2d((1, None)) over H -> (C, TW)
    pooled = jnp.max(x_ref[0], axis=1)
    _conv_logsoftmax_store(pooled, w_ref, b_ref, o_ref)


def _kernel_multi_h(x_ref, w_ref, b_ref, o_ref, pool_ref):
    # Running max over H chunks lives in a VMEM scratch; the matmul / log_softmax /
    # store happen only on the last chunk (output block is resident across the
    # "arbitrary" H axis, so it is written back to HBM exactly once).
    h = pl.program_id(2)
    blk = jnp.max(x_ref[0], axis=1)

    @pl.when(h == 0)
    def _():
        pool_ref[...] = blk

    @pl.when(h != 0)
    def _():
        pool_ref[...] = jnp.maximum(pool_ref[...], blk)

    @pl.when(h == pl.num_programs(2) - 1)
    def _():
        _conv_logsoftmax_store(pool_ref[...], w_ref, b_ref, o_ref)


# ---------------------------------------------------------------------------
# Tiling / VMEM budgeting
# ---------------------------------------------------------------------------
def _vmem_budget_bytes():
    """~75% of physical VMEM: 96 MiB on v5e/v6e (128 MiB), 48 MiB on v7x (64 MiB).
    Falls back to the conservative v7x figure if the query is unavailable."""
    cap = None
    try:
        cap = int(getattr(pltpu.get_tpu_info(), "vmem_capacity_bytes", 0)) or None
    except Exception:
        cap = None
    if cap is None:
        cap = 64 << 20
    return min(cap * 3 // 4, 100 << 20)


def _block_vmem_bytes(C, hc, tw, vp, x_itemsize, chunked_h):
    sub_x = _SUBLANES * (4 // x_itemsize)          # sublane padding unit for x dtype
    hc_p = _round_up(hc, sub_x)
    tw_p = _round_up(tw, _LANES)
    vp_p = _round_up(vp, _SUBLANES)
    inp = 2 * C * hc_p * tw_p * x_itemsize         # double-buffered input block
    out = 2 * vp_p * tw_p * 4                      # double-buffered output block
    bia = 2 * vp_p * tw_p * 4                      # double-buffered bias block
    wgt = 2 * _round_up(vp, sub_x) * C * x_itemsize
    pool = C * tw_p * x_itemsize if chunked_h else 0
    return inp + out + bia + wgt + pool


def _choose_tiles(B, C, H, W, vp, x_itemsize, budget):
    # W-tile candidates, largest first.  A block equal to the full W extent is always
    # layout-legal; otherwise lane-dense multiples of 128, capped at 2048.
    tws = []
    if W <= _MAX_TW:
        tws.append(W)
    tws += list(range(min(_MAX_TW, (W // _LANES) * _LANES), 0, -_LANES))
    seen = set()
    tws = [t for t in tws if not (t in seen or seen.add(t))]
    # v7x has 2 TensorCores: with batch 1 make sure the grid has >= 2 steps.
    if B == 1 and W >= 2 * _LANES:
        cap2 = _round_up(pl.cdiv(W, 2), _LANES)
        filt = [t for t in tws if t <= cap2]
        tws = filt or tws
    # H-chunk candidates: full H first, then exact divisors that are multiples of 8
    # (exact divisors only, so the max-reduce never sees padded rows).
    hcs = [H] + sorted({d for d in range(_SUBLANES, H, _SUBLANES) if H % d == 0},
                       reverse=True)
    for tw in tws:               # prefer a large, lane-dense W tile ...
        for hc in hcs:           # ... and chunk H (instead of shrinking W) if needed
            if _block_vmem_bytes(C, hc, tw, vp, x_itemsize, hc < H) <= budget:
                return tw, hc
    return tws[-1], hcs[-1]


# ---------------------------------------------------------------------------
# Wrapper
# ---------------------------------------------------------------------------
def decoder_forward(x_nchw, weight, bias, *, tile_w=None, tile_h=None):
    """x_nchw: (B, 256, H, W) float32 or bfloat16
       weight: (Vp, 256)  -- PyTorch Conv2d weight (Vp, 256, 1, 1) squeezed
       bias:   (Vp,)
       returns (B, Vp, W) float32 log-probabilities (matches the PyTorch module)."""
    B, C, H, W = x_nchw.shape
    Vp = weight.shape[0]
    x_dtype = x_nchw.dtype
    itemsize = jnp.dtype(x_dtype).itemsize

    budget = _vmem_budget_bytes()
    tw_auto, hc_auto = _choose_tiles(B, C, H, W, Vp, itemsize, budget)
    TW = tile_w if tile_w is not None else tw_auto
    HC = tile_h if tile_h is not None else hc_auto
    n_w = pl.cdiv(W, TW)
    n_h = pl.cdiv(H, HC)
    chunked_h = n_h > 1

    w_k = weight.astype(x_dtype)                       # tiny; resident across the grid
    b_k = jnp.broadcast_to(bias.astype(jnp.float32).reshape(Vp, 1), (Vp, W))

    in_specs = [
        pl.BlockSpec((1, C, HC, TW), lambda b, j, h: (b, 0, h, j)),
        pl.BlockSpec((Vp, C), lambda b, j, h: (0, 0)),
        pl.BlockSpec((Vp, TW), lambda b, j, h: (0, j)),
    ]
    out_spec = pl.BlockSpec((1, Vp, TW), lambda b, j, h: (b, 0, j))
    scratch = [pltpu.VMEM((C, TW), x_dtype)] if chunked_h else []
    kernel = _kernel_multi_h if chunked_h else _kernel_single_h

    cost = pl.CostEstimate(
        flops=2 * B * Vp * C * W,
        transcendentals=B * Vp * W,
        bytes_accessed=(B * C * H * W * itemsize + B * Vp * W * 4
                        + Vp * C * itemsize + Vp * W * 4),
    )

    return pl.pallas_call(
        kernel,
        out_shape=jax.ShapeDtypeStruct((B, Vp, W), jnp.float32),
        grid_spec=pltpu.PrefetchScalarGridSpec(
            num_scalar_prefetch=0,
            grid=(B, n_w, n_h),
            in_specs=in_specs,
            out_specs=out_spec,
            scratch_shapes=scratch,
        ),
        compiler_params=pltpu.CompilerParams(
            dimension_semantics=("parallel", "parallel", "arbitrary"),
            vmem_limit_bytes=int(budget),
        ),
        cost_estimate=cost,
    )(x_nchw, w_k, b_k)


# ---------------------------------------------------------------------------
# Reference + test
# ---------------------------------------------------------------------------
def _reference_forward(x_nchw, weight, bias):
    pooled = jnp.max(x_nchw.astype(jnp.float32), axis=2)                 # (B, C, W)
    logits = jnp.einsum("bcw,vc->bvw", pooled, weight.astype(jnp.float32))
    logits = logits + bias.astype(jnp.float32)[None, :, None]
    return jax.nn.log_softmax(logits, axis=1)                            # (B, Vp, W)


if __name__ == "__main__":
    # Small shapes consistent with the module (in_channels fixed at 256 by the module).
    B, C, H, W = 2, 256, 16, 256
    vocab_size = 32
    Vp = vocab_size + 1

    key = jax.random.PRNGKey(0)
    kx, kw, kb = jax.random.split(key, 3)
    # x / weight snapped to exact bf16 values so the f32, tiled and bf16 kernel paths
    # all agree with the reference to tight tolerance regardless of MXU matmul passes.
    x = jax.random.normal(kx, (B, C, H, W), jnp.float32)
    x = x.astype(jnp.bfloat16).astype(jnp.float32)
    weight = (jax.random.normal(kw, (Vp, C), jnp.float32) * 0.05)
    weight = weight.astype(jnp.bfloat16).astype(jnp.float32)
    bias = jax.random.normal(kb, (Vp,), jnp.float32) * 0.05

    ref = _reference_forward(x, weight, bias)

    # 1) f32 input, auto tiling (single H chunk, full-W lane-dense tile).
    out = jax.block_until_ready(decoder_forward(x, weight, bias))
    assert out.shape == (B, Vp, W)
    assert jnp.allclose(out, ref, atol=1e-3, rtol=1e-3)

    # 2) Forced small tiles: exercises the multi-W-tile grid + H-chunk accumulator path.
    out_t = jax.block_until_ready(decoder_forward(x, weight, bias, tile_w=128, tile_h=8))
    assert jnp.allclose(out_t, ref, atol=1e-3, rtol=1e-3)

    # 3) bf16 input path (halves HBM read of x; f32 MXU accumulate). Lossless here
    #    because x / weight were snapped to bf16 values above.
    out_bf = jax.block_until_ready(decoder_forward(x.astype(jnp.bfloat16), weight, bias))
    assert jnp.allclose(out_bf, ref, atol=5e-3, rtol=5e-3)

    print("KERNEL_OK")
</pallas_src>

<mosaic_0001>
module attributes {stable_mosaic.version = 11 : i64} {
  func.func @_kernel_single_h(%arg0: i32, %arg1: i32, %arg2: i32, %arg3: memref<1x256x16x256xf32, #tpu.memory_space<vmem>>, %arg4: memref<33x256xf32, #tpu.memory_space<vmem>>, %arg5: memref<33x256xf32, #tpu.memory_space<vmem>>, %arg6: memref<1x33x256xf32, #tpu.memory_space<vmem>>) attributes {dimension_semantics = [#tpu.dimension_semantics<parallel>, #tpu.dimension_semantics<parallel>, #tpu.dimension_semantics<arbitrary>], iteration_bounds = array<i64: 2, 1, 1>, scalar_prefetch = 0 : i64, scratch_operands = 0 : i64, tpu.core_type = #tpu.core_type<tc>, window_params = [{transform_indices = @transform_0, window_bounds = array<i64: 1, 256, 16, 256>}, {pipeline_mode = #tpu.pipeline_mode<synchronous>, transform_indices = @transform_1, window_bounds = array<i64: 33, 256>}, {transform_indices = @transform_2, window_bounds = array<i64: 33, 256>}, {transform_indices = @transform_3, window_bounds = array<i64: 1, 33, 256>}]} {
    %c0 = arith.constant 0 : index
    %c0_0 = arith.constant 0 : index
    %c0_1 = arith.constant 0 : index
    %c0_2 = arith.constant 0 : index
    %0 = vector.load %arg3[%c0, %c0_0, %c0_1, %c0_2] : memref<1x256x16x256xf32, #tpu.memory_space<vmem>>, vector<1x256x16x256xf32>
    %1 = vector.shape_cast %0 : vector<1x256x16x256xf32> to vector<256x16x256xf32>
    %cst = arith.constant dense<0xFF800000> : vector<256x256xf32>
    %2 = vector.multi_reduction <maximumf>, %1, %cst [1] : vector<256x16x256xf32> to vector<256x256xf32>
    %c0_3 = arith.constant 0 : index
    %c0_4 = arith.constant 0 : index
    %3 = vector.load %arg4[%c0_3, %c0_4] : memref<33x256xf32, #tpu.memory_space<vmem>>, vector<33x256xf32>
    %cst_5 = arith.constant dense<0.000000e+00> : vector<33x256xf32>
    %4 = tpu.matmul %3, %2, %cst_5 {dimension_numbers = #tpu.dot_dimension_numbers<[1], [0], [0], [1], [0, 0, 1, 1], [], []>} : vector<33x256xf32>, vector<256x256xf32>, vector<33x256xf32> -> vector<33x256xf32>
    %c0_6 = arith.constant 0 : index
    %c0_7 = arith.constant 0 : index
    %5 = vector.load %arg5[%c0_6, %c0_7] : memref<33x256xf32, #tpu.memory_space<vmem>>, vector<33x256xf32>
    %6 = arith.addf %4, %5 : vector<33x256xf32>
    %cst_8 = arith.constant dense<0xFF800000> : vector<256xf32>
    %7 = vector.multi_reduction <maximumf>, %6, %cst_8 [0] : vector<33x256xf32> to vector<256xf32>
    %8 = vector.shape_cast %7 : vector<256xf32> to vector<1x256xf32>
    %9 = vector.broadcast %8 : vector<1x256xf32> to vector<33x256xf32>
    %10 = arith.subf %6, %9 : vector<33x256xf32>
    %11 = math.exp %10 : vector<33x256xf32>
    %cst_9 = arith.constant dense<0.000000e+00> : vector<256xf32>
    %12 = vector.multi_reduction <add>, %11, %cst_9 [0] : vector<33x256xf32> to vector<256xf32>
    %13 = vector.shape_cast %12 : vector<256xf32> to vector<1x256xf32>
    %14 = math.log %13 : vector<1x256xf32>
    %15 = vector.broadcast %14 : vector<1x256xf32> to vector<33x256xf32>
    %16 = arith.subf %10, %15 : vector<33x256xf32>
    %c0_10 = arith.constant 0 : index
    %c0_11 = arith.constant 0 : index
    %c0_12 = arith.constant 0 : index
    %17 = vector.load %arg6[%c0_10, %c0_11, %c0_12] : memref<1x33x256xf32, #tpu.memory_space<vmem>>, vector<1x33x256xf32>
    %18 = vector.shape_cast %17 : vector<1x33x256xf32> to vector<33x256xf32>
    %19 = vector.shape_cast %16 : vector<33x256xf32> to vector<1x33x256xf32>
    tpu.vector_store %arg6[%c0_10, %c0_11, %c0_12], %19 {strides = array<i32>} : memref<1x33x256xf32, #tpu.memory_space<vmem>>, vector<1x33x256xf32>,
    return
  }
  func.func @transform_0(%arg0: i32, %arg1: i32, %arg2: i32) -> (i32, i32, i32, i32) {
    %c0_i32 = arith.constant 0 : i32
    %c0_i32_0 = arith.constant 0 : i32
    return %arg0, %c0_i32, %arg2, %arg1 : i32, i32, i32, i32
  }
  func.func @transform_1(%arg0: i32, %arg1: i32, %arg2: i32) -> (i32, i32) {
    %c0_i32 = arith.constant 0 : i32
    %c0_i32_0 = arith.constant 0 : i32
    %c0_i32_1 = arith.constant 0 : i32
    return %c0_i32, %c0_i32_0 : i32, i32
  }
  func.func @transform_2(%arg0: i32, %arg1: i32, %arg2: i32) -> (i32, i32) {
    %c0_i32 = arith.constant 0 : i32
    %c0_i32_0 = arith.constant 0 : i32
    return %c0_i32, %arg1 : i32, i32
  }
  func.func @transform_3(%arg0: i32, %arg1: i32, %arg2: i32) -> (i32, i32, i32) {
    %c0_i32 = arith.constant 0 : i32
    %c0_i32_0 = arith.constant 0 : i32
    return %arg0, %c0_i32, %arg1 : i32, i32, i32
  }
}

</mosaic_0001>

<llo_original>
// kernel: tpu_custom_call.1
$region0: #{tpu_custom_call.1}
  #allocation0 [shape = 'u32[]', space=smem, size = 0x4, offset = 0x4, fixed_abs, tag = 'smem constant byte address 0x4 - core index']
  #allocation1 [shape = 'u32[72,128]{1,0:T(1,128)}', space=vmem, size = 0x9000, scoped, tag = 'internal scratch']
  %s0 = inlined_call_operand.hbm [shape: f32[2,256,16,256], index: 0, kind: input, shape index: {}]
  %s1 = inlined_call_operand.hbm [shape: f32[33,256], index: 1, kind: input, shape index: {}]
  %s2 = inlined_call_operand.hbm [shape: f32[33,256], index: 2, kind: input, shape index: {}]
  %s3 = inlined_call_operand.vmem [shape: f32[2,33,256], index: 3, kind: output, shape index: {}]
  %s4 = sld [smem:[#allocation0]]
  $region57: #{tpu_custom_call.1} parent=0
    _
  %s6 = ssub.s32 1, %s4
  %s7 = scalar_select 0, %s6, %s4
  $region1: #{tpu_custom_call.1} parent=0
    #allocation2 [shape = 'u8[8388608]{0}', space=vmem, size = 0x800000, scoped, tag = 'input window, operand 0']
    #allocation3 [shape = 's32[2]{0}', space=sflag, size = 0x8, scoped, tag = 'scoped memory for tpu_custom_call.1']
    #allocation4 [shape = 'u8[40960]{0}', space=vmem, size = 0xa000, scoped, tag = 'input window, operand 1, single buffered']
    #allocation5 [shape = 's32[1]{0}', space=sflag, size = 0x4, scoped, tag = 'scoped memory for tpu_custom_call.1']
    #allocation6 [shape = 'u8[40960]{0}', space=vmem, size = 0xa000, scoped, tag = 'input window, operand 2, single buffered']
    %8 = vsyncpa [#allocation3], 0
    %s9 = scalar_lea.sflag [#allocation3], 1
    %10 = vsyncpa %s9, 0
    %11 = vsyncpa [#allocation5], 0
    loop: start=0, step=1, limit=4
    $region2: #{tpu_custom_call.1} parent=1 // loop_pre_header
      _
    $region3: #{tpu_custom_call.1} parent=1 // loop_header
      %s13 = sphi 0, %s17
      %p14 = scmp.ge.s32.totalorder %s13, 4
      %s20 = sphi 0, %s39
      %s21 = sphi 0, %s35
      %s22 = sphi 0, %s31
      %s23 = sphi 0, %s20
      %s24 = sphi 0, %s21
      %s25 = sphi 0, %s22
      %s26 = sphi 0, %s23
      %s27 = sphi 0, %s24
      %s28 = sphi 0, %s25
      %s46 = sphi 0, %s48
      %s49 = sphi 0, %s46
      %s50 = sphi 0, %s49
      %s66 = sphi 0, %s50
      %s70 = sphi 0, %s70
      %s72 = sphi 0, %s70
      %s73 = sphi 0, %s72
      %s87 = sphi 0, %s73
      %s93 = sphi 0, %s95
      %s96 = sphi 0, %s93
      %s97 = sphi 0, %s96
      %s113 = sphi 0, %s97
      %s121 = sphi 0, %s123
      %s124 = sphi 0, %s121
      %s125 = sphi 0, %s124
      %s141 = sphi 0, %s125
    $region4: #{tpu_custom_call.1} parent=1 // loop_header_branch
      %16 = sbr.rel (%p14) target = $region8
    $region5: #{tpu_custom_call.1} parent=1 // loop_body
      %s18 = ssub.s32 %s13, 1
      %s19 = ssub.s32 %s13, 2
      %s29 = sadd.s32 1, %s22
      %p30 = scmp.ge.s32.totalorder %s29, 1
      %s31 = scalar_select %p30, 0, %s29
      %s32 = sadd.s32 1, %s21
      %s33 = scalar_select %p30, %s32, %s21
      %p34 = scmp.ge.s32.totalorder %s33, 1
      %s35 = scalar_select %p34, 0, %s33
      %s36 = sadd.s32 1, %s20
      %s37 = scalar_select %p34, %s36, %s20
      %p38 = scmp.ge.s32.totalorder %s37, 2
      %s39 = scalar_select %p38, 0, %s37
      %s40 = ssub.s32 %s20, %s39
      %s41 = ssub.s32 %s22, %s31
      %s42 = sor.u32 %s40, %s41
      %s43 = ssub.s32 %s21, %s35
      %s44 = sor.u32 %s42, %s43
      %p45 = scmp.eq.s32.totalorder %s44, 0
      %s47 = sadd.s32 %s46, 1
      %s48 = scalar_select %p45, %s46, %s47
      %p51 = pneg %p45
      %p52 = scmp.eq.s32.totalorder %s13, 1
      %p53 = por %p51, %p52
      %p54 = scmp.ne.s32.totalorder %s46, %s49
      %p55 = scmp.eq.s32.totalorder %s13, 0
      %p56 = por %p54, %p55
      %p57 = scmp.ne.s32.totalorder %s46, %s49
      %p58 = scmp.eq.s32.totalorder %s18, 1
      %p59 = por %p57, %p58
      %p60 = scmp.ne.s32.totalorder %s49, %s50
      %p61 = scmp.eq.s32.totalorder %s18, 0
      %p62 = por %p60, %p61
      %p63 = scmp.ne.s32.totalorder %s49, %s50
      %p64 = scmp.eq.s32.totalorder %s19, 1
      %p65 = por %p63, %p64
      %p67 = scmp.ne.s32.totalorder %s50, %s66
      %p68 = scmp.eq.s32.totalorder %s19, 0
      %p69 = por %p67, %p68
      %s71 = sadd.s32 %s70, 1
      %p74 = scmp.eq.s32.totalorder %s13, 1
      %p75 = scmp.ne.s32.totalorder %s70, %s72
      %p76 = scmp.eq.s32.totalorder %s13, 0
      %p77 = por %p75, %p76
      %p78 = scmp.ne.s32.totalorder %s70, %s72
      %p79 = scmp.eq.s32.totalorder %s18, 1
      %p80 = por %p78, %p79
      %p81 = scmp.ne.s32.totalorder %s72, %s73
      %p82 = scmp.eq.s32.totalorder %s18, 0
      %p83 = por %p81, %p82
      %p84 = scmp.ne.s32.totalorder %s72, %s73
      %p85 = scmp.eq.s32.totalorder %s19, 1
      %p86 = por %p84, %p85
      %p88 = scmp.ne.s32.totalorder %s73, %s87
      %p89 = scmp.eq.s32.totalorder %s19, 0
      %p90 = por %p88, %p89
      %s91 = ssub.s32 %s21, %s35
      %p92 = scmp.eq.s32.totalorder %s91, 0
      %s94 = sadd.s32 %s93, 1
      %s95 = scalar_select %p92, %s93, %s94
      %p98 = pneg %p92
      %p99 = scmp.eq.s32.totalorder %s13, 1
      %p100 = por %p98, %p99
      %p101 = scmp.ne.s32.totalorder %s93, %s96
      %p102 = scmp.eq.s32.totalorder %s13, 0
      %p103 = por %p101, %p102
      %p104 = scmp.ne.s32.totalorder %s93, %s96
      %p105 = scmp.eq.s32.totalorder %s18, 1
      %p106 = por %p104, %p105
      %p107 = scmp.ne.s32.totalorder %s96, %s97
      %p108 = scmp.eq.s32.totalorder %s18, 0
      %p109 = por %p107, %p108
      %p110 = scmp.ne.s32.totalorder %s96, %s97
      %p111 = scmp.eq.s32.totalorder %s19, 1
      %p112 = por %p110, %p111
      %p114 = scmp.ne.s32.totalorder %s97, %s113
      %p115 = scmp.eq.s32.totalorder %s19, 0
      %p116 = por %p114, %p115
      %s117 = ssub.s32 %s20, %s39
      %s118 = ssub.s32 %s21, %s35
      %s119 = sor.u32 %s117, %s118
      %p120 = scmp.eq.s32.totalorder %s119, 0
      %s122 = sadd.s32 %s121, 1
      %s123 = scalar_select %p120, %s121, %s122
      %p126 = pneg %p120
      %p127 = scmp.eq.s32.totalorder %s13, 1
      %p128 = por %p126, %p127
      %p129 = scmp.ne.s32.totalorder %s121, %s124
      %p130 = scmp.eq.s32.totalorder %s13, 0
      %p131 = por %p129, %p130
      %p132 = scmp.ne.s32.totalorder %s121, %s124
      %p133 = scmp.eq.s32.totalorder %s18, 1
      %p134 = por %p132, %p133
      %p135 = scmp.ne.s32.totalorder %s124, %s125
      %p136 = scmp.eq.s32.totalorder %s18, 0
      %p137 = por %p135, %p136
      %p138 = scmp.ne.s32.totalorder %s124, %s125
      %p139 = scmp.eq.s32.totalorder %s19, 1
      %p140 = por %p138, %p139
      %p142 = scmp.ne.s32.totalorder %s125, %s141
      %p143 = scmp.eq.s32.totalorder %s19, 0
      %p144 = por %p142, %p143
      %p145 = scmp.le.s32.totalorder 1, %s13
      %p146 = scmp.lt.s32.totalorder %s13, 3
      %p147 = pnand %p145, %p146
      %p148 = pneg %p147
      // Predicated region
      $region9: #{tpu_custom_call.1} parent=5 // pred_check
        _
      $region10: #{tpu_custom_call.1} parent=5 // pred_check_branch
        %150 = sbr.rel (%p147) target = $region12
      $region11: #{tpu_custom_call.1} parent=5 // pred_region
        %s151 = ssub.s32 %s13, 1
        // Predicated region
        $region13: #{tpu_custom_call.1} parent=11 // pred_check
          %p152 = pneg %p83
        $region14: #{tpu_custom_call.1} parent=11 // pred_check_branch
          %154 = sbr.rel (%p152) target = $region16
        $region15: #{tpu_custom_call.1} parent=11 // pred_region
          %156 = vsyncadd [#allocation5], 0
          %s157 = sshll.u32 %s1, 4
          %s158 = int_to_ptr.hbm [resolvable:$true] %s157
          %s159 = sshll.u32 [#allocation4], 4
          %s160 = int_to_ptr.vmem [resolvable:$true] %s159
          %165 = dma.hbm_to_vmem [thread:$0]  %s158, 1280, %s160, [#allocation5], 256, 256, 16
        $region16: #{tpu_custom_call.1} parent=11 // pred_fallthru
          _
        // Predicated region
        $region17: #{tpu_custom_call.1} parent=11 // pred_check
          %p166 = pneg %p109
        $region18: #{tpu_custom_call.1} parent=11 // pred_check_branch
          %168 = sbr.rel (%p166) target = $region20
        $region19: #{tpu_custom_call.1} parent=11 // pred_region
          %s169 = smul.u32 2, %s24
          %171 = vsyncadd [#allocation5], 0
          %s172 = smul.addr %s169, 8
          %s173 = scalar_lea.hbm %s2, %s172
          %s174 = sshll.u32 %s173, 4
          %s175 = int_to_ptr.hbm [resolvable:$true] %s174
          %s176 = sshll.u32 [#allocation6], 4
          %s177 = int_to_ptr.vmem [resolvable:$true] %s176
          %182 = dma.hbm_to_vmem [thread:$0]  %s175, 1280, %s177, [#allocation5], 256, 256, 16
        $region20: #{tpu_custom_call.1} parent=11 // pred_fallthru
          _
      $region12: #{tpu_custom_call.1} parent=5 // pred_fallthru
        _
      %p183 = scmp.lt.s32.totalorder %s13, 2
      // Predicated region
      $region21: #{tpu_custom_call.1} parent=5 // pred_check
        %p184 = pneg %p183
      $region22: #{tpu_custom_call.1} parent=5 // pred_check_branch
        %186 = sbr.rel (%p184) target = $region24
      $region23: #{tpu_custom_call.1} parent=5 // pred_region
        // Predicated region
        $region25: #{tpu_custom_call.1} parent=23 // pred_check
          %p187 = pneg %p56
        $region26: #{tpu_custom_call.1} parent=23 // pred_check_branch
          %189 = sbr.rel (%p187) target = $region28
        $region27: #{tpu_custom_call.1} parent=23 // pred_region
          %s190 = sand.u32 %s46, 1
          %s191 = scalar_lea.sflag [#allocation3], %s190
          %s192 = sand.u32 %s46, 1
          %s193 = smul.addr %s192, 8192
          %s194 = scalar_lea.vmem [#allocation2], %s193
          %s195 = smul.u32 2, %s22
          %s196 = smul.u32 2, %s21
          %198 = vsyncadd %s191, 0
          %s199 = smul.addr %s195, 2
          %s200 = sadd.s32 %s196, %s199
          %s201 = smul.addr %s20, 1024
          %s202 = sadd.s32 %s200, %s201
          %s203 = smul.addr %s202, 8
          %s204 = scalar_lea.hbm %s0, %s203
          %s205 = sshll.u32 %s204, 4
          %s206 = int_to_ptr.hbm [resolvable:$true] %s205
          %s207 = sshll.u32 %s194, 4
          %s208 = int_to_ptr.vmem [resolvable:$true] %s207
          %213 = dma.hbm_to_vmem [thread:$0]  %s206, 131072, %s208, %s191, 256, 256, 16
        $region28: #{tpu_custom_call.1} parent=23 // pred_fallthru
          _
      $region24: #{tpu_custom_call.1} parent=5 // pred_fallthru
        _
      %p214 = scmp.le.s32.totalorder 1, %s13
      %p215 = scmp.lt.s32.totalorder %s13, 3
      %p216 = pnand %p214, %p215
      %p217 = pneg %p216
      // Predicated region
      $region29: #{tpu_custom_call.1} parent=5 // pred_check
        _
      $region30: #{tpu_custom_call.1} parent=5 // pred_check_branch
        %219 = sbr.rel (%p216) target = $region32
      $region31: #{tpu_custom_call.1} parent=5 // pred_region
        %s220 = ssub.s32 %s13, 1
        %s221 = sand.u32 %s49, 1
        %s222 = scalar_lea.sflag [#allocation3], %s221
        %s223 = sand.u32 %s49, 1
        %s224 = smul.addr %s223, 8192
        %s225 = scalar_lea.vmem [#allocation2], %s224
        // Predicated region
        $region33: #{tpu_custom_call.1} parent=31 // pred_check
          %p226 = pneg %p62
        $region34: #{tpu_custom_call.1} parent=31 // pred_check_branch
          %228 = sbr.rel (%p226) target = $region36
        $region35: #{tpu_custom_call.1} parent=31 // pred_region
          %230 = dma.done %s222, 131072
        $region36: #{tpu_custom_call.1} parent=31 // pred_fallthru
          _
        // Predicated region
        $region37: #{tpu_custom_call.1} parent=31 // pred_check
          %p231 = pneg %p83
        $region38: #{tpu_custom_call.1} parent=31 // pred_check_branch
          %233 = sbr.rel (%p231) target = $region40
        $region39: #{tpu_custom_call.1} parent=31 // pred_region
          %235 = dma.done [#allocation5], 1280
        $region40: #{tpu_custom_call.1} parent=31 // pred_fallthru
          _
        // Predicated region
        $region41: #{tpu_custom_call.1} parent=31 // pred_check
          %p236 = pneg %p109
        $region42: #{tpu_custom_call.1} parent=31 // pred_check_branch
          %238 = sbr.rel (%p236) target = $region44
        $region43: #{tpu_custom_call.1} parent=31 // pred_region
          %240 = dma.done [#allocation5], 1280
        $region44: #{tpu_custom_call.1} parent=31 // pred_fallthru
          _
        %s241 = sand.u32 %s49, 1
        %s242 = scalar_lea.sflag [#allocation3], %s241
        %s243 = sand.u32 %s49, 1
        %s244 = smul.addr %s243, 8192
        %s245 = scalar_lea.vmem [#allocation2], %s244
        %p246 = pneg %p62
        %p247 = pneg %p59
        %p248 = pneg %p83
        %p249 = pneg %p80
        %p250 = pneg %p109
        %p251 = pneg %p106
        %p252 = pneg %p137
        %p253 = pneg %p134
        %s254 = smul.u32 2, %s24
        %p255 = scmp.lt.s32.totalorder %s23, 1
        %s256 = scalar_select %p255, %s23, 1
        %p257 = scmp.lt.s32.totalorder %s254, 1
        %s258 = scalar_select %p257, %s254, 1
        %s259 = smul.addr %s256, 10
        %s260 = sadd.s32 %s258, %s259
        %s261 = smul.addr %s260, 8
        %s262 = scalar_lea.vmem %s3, %s261
        %s263 = smul.u32 2, %s25
        %s264 = smul.u32 2, %s24
        %s265 = smul.u32 2, %s24
        %s266 = smul.u32 2, %s24
        %p267 = scmp.lt.s32.totalorder %s23, 1
        %s268 = scalar_select %p267, %s23, 1
        %p269 = scmp.lt.s32.totalorder %s266, 1
        %s270 = scalar_select %p269, %s266, 1
        %s271 = smul.addr %s268, 10
        %s272 = sadd.s32 %s270, %s271
        %s273 = smul.addr %s272, 8
        %s274 = scalar_lea.vmem %s3, %s273
        %s275 = smul.u32 2, %s24
        %v276 = vld [vmem:[%s225] sm:$0xff]
        %v277 = vld [vmem:[%s225 + $0x8] sm:$0xff]
        %v278 = vld [vmem:[%s225 + $0x10] sm:$0xff]
        %v279 = vld [vmem:[%s225 + $0x18] sm:$0xff]
        %v280 = vld [vmem:[%s225 + $0x20] sm:$0xff]
        %v281 = vld [vmem:[%s225 + $0x28] sm:$0xff]
        %v282 = vld [vmem:[%s225 + $0x30] sm:$0xff]
        %v283 = vld [vmem:[%s225 + $0x38] sm:$0xff]
        %v284 = vld [vmem:[%s225 + $0x40] sm:$0xff]
        %v285 = vld [vmem:[%s225 + $0x48] sm:$0xff]
        %v286 = vld [vmem:[%s225 + $0x50] sm:$0xff]
        %v287 = vld [vmem:[%s225 + $0x58] sm:$0xff]
        %v288 = vld [vmem:[%s225 + $0x60] sm:$0xff]
        %v289 = vld [vmem:[%s225 + $0x68] sm:$0xff]
        %v290 = vld [vmem:[%s225 + $0x70] sm:$0xff]
        %v291 = vld [vmem:[%s225 + $0x78] sm:$0xff]
        %v292 = vld [vmem:[%s225 + $0x80] sm:$0xff]
        %v293 = vld [vmem:[%s225 + $0x88] sm:$0xff]
        %v294 = vld [vmem:[%s225 + $0x90] sm:$0xff]
        %v295 = vld [vmem:[%s225 + $0x98] sm:$0xff]
        %v296 = vld [vmem:[%s225 + $0xa0] sm:$0xff]
        %v297 = vld [vmem:[%s225 + $0xa8] sm:$0xff]
        %v298 = vld [vmem:[%s225 + $0xb0] sm:$0xff]
        %v299 = vld [vmem:[%s225 + $0xb8] sm:$0xff]
        %v300 = vld [vmem:[%s225 + $0xc0] sm:$0xff]
        %v301 = vld [vmem:[%s225 + $0xc8] sm:$0xff]
        %v302 = vld [vmem:[%s225 + $0xd0] sm:$0xff]
        %v303 = vld [vmem:[%s225 + $0xd8] sm:$0xff]
        %v304 = vld [vmem:[%s225 + $0xe0] sm:$0xff]
        %v305 = vld [vmem:[%s225 + $0xe8] sm:$0xff]
        %v306 = vld [vmem:[%s225 + $0xf0] sm:$0xff]
        %v307 = vld [vmem:[%s225 + $0xf8] sm:$0xff]
        %v308 = vld [vmem:[%s225 + $0x100] sm:$0xff]
        %v309 = vld [vmem:[%s225 + $0x108] sm:$0xff]
        %v310 = vld [vmem:[%s225 + $0x110] sm:$0xff]
        %v311 = vld [vmem:[%s225 + $0x118] sm:$0xff]
        %v312 = vld [vmem:[%s225 + $0x120] sm:$0xff]
        %v313 = vld [vmem:[%s225 + $0x128] sm:$0xff]
        %v314 = vld [vmem:[%s225 + $0x130] sm:$0xff]
        %v315 = vld [vmem:[%s225 + $0x138] sm:$0xff]
        %v316 = vld [vmem:[%s225 + $0x140] sm:$0xff]
        %v317 = vld [vmem:[%s225 + $0x148] sm:$0xff]
        %v318 = vld [vmem:[%s225 + $0x150] sm:$0xff]
        %v319 = vld [vmem:[%s225 + $0x158] sm:$0xff]
        %v320 = vld [vmem:[%s225 + $0x160] sm:$0xff]
        %v321 = vld [vmem:[%s225 + $0x168] sm:$0xff]
        %v322 = vld [vmem:[%s225 + $0x170] sm:$0xff]
        %v323 = vld [vmem:[%s225 + $0x178] sm:$0xff]
        %v324 = vld [vmem:[%s225 + $0x180] sm:$0xff]
        %v325 = vld [vmem:[%s225 + $0x188] sm:$0xff]
        %v326 = vld [vmem:[%s225 + $0x190] sm:$0xff]
        %v327 = vld [vmem:[%s225 + $0x198] sm:$0xff]
        %v328 = vld [vmem:[%s225 + $0x1a0] sm:$0xff]
        %v329 = vld [vmem:[%s225 + $0x1a8] sm:$0xff]
        %v330 = vld [vmem:[%s225 + $0x1b0] sm:$0xff]
        %v331 = vld [vmem:[%s225 + $0x1b8] sm:$0xff]
        %v332 = vld [vmem:[%s225 + $0x1c0] sm:$0xff]
        %v333 = vld [vmem:[%s225 + $0x1c8] sm:$0xff]
        %v334 = vld [vmem:[%s225 + $0x1d0] sm:$0xff]
        %v335 = vld [vmem:[%s225 + $0x1d8] sm:$0xff]
        %v336 = vld [vmem:[%s225 + $0x1e0] sm:$0xff]
        %v337 = vld [vmem:[%s225 + $0x1e8] sm:$0xff]
        %v338 = vld [vmem:[%s225 + $0x1f0] sm:$0xff]
        %v339 = vld [vmem:[%s225 + $0x1f8] sm:$0xff]
        %v340 = vld [vmem:[%s225 + $0x200] sm:$0xff]
        %v341 = vld [vmem:[%s225 + $0x208] sm:$0xff]
        %v342 = vld [vmem:[%s225 + $0x210] sm:$0xff]
        %v343 = vld [vmem:[%s225 + $0x218] sm:$0xff]
        %v344 = vld [vmem:[%s225 + $0x220] sm:$0xff]
        %v345 = vld [vmem:[%s225 + $0x228] sm:$0xff]
        %v346 = vld [vmem:[%s225 + $0x230] sm:$0xff]
        %v347 = vld [vmem:[%s225 + $0x238] sm:$0xff]
        %v348 = vld [vmem:[%s225 + $0x240] sm:$0xff]
        %v349 = vld [vmem:[%s225 + $0x248] sm:$0xff]
        %v350 = vld [vmem:[%s225 + $0x250] sm:$0xff]
        %v351 = vld [vmem:[%s225 + $0x258] sm:$0xff]
        %v352 = vld [vmem:[%s225 + $0x260] sm:$0xff]
        %v353 = vld [vmem:[%s225 + $0x268] sm:$0xff]
        %v354 = vld [vmem:[%s225 + $0x270] sm:$0xff]
        %v355 = vld [vmem:[%s225 + $0x278] sm:$0xff]
        %v356 = vld [vmem:[%s225 + $0x280] sm:$0xff]
        %v357 = vld [vmem:[%s225 + $0x288] sm:$0xff]
        %v358 = vld [vmem:[%s225 + $0x290] sm:$0xff]
        %v359 = vld [vmem:[%s225 + $0x298] sm:$0xff]
        %v360 = vld [vmem:[%s225 + $0x2a0] sm:$0xff]
        %v361 = vld [vmem:[%s225 + $0x2a8] sm:$0xff]
        %v362 = vld [vmem:[%s225 + $0x2b0] sm:$0xff]
        %v363 = vld [vmem:[%s225 + $0x2b8] sm:$0xff]
        %v364 = vld [vmem:[%s225 + $0x2c0] sm:$0xff]
        %v365 = vld [vmem:[%s225 + $0x2c8] sm:$0xff]
        %v366 = vld [vmem:[%s225 + $0x2d0] sm:$0xff]
        %v367 = vld [vmem:[%s225 + $0x2d8] sm:$0xff]
        %v368 = vld [vmem:[%s225 + $0x2e0] sm:$0xff]
        %v369 = vld [vmem:[%s225 + $0x2e8] sm:$0xff]
        %v370 = vld [vmem:[%s225 + $0x2f0] sm:$0xff]
        %v371 = vld [vmem:[%s225 + $0x2f8] sm:$0xff]
        %v372 = vld [vmem:[%s225 + $0x300] sm:$0xff]
        %v373 = vld [vmem:[%s225 + $0x308] sm:$0xff]
        %v374 = vld [vmem:[%s225 + $0x310] sm:$0xff]
        %v375 = vld [vmem:[%s225 + $0x318] sm:$0xff]
        %v376 = vld [vmem:[%s225 + $0x320] sm:$0xff]
        %v377 = vld [vmem:[%s225 + $0x328] sm:$0xff]
        %v378 = vld [vmem:[%s225 + $0x330] sm:$0xff]
        %v379 = vld [vmem:[%s225 + $0x338] sm:$0xff]
        %v380 = vld [vmem:[%s225 + $0x340] sm:$0xff]
        %v381 = vld [vmem:[%s225 + $0x348] sm:$0xff]
        %v382 = vld [vmem:[%s225 + $0x350] sm:$0xff]
        %v383 = vld [vmem:[%s225 + $0x358] sm:$0xff]
        %v384 = vld [vmem:[%s225 + $0x360] sm:$0xff]
        %v385 = vld [vmem:[%s225 + $0x368] sm:$0xff]
        %v386 = vld [vmem:[%s225 + $0x370] sm:$0xff]
        %v387 = vld [vmem:[%s225 + $0x378] sm:$0xff]
        %v388 = vld [vmem:[%s225 + $0x380] sm:$0xff]
        %v389 = vld [vmem:[%s225 + $0x388] sm:$0xff]
        %v390 = vld [vmem:[%s225 + $0x390] sm:$0xff]
        %v391 = vld [vmem:[%s225 + $0x398] sm:$0xff]
        %v392 = vld [vmem:[%s225 + $0x3a0] sm:$0xff]
        %v393 = vld [vmem:[%s225 + $0x3a8] sm:$0xff]
        %v394 = vld [vmem:[%s225 + $0x3b0] sm:$0xff]
        %v395 = vld [vmem:[%s225 + $0x3b8] sm:$0xff]
        %v396 = vld [vmem:[%s225 + $0x3c0] sm:$0xff]
        %v397 = vld [vmem:[%s225 + $0x3c8] sm:$0xff]
        %v398 = vld [vmem:[%s225 + $0x3d0] sm:$0xff]
        %v399 = vld [vmem:[%s225 + $0x3d8] sm:$0xff]
        %v400 = vld [vmem:[%s225 + $0x3e0] sm:$0xff]
        %v401 = vld [vmem:[%s225 + $0x3e8] sm:$0xff]
        %v402 = vld [vmem:[%s225 + $0x3f0] sm:$0xff]
        %v403 = vld [vmem:[%s225 + $0x3f8] sm:$0xff]
        %v404 = vld [vmem:[%s225 + $0x400] sm:$0xff]
        %v405 = vld [vmem:[%s225 + $0x408] sm:$0xff]
        %v406 = vld [vmem:[%s225 + $0x410] sm:$0xff]
        %v407 = vld [vmem:[%s225 + $0x418] sm:$0xff]
        %v408 = vld [vmem:[%s225 + $0x420] sm:$0xff]
        %v409 = vld [vmem:[%s225 + $0x428] sm:$0xff]
        %v410 = vld [vmem:[%s225 + $0x430] sm:$0xff]
        %v411 = vld [vmem:[%s225 + $0x438] sm:$0xff]
        %v412 = vld [vmem:[%s225 + $0x440] sm:$0xff]
        %v413 = vld [vmem:[%s225 + $0x448] sm:$0xff]
        %v414 = vld [vmem:[%s225 + $0x450] sm:$0xff]
        %v415 = vld [vmem:[%s225 + $0x458] sm:$0xff]
        %v416 = vld [vmem:[%s225 + $0x460] sm:$0xff]
        %v417 = vld [vmem:[%s225 + $0x468] sm:$0xff]
        %v418 = vld [vmem:[%s225 + $0x470] sm:$0xff]
        %v419 = vld [vmem:[%s225 + $0x478] sm:$0xff]
        %v420 = vld [vmem:[%s225 + $0x480] sm:$0xff]
        %v421 = vld [vmem:[%s225 + $0x488] sm:$0xff]
        %v422 = vld [vmem:[%s225 + $0x490] sm:$0xff]
        %v423 = vld [vmem:[%s225 + $0x498] sm:$0xff]
        %v424 = vld [vmem:[%s225 + $0x4a0] sm:$0xff]
        %v425 = vld [vmem:[%s225 + $0x4a8] sm:$0xff]
        %v426 = vld [vmem:[%s225 + $0x4b0] sm:$0xff]
        %v427 = vld [vmem:[%s225 + $0x4b8] sm:$0xff]
        %v428 = vld [vmem:[%s225 + $0x4c0] sm:$0xff]
        %v429 = vld [vmem:[%s225 + $0x4c8] sm:$0xff]
        %v430 = vld [vmem:[%s225 + $0x4d0] sm:$0xff]
        %v431 = vld [vmem:[%s225 + $0x4d8] sm:$0xff]
        %v432 = vld [vmem:[%s225 + $0x4e0] sm:$0xff]
        %v433 = vld [vmem:[%s225 + $0x4e8] sm:$0xff]
        %v434 = vld [vmem:[%s225 + $0x4f0] sm:$0xff]
        %v435 = vld [vmem:[%s225 + $0x4f8] sm:$0xff]
        %v436 = vld [vmem:[%s225 + $0x500] sm:$0xff]
        %v437 = vld [vmem:[%s225 + $0x508] sm:$0xff]
        %v438 = vld [vmem:[%s225 + $0x510] sm:$0xff]
        %v439 = vld [vmem:[%s225 + $0x518] sm:$0xff]
        %v440 = vld [vmem:[%s225 + $0x520] sm:$0xff]
        %v441 = vld [vmem:[%s225 + $0x528] sm:$0xff]
        %v442 = vld [vmem:[%s225 + $0x530] sm:$0xff]
        %v443 = vld [vmem:[%s225 + $0x538] sm:$0xff]
        %v444 = vld [vmem:[%s225 + $0x540] sm:$0xff]
        %v445 = vld [vmem:[%s225 + $0x548] sm:$0xff]
        %v446 = vld [vmem:[%s225 + $0x550] sm:$0xff]
        %v447 = vld [vmem:[%s225 + $0x558] sm:$0xff]
        %v448 = vld [vmem:[%s225 + $0x560] sm:$0xff]
        %v449 = vld [vmem:[%s225 + $0x568] sm:$0xff]
        %v450 = vld [vmem:[%s225 + $0x570] sm:$0xff]
        %v451 = vld [vmem:[%s225 + $0x578] sm:$0xff]
        %v452 = vld [vmem:[%s225 + $0x580] sm:$0xff]
        %v453 = vld [vmem:[%s225 + $0x588] sm:$0xff]
        %v454 = vld [vmem:[%s225 + $0x590] sm:$0xff]
        %v455 = vld [vmem:[%s225 + $0x598] sm:$0xff]
        %v456 = vld [vmem:[%s225 + $0x5a0] sm:$0xff]
        %v457 = vld [vmem:[%s225 + $0x5a8] sm:$0xff]
        %v458 = vld [vmem:[%s225 + $0x5b0] sm:$0xff]
        %v459 = vld [vmem:[%s225 + $0x5b8] sm:$0xff]
        %v460 = vld [vmem:[%s225 + $0x5c0] sm:$0xff]
        %v461 = vld [vmem:[%s225 + $0x5c8] sm:$0xff]
        %v462 = vld [vmem:[%s225 + $0x5d0] sm:$0xff]
        %v463 = vld [vmem:[%s225 + $0x5d8] sm:$0xff]
        %v464 = vld [vmem:[%s225 + $0x5e0] sm:$0xff]
        %v465 = vld [vmem:[%s225 + $0x5e8] sm:$0xff]
        %v466 = vld [vmem:[%s225 + $0x5f0] sm:$0xff]
        %v467 = vld [vmem:[%s225 + $0x5f8] sm:$0xff]
        %v468 = vld [vmem:[%s225 + $0x600] sm:$0xff]
        %v469 = vld [vmem:[%s225 + $0x608] sm:$0xff]
        %v470 = vld [vmem:[%s225 + $0x610] sm:$0xff]
        %v471 = vld [vmem:[%s225 + $0x618] sm:$0xff]
        %v472 = vld [vmem:[%s225 + $0x620] sm:$0xff]
        %v473 = vld [vmem:[%s225 + $0x628] sm:$0xff]
        %v474 = vld [vmem:[%s225 + $0x630] sm:$0xff]
        %v475 = vld [vmem:[%s225 + $0x638] sm:$0xff]
        %v476 = vld [vmem:[%s225 + $0x640] sm:$0xff]
        %v477 = vld [vmem:[%s225 + $0x648] sm:$0xff]
        %v478 = vld [vmem:[%s225 + $0x650] sm:$0xff]
        %v479 = vld [vmem:[%s225 + $0x658] sm:$0xff]
        %v480 = vld [vmem:[%s225 + $0x660] sm:$0xff]
        %v481 = vld [vmem:[%s225 + $0x668] sm:$0xff]
        %v482 = vld [vmem:[%s225 + $0x670] sm:$0xff]
        %v483 = vld [vmem:[%s225 + $0x678] sm:$0xff]
        %v484 = vld [vmem:[%s225 + $0x680] sm:$0xff]
        %v485 = vld [vmem:[%s225 + $0x688] sm:$0xff]
        %v486 = vld [vmem:[%s225 + $0x690] sm:$0xff]
        %v487 = vld [vmem:[%s225 + $0x698] sm:$0xff]
        %v488 = vld [vmem:[%s225 + $0x6a0] sm:$0xff]
        %v489 = vld [vmem:[%s225 + $0x6a8] sm:$0xff]
        %v490 = vld [vmem:[%s225 + $0x6b0] sm:$0xff]
        %v491 = vld [vmem:[%s225 + $0x6b8] sm:$0xff]
        %v492 = vld [vmem:[%s225 + $0x6c0] sm:$0xff]
        %v493 = vld [vmem:[%s225 + $0x6c8] sm:$0xff]
        %v494 = vld [vmem:[%s225 + $0x6d0] sm:$0xff]
        %v495 = vld [vmem:[%s225 + $0x6d8] sm:$0xff]
        %v496 = vld [vmem:[%s225 + $0x6e0] sm:$0xff]
        %v497 = vld [vmem:[%s225 + $0x6e8] sm:$0xff]
        %v498 = vld [vmem:[%s225 + $0x6f0] sm:$0xff]
        %v499 = vld [vmem:[%s225 + $0x6f8] sm:$0xff]
        %v500 = vld [vmem:[%s225 + $0x700] sm:$0xff]
        %v501 = vld [vmem:[%s225 + $0x708] sm:$0xff]
        %v502 = vld [vmem:[%s225 + $0x710] sm:$0xff]
        %v503 = vld [vmem:[%s225 + $0x718] sm:$0xff]
        %v504 = vld [vmem:[%s225 + $0x720] sm:$0xff]
        %v505 = vld [vmem:[%s225 + $0x728] sm:$0xff]
        %v506 = vld [vmem:[%s225 + $0x730] sm:$0xff]
        %v507 = vld [vmem:[%s225 + $0x738] sm:$0xff]
        %v508 = vld [vmem:[%s225 + $0x740] sm:$0xff]
        %v509 = vld [vmem:[%s225 + $0x748] sm:$0xff]
        %v510 = vld [vmem:[%s225 + $0x750] sm:$0xff]
        %v511 = vld [vmem:[%s225 + $0x758] sm:$0xff]
        %v512 = vld [vmem:[%s225 + $0x760] sm:$0xff]
        %v513 = vld [vmem:[%s225 + $0x768] sm:$0xff]
        %v514 = vld [vmem:[%s225 + $0x770] sm:$0xff]
        %v515 = vld [vmem:[%s225 + $0x778] sm:$0xff]
        %v516 = vld [vmem:[%s225 + $0x780] sm:$0xff]
        %v517 = vld [vmem:[%s225 + $0x788] sm:$0xff]
        %v518 = vld [vmem:[%s225 + $0x790] sm:$0xff]
        %v519 = vld [vmem:[%s225 + $0x798] sm:$0xff]
        %v520 = vld [vmem:[%s225 + $0x7a0] sm:$0xff]
        %v521 = vld [vmem:[%s225 + $0x7a8] sm:$0xff]
        %v522 = vld [vmem:[%s225 + $0x7b0] sm:$0xff]
        %v523 = vld [vmem:[%s225 + $0x7b8] sm:$0xff]
        %v524 = vld [vmem:[%s225 + $0x7c0] sm:$0xff]
        %v525 = vld [vmem:[%s225 + $0x7c8] sm:$0xff]
        %v526 = vld [vmem:[%s225 + $0x7d0] sm:$0xff]
        %v527 = vld [vmem:[%s225 + $0x7d8] sm:$0xff]
        %v528 = vld [vmem:[%s225 + $0x7e0] sm:$0xff]
        %v529 = vld [vmem:[%s225 + $0x7e8] sm:$0xff]
        %v530 = vld [vmem:[%s225 + $0x7f0] sm:$0xff]
        %v531 = vld [vmem:[%s225 + $0x7f8] sm:$0xff]
        %v532 = vld [vmem:[%s225 + $0x800] sm:$0xff]
        %v533 = vld [vmem:[%s225 + $0x808] sm:$0xff]
        %v534 = vld [vmem:[%s225 + $0x810] sm:$0xff]
        %v535 = vld [vmem:[%s225 + $0x818] sm:$0xff]
        %v536 = vld [vmem:[%s225 + $0x820] sm:$0xff]
        %v537 = vld [vmem:[%s225 + $0x828] sm:$0xff]
        %v538 = vld [vmem:[%s225 + $0x830] sm:$0xff]
        %v539 = vld [vmem:[%s225 + $0x838] sm:$0xff]
        %v540 = vld [vmem:[%s225 + $0x840] sm:$0xff]
        %v541 = vld [vmem:[%s225 + $0x848] sm:$0xff]
        %v542 = vld [vmem:[%s225 + $0x850] sm:$0xff]
        %v543 = vld [vmem:[%s225 + $0x858] sm:$0xff]
        %v544 = vld [vmem:[%s225 + $0x860] sm:$0xff]
        %v545 = vld [vmem:[%s225 + $0x868] sm:$0xff]
        %v546 = vld [vmem:[%s225 + $0x870] sm:$0xff]
        %v547 = vld [vmem:[%s225 + $0x878] sm:$0xff]
        %v548 = vld [vmem:[%s225 + $0x880] sm:$0xff]
        %v549 = vld [vmem:[%s225 + $0x888] sm:$0xff]
        %v550 = vld [vmem:[%s225 + $0x890] sm:$0xff]
        %v551 = vld [vmem:[%s225 + $0x898] sm:$0xff]
        %v552 = vld [vmem:[%s225 + $0x8a0] sm:$0xff]
        %v553 = vld [vmem:[%s225 + $0x8a8] sm:$0xff]
        %v554 = vld [vmem:[%s225 + $0x8b0] sm:$0xff]
        %v555 = vld [vmem:[%s225 + $0x8b8] sm:$0xff]
        %v556 = vld [vmem:[%s225 + $0x8c0] sm:$0xff]
        %v557 = vld [vmem:[%s225 + $0x8c8] sm:$0xff]
        %v558 = vld [vmem:[%s225 + $0x8d0] sm:$0xff]
        %v559 = vld [vmem:[%s225 + $0x8d8] sm:$0xff]
        %v560 = vld [vmem:[%s225 + $0x8e0] sm:$0xff]
        %v561 = vld [vmem:[%s225 + $0x8e8] sm:$0xff]
        %v562 = vld [vmem:[%s225 + $0x8f0] sm:$0xff]
        %v563 = vld [vmem:[%s225 + $0x8f8] sm:$0xff]
        %v564 = vld [vmem:[%s225 + $0x900] sm:$0xff]
        %v565 = vld [vmem:[%s225 + $0x908] sm:$0xff]
        %v566 = vld [vmem:[%s225 + $0x910] sm:$0xff]
        %v567 = vld [vmem:[%s225 + $0x918] sm:$0xff]
        %v568 = vld [vmem:[%s225 + $0x920] sm:$0xff]
        %v569 = vld [vmem:[%s225 + $0x928] sm:$0xff]
        %v570 = vld [vmem:[%s225 + $0x930] sm:$0xff]
        %v571 = vld [vmem:[%s225 + $0x938] sm:$0xff]
        %v572 = vld [vmem:[%s225 + $0x940] sm:$0xff]
        %v573 = vld [vmem:[%s225 + $0x948] sm:$0xff]
        %v574 = vld [vmem:[%s225 + $0x950] sm:$0xff]
        %v575 = vld [vmem:[%s225 + $0x958] sm:$0xff]
        %v576 = vld [vmem:[%s225 + $0x960] sm:$0xff]
        %v577 = vld [vmem:[%s225 + $0x968] sm:$0xff]
        %v578 = vld [vmem:[%s225 + $0x970] sm:$0xff]
        %v579 = vld [vmem:[%s225 + $0x978] sm:$0xff]
        %v580 = vld [vmem:[%s225 + $0x980] sm:$0xff]
        %v581 = vld [vmem:[%s225 + $0x988] sm:$0xff]
        %v582 = vld [vmem:[%s225 + $0x990] sm:$0xff]
        %v583 = vld [vmem:[%s225 + $0x998] sm:$0xff]
        %v584 = vld [vmem:[%s225 + $0x9a0] sm:$0xff]
        %v585 = vld [vmem:[%s225 + $0x9a8] sm:$0xff]
        %v586 = vld [vmem:[%s225 + $0x9b0] sm:$0xff]
        %v587 = vld [vmem:[%s225 + $0x9b8] sm:$0xff]
        %v588 = vld [vmem:[%s225 + $0x9c0] sm:$0xff]
        %v589 = vld [vmem:[%s225 + $0x9c8] sm:$0xff]
        %v590 = vld [vmem:[%s225 + $0x9d0] sm:$0xff]
        %v591 = vld [vmem:[%s225 + $0x9d8] sm:$0xff]
        %v592 = vld [vmem:[%s225 + $0x9e0] sm:$0xff]
        %v593 = vld [vmem:[%s225 + $0x9e8] sm:$0xff]
        %v594 = vld [vmem:[%s225 + $0x9f0] sm:$0xff]
        %v595 = vld [vmem:[%s225 + $0x9f8] sm:$0xff]
        %v596 = vld [vmem:[%s225 + $0xa00] sm:$0xff]
        %v597 = vld [vmem:[%s225 + $0xa08] sm:$0xff]
        %v598 = vld [vmem:[%s225 + $0xa10] sm:$0xff]
        %v599 = vld [vmem:[%s225 + $0xa18] sm:$0xff]
        %v600 = vld [vmem:[%s225 + $0xa20] sm:$0xff]
        %v601 = vld [vmem:[%s225 + $0xa28] sm:$0xff]
        %v602 = vld [vmem:[%s225 + $0xa30] sm:$0xff]
        %v603 = vld [vmem:[%s225 + $0xa38] sm:$0xff]
        %v604 = vld [vmem:[%s225 + $0xa40] sm:$0xff]
        %v605 = vld [vmem:[%s225 + $0xa48] sm:$0xff]
        %v606 = vld [vmem:[%s225 + $0xa50] sm:$0xff]
        %v607 = vld [vmem:[%s225 + $0xa58] sm:$0xff]
        %v608 = vld [vmem:[%s225 + $0xa60] sm:$0xff]
        %v609 = vld [vmem:[%s225 + $0xa68] sm:$0xff]
        %v610 = vld [vmem:[%s225 + $0xa70] sm:$0xff]
        %v611 = vld [vmem:[%s225 + $0xa78] sm:$0xff]
        %v612 = vld [vmem:[%s225 + $0xa80] sm:$0xff]
        %v613 = vld [vmem:[%s225 + $0xa88] sm:$0xff]
        %v614 = vld [vmem:[%s225 + $0xa90] sm:$0xff]
        %v615 = vld [vmem:[%s225 + $0xa98] sm:$0xff]
        %v616 = vld [vmem:[%s225 + $0xaa0] sm:$0xff]
        %v617 = vld [vmem:[%s225 + $0xaa8] sm:$0xff]
        %v618 = vld [vmem:[%s225 + $0xab0] sm:$0xff]
        %v619 = vld [vmem:[%s225 + $0xab8] sm:$0xff]
        %v620 = vld [vmem:[%s225 + $0xac0] sm:$0xff]
        %v621 = vld [vmem:[%s225 + $0xac8] sm:$0xff]
        %v622 = vld [vmem:[%s225 + $0xad0] sm:$0xff]
        %v623 = vld [vmem:[%s225 + $0xad8] sm:$0xff]
        %v624 = vld [vmem:[%s225 + $0xae0] sm:$0xff]
        %v625 = vld [vmem:[%s225 + $0xae8] sm:$0xff]
        %v626 = vld [vmem:[%s225 + $0xaf0] sm:$0xff]
        %v627 = vld [vmem:[%s225 + $0xaf8] sm:$0xff]
        %v628 = vld [vmem:[%s225 + $0xb00] sm:$0xff]
        %v629 = vld [vmem:[%s225 + $0xb08] sm:$0xff]
        %v630 = vld [vmem:[%s225 + $0xb10] sm:$0xff]
        %v631 = vld [vmem:[%s225 + $0xb18] sm:$0xff]
        %v632 = vld [vmem:[%s225 + $0xb20] sm:$0xff]
        %v633 = vld [vmem:[%s225 + $0xb28] sm:$0xff]
        %v634 = vld [vmem:[%s225 + $0xb30] sm:$0xff]
        %v635 = vld [vmem:[%s225 + $0xb38] sm:$0xff]
        %v636 = vld [vmem:[%s225 + $0xb40] sm:$0xff]
        %v637 = vld [vmem:[%s225 + $0xb48] sm:$0xff]
        %v638 = vld [vmem:[%s225 + $0xb50] sm:$0xff]
        %v639 = vld [vmem:[%s225 + $0xb58] sm:$0xff]
        %v640 = vld [vmem:[%s225 + $0xb60] sm:$0xff]
        %v641 = vld [vmem:[%s225 + $0xb68] sm:$0xff]
        %v642 = vld [vmem:[%s225 + $0xb70] sm:$0xff]
        %v643 = vld [vmem:[%s225 + $0xb78] sm:$0xff]
        %v644 = vld [vmem:[%s225 + $0xb80] sm:$0xff]
        %v645 = vld [vmem:[%s225 + $0xb88] sm:$0xff]
        %v646 = vld [vmem:[%s225 + $0xb90] sm:$0xff]
        %v647 = vld [vmem:[%s225 + $0xb98] sm:$0xff]
        %v648 = vld [vmem:[%s225 + $0xba0] sm:$0xff]
        %v649 = vld [vmem:[%s225 + $0xba8] sm:$0xff]
        %v650 = vld [vmem:[%s225 + $0xbb0] sm:$0xff]
        %v651 = vld [vmem:[%s225 + $0xbb8] sm:$0xff]
        %v652 = vld [vmem:[%s225 + $0xbc0] sm:$0xff]
        %v653 = vld [vmem:[%s225 + $0xbc8] sm:$0xff]
        %v654 = vld [vmem:[%s225 + $0xbd0] sm:$0xff]
        %v655 = vld [vmem:[%s225 + $0xbd8] sm:$0xff]
        %v656 = vld [vmem:[%s225 + $0xbe0] sm:$0xff]
        %v657 = vld [vmem:[%s225 + $0xbe8] sm:$0xff]
        %v658 = vld [vmem:[%s225 + $0xbf0] sm:$0xff]
        %v659 = vld [vmem:[%s225 + $0xbf8] sm:$0xff]
        %v660 = vld [vmem:[%s225 + $0xc00] sm:$0xff]
        %v661 = vld [vmem:[%s225 + $0xc08] sm:$0xff]
        %v662 = vld [vmem:[%s225 + $0xc10] sm:$0xff]
        %v663 = vld [vmem:[%s225 + $0xc18] sm:$0xff]
        %v664 = vld [vmem:[%s225 + $0xc20] sm:$0xff]
        %v665 = vld [vmem:[%s225 + $0xc28] sm:$0xff]
        %v666 = vld [vmem:[%s225 + $0xc30] sm:$0xff]
        %v667 = vld [vmem:[%s225 + $0xc38] sm:$0xff]
        %v668 = vld [vmem:[%s225 + $0xc40] sm:$0xff]
        %v669 = vld [vmem:[%s225 + $0xc48] sm:$0xff]
        %v670 = vld [vmem:[%s225 + $0xc50] sm:$0xff]
        %v671 = vld [vmem:[%s225 + $0xc58] sm:$0xff]
        %v672 = vld [vmem:[%s225 + $0xc60] sm:$0xff]
        %v673 = vld [vmem:[%s225 + $0xc68] sm:$0xff]
        %v674 = vld [vmem:[%s225 + $0xc70] sm:$0xff]
        %v675 = vld [vmem:[%s225 + $0xc78] sm:$0xff]
        %v676 = vld [vmem:[%s225 + $0xc80] sm:$0xff]
        %v677 = vld [vmem:[%s225 + $0xc88] sm:$0xff]
        %v678 = vld [vmem:[%s225 + $0xc90] sm:$0xff]
        %v679 = vld [vmem:[%s225 + $0xc98] sm:$0xff]
        %v680 = vld [vmem:[%s225 + $0xca0] sm:$0xff]
        %v681 = vld [vmem:[%s225 + $0xca8] sm:$0xff]
        %v682 = vld [vmem:[%s225 + $0xcb0] sm:$0xff]
        %v683 = vld [vmem:[%s225 + $0xcb8] sm:$0xff]
        %v684 = vld [vmem:[%s225 + $0xcc0] sm:$0xff]
        %v685 = vld [vmem:[%s225 + $0xcc8] sm:$0xff]
        %v686 = vld [vmem:[%s225 + $0xcd0] sm:$0xff]
        %v687 = vld [vmem:[%s225 + $0xcd8] sm:$0xff]
        %v688 = vld [vmem:[%s225 + $0xce0] sm:$0xff]
        %v689 = vld [vmem:[%s225 + $0xce8] sm:$0xff]
        %v690 = vld [vmem:[%s225 + $0xcf0] sm:$0xff]
        %v691 = vld [vmem:[%s225 + $0xcf8] sm:$0xff]
        %v692 = vld [vmem:[%s225 + $0xd00] sm:$0xff]
        %v693 = vld [vmem:[%s225 + $0xd08] sm:$0xff]
        %v694 = vld [vmem:[%s225 + $0xd10] sm:$0xff]
        %v695 = vld [vmem:[%s225 + $0xd18] sm:$0xff]
        %v696 = vld [vmem:[%s225 + $0xd20] sm:$0xff]
        %v697 = vld [vmem:[%s225 + $0xd28] sm:$0xff]
        %v698 = vld [vmem:[%s225 + $0xd30] sm:$0xff]
        %v699 = vld [vmem:[%s225 + $0xd38] sm:$0xff]
        %v700 = vld [vmem:[%s225 + $0xd40] sm:$0xff]
        %v701 = vld [vmem:[%s225 + $0xd48] sm:$0xff]
        %v702 = vld [vmem:[%s225 + $0xd50] sm:$0xff]
        %v703 = vld [vmem:[%s225 + $0xd58] sm:$0xff]
        %v704 = vld [vmem:[%s225 + $0xd60] sm:$0xff]
        %v705 = vld [vmem:[%s225 + $0xd68] sm:$0xff]
        %v706 = vld [vmem:[%s225 + $0xd70] sm:$0xff]
        %v707 = vld [vmem:[%s225 + $0xd78] sm:$0xff]
        %v708 = vld [vmem:[%s225 + $0xd80] sm:$0xff]
        %v709 = vld [vmem:[%s225 + $0xd88] sm:$0xff]
        %v710 = vld [vmem:[%s225 + $0xd90] sm:$0xff]
        %v711 = vld [vmem:[%s225 + $0xd98] sm:$0xff]
        %v712 = vld [vmem:[%s225 + $0xda0] sm:$0xff]
        %v713 = vld [vmem:[%s225 + $0xda8] sm:$0xff]
        %v714 = vld [vmem:[%s225 + $0xdb0] sm:$0xff]
        %v715 = vld [vmem:[%s225 + $0xdb8] sm:$0xff]
        %v716 = vld [vmem:[%s225 + $0xdc0] sm:$0xff]
        %v717 = vld [vmem:[%s225 + $0xdc8] sm:$0xff]
        %v718 = vld [vmem:[%s225 + $0xdd0] sm:$0xff]
        %v719 = vld [vmem:[%s225 + $0xdd8] sm:$0xff]
        %v720 = vld [vmem:[%s225 + $0xde0] sm:$0xff]
        %v721 = vld [vmem:[%s225 + $0xde8] sm:$0xff]
        %v722 = vld [vmem:[%s225 + $0xdf0] sm:$0xff]
        %v723 = vld [vmem:[%s225 + $0xdf8] sm:$0xff]
        %v724 = vld [vmem:[%s225 + $0xe00] sm:$0xff]
        %v725 = vld [vmem:[%s225 + $0xe08] sm:$0xff]
        %v726 = vld [vmem:[%s225 + $0xe10] sm:$0xff]
        %v727 = vld [vmem:[%s225 + $0xe18] sm:$0xff]
        %v728 = vld [vmem:[%s225 + $0xe20] sm:$0xff]
        %v729 = vld [vmem:[%s225 + $0xe28] sm:$0xff]
        %v730 = vld [vmem:[%s225 + $0xe30] sm:$0xff]
        %v731 = vld [vmem:[%s225 + $0xe38] sm:$0xff]
        %v732 = vld [vmem:[%s225 + $0xe40] sm:$0xff]
        %v733 = vld [vmem:[%s225 + $0xe48] sm:$0xff]
        %v734 = vld [vmem:[%s225 + $0xe50] sm:$0xff]
        %v735 = vld [vmem:[%s225 + $0xe58] sm:$0xff]
        %v736 = vld [vmem:[%s225 + $0xe60] sm:$0xff]
        %v737 = vld [vmem:[%s225 + $0xe68] sm:$0xff]
        %v738 = vld [vmem:[%s225 + $0xe70] sm:$0xff]
        %v739 = vld [vmem:[%s225 + $0xe78] sm:$0xff]
        %v740 = vld [vmem:[%s225 + $0xe80] sm:$0xff]
        %v741 = vld [vmem:[%s225 + $0xe88] sm:$0xff]
        %v742 = vld [vmem:[%s225 + $0xe90] sm:$0xff]
        %v743 = vld [vmem:[%s225 + $0xe98] sm:$0xff]
        %v744 = vld [vmem:[%s225 + $0xea0] sm:$0xff]
        %v745 = vld [vmem:[%s225 + $0xea8] sm:$0xff]
        %v746 = vld [vmem:[%s225 + $0xeb0] sm:$0xff]
        %v747 = vld [vmem:[%s225 + $0xeb8] sm:$0xff]
        %v748 = vld [vmem:[%s225 + $0xec0] sm:$0xff]
        %v749 = vld [vmem:[%s225 + $0xec8] sm:$0xff]
        %v750 = vld [vmem:[%s225 + $0xed0] sm:$0xff]
        %v751 = vld [vmem:[%s225 + $0xed8] sm:$0xff]
        %v752 = vld [vmem:[%s225 + $0xee0] sm:$0xff]
        %v753 = vld [vmem:[%s225 + $0xee8] sm:$0xff]
        %v754 = vld [vmem:[%s225 + $0xef0] sm:$0xff]
        %v755 = vld [vmem:[%s225 + $0xef8] sm:$0xff]
        %v756 = vld [vmem:[%s225 + $0xf00] sm:$0xff]
        %v757 = vld [vmem:[%s225 + $0xf08] sm:$0xff]
        %v758 = vld [vmem:[%s225 + $0xf10] sm:$0xff]
        %v759 = vld [vmem:[%s225 + $0xf18] sm:$0xff]
        %v760 = vld [vmem:[%s225 + $0xf20] sm:$0xff]
        %v761 = vld [vmem:[%s225 + $0xf28] sm:$0xff]
        %v762 = vld [vmem:[%s225 + $0xf30] sm:$0xff]
        %v763 = vld [vmem:[%s225 + $0xf38] sm:$0xff]
        %v764 = vld [vmem:[%s225 + $0xf40] sm:$0xff]
        %v765 = vld [vmem:[%s225 + $0xf48] sm:$0xff]
        %v766 = vld [vmem:[%s225 + $0xf50] sm:$0xff]
        %v767 = vld [vmem:[%s225 + $0xf58] sm:$0xff]
        %v768 = vld [vmem:[%s225 + $0xf60] sm:$0xff]
        %v769 = vld [vmem:[%s225 + $0xf68] sm:$0xff]
        %v770 = vld [vmem:[%s225 + $0xf70] sm:$0xff]
        %v771 = vld [vmem:[%s225 + $0xf78] sm:$0xff]
        %v772 = vld [vmem:[%s225 + $0xf80] sm:$0xff]
        %v773 = vld [vmem:[%s225 + $0xf88] sm:$0xff]
        %v774 = vld [vmem:[%s225 + $0xf90] sm:$0xff]
        %v775 = vld [vmem:[%s225 + $0xf98] sm:$0xff]
        %v776 = vld [vmem:[%s225 + $0xfa0] sm:$0xff]
        %v777 = vld [vmem:[%s225 + $0xfa8] sm:$0xff]
        %v778 = vld [vmem:[%s225 + $0xfb0] sm:$0xff]
        %v779 = vld [vmem:[%s225 + $0xfb8] sm:$0xff]
        %v780 = vld [vmem:[%s225 + $0xfc0] sm:$0xff]
        %v781 = vld [vmem:[%s225 + $0xfc8] sm:$0xff]
        %v782 = vld [vmem:[%s225 + $0xfd0] sm:$0xff]
        %v783 = vld [vmem:[%s225 + $0xfd8] sm:$0xff]
        %v784 = vld [vmem:[%s225 + $0xfe0] sm:$0xff]
        %v785 = vld [vmem:[%s225 + $0xfe8] sm:$0xff]
        %v786 = vld [vmem:[%s225 + $0xff0] sm:$0xff]
        %v787 = vld [vmem:[%s225 + $0xff8] sm:$0xff]
        %v788 = vld [vmem:[%s225 + $0x1000] sm:$0xff]
        %v789 = vld [vmem:[%s225 + $0x1008] sm:$0xff]
        %v790 = vld [vmem:[%s225 + $0x1010] sm:$0xff]
        %v791 = vld [vmem:[%s225 + $0x1018] sm:$0xff]
        %v792 = vld [vmem:[%s225 + $0x1020] sm:$0xff]
        %v793 = vld [vmem:[%s225 + $0x1028] sm:$0xff]
        %v794 = vld [vmem:[%s225 + $0x1030] sm:$0xff]
        %v795 = vld [vmem:[%s225 + $0x1038] sm:$0xff]
        %v796 = vld [vmem:[%s225 + $0x1040] sm:$0xff]
        %v797 = vld [vmem:[%s225 + $0x1048] sm:$0xff]
        %v798 = vld [vmem:[%s225 + $0x1050] sm:$0xff]
        %v799 = vld [vmem:[%s225 + $0x1058] sm:$0xff]
        %v800 = vld [vmem:[%s225 + $0x1060] sm:$0xff]
        %v801 = vld [vmem:[%s225 + $0x1068] sm:$0xff]
        %v802 = vld [vmem:[%s225 + $0x1070] sm:$0xff]
        %v803 = vld [vmem:[%s225 + $0x1078] sm:$0xff]
        %v804 = vld [vmem:[%s225 + $0x1080] sm:$0xff]
        %v805 = vld [vmem:[%s225 + $0x1088] sm:$0xff]
        %v806 = vld [vmem:[%s225 + $0x1090] sm:$0xff]
        %v807 = vld [vmem:[%s225 + $0x1098] sm:$0xff]
        %v808 = vld [vmem:[%s225 + $0x10a0] sm:$0xff]
        %v809 = vld [vmem:[%s225 + $0x10a8] sm:$0xff]
        %v810 = vld [vmem:[%s225 + $0x10b0] sm:$0xff]
        %v811 = vld [vmem:[%s225 + $0x10b8] sm:$0xff]
        %v812 = vld [vmem:[%s225 + $0x10c0] sm:$0xff]
        %v813 = vld [vmem:[%s225 + $0x10c8] sm:$0xff]
        %v814 = vld [vmem:[%s225 + $0x10d0] sm:$0xff]
        %v815 = vld [vmem:[%s225 + $0x10d8] sm:$0xff]
        %v816 = vld [vmem:[%s225 + $0x10e0] sm:$0xff]
        %v817 = vld [vmem:[%s225 + $0x10e8] sm:$0xff]
        %v818 = vld [vmem:[%s225 + $0x10f0] sm:$0xff]
        %v819 = vld [vmem:[%s225 + $0x10f8] sm:$0xff]
        %v820 = vld [vmem:[%s225 + $0x1100] sm:$0xff]
        %v821 = vld [vmem:[%s225 + $0x1108] sm:$0xff]
        %v822 = vld [vmem:[%s225 + $0x1110] sm:$0xff]
        %v823 = vld [vmem:[%s225 + $0x1118] sm:$0xff]
        %v824 = vld [vmem:[%s225 + $0x1120] sm:$0xff]
        %v825 = vld [vmem:[%s225 + $0x1128] sm:$0xff]
        %v826 = vld [vmem:[%s225 + $0x1130] sm:$0xff]
        %v827 = vld [vmem:[%s225 + $0x1138] sm:$0xff]
        %v828 = vld [vmem:[%s225 + $0x1140] sm:$0xff]
        %v829 = vld [vmem:[%s225 + $0x1148] sm:$0xff]
        %v830 = vld [vmem:[%s225 + $0x1150] sm:$0xff]
        %v831 = vld [vmem:[%s225 + $0x1158] sm:$0xff]
        %v832 = vld [vmem:[%s225 + $0x1160] sm:$0xff]
        %v833 = vld [vmem:[%s225 + $0x1168] sm:$0xff]
        %v834 = vld [vmem:[%s225 + $0x1170] sm:$0xff]
        %v835 = vld [vmem:[%s225 + $0x1178] sm:$0xff]
        %v836 = vld [vmem:[%s225 + $0x1180] sm:$0xff]
        %v837 = vld [vmem:[%s225 + $0x1188] sm:$0xff]
        %v838 = vld [vmem:[%s225 + $0x1190] sm:$0xff]
        %v839 = vld [vmem:[%s225 + $0x1198] sm:$0xff]
        %v840 = vld [vmem:[%s225 + $0x11a0] sm:$0xff]
        %v841 = vld [vmem:[%s225 + $0x11a8] sm:$0xff]
        %v842 = vld [vmem:[%s225 + $0x11b0] sm:$0xff]
        %v843 = vld [vmem:[%s225 + $0x11b8] sm:$0xff]
        %v844 = vld [vmem:[%s225 + $0x11c0] sm:$0xff]
        %v845 = vld [vmem:[%s225 + $0x11c8] sm:$0xff]
        %v846 = vld [vmem:[%s225 + $0x11d0] sm:$0xff]
        %v847 = vld [vmem:[%s225 + $0x11d8] sm:$0xff]
        %v848 = vld [vmem:[%s225 + $0x11e0] sm:$0xff]
        %v849 = vld [vmem:[%s225 + $0x11e8] sm:$0xff]
        %v850 = vld [vmem:[%s225 + $0x11f0] sm:$0xff]
        %v851 = vld [vmem:[%s225 + $0x11f8] sm:$0xff]
        %v852 = vld [vmem:[%s225 + $0x1200] sm:$0xff]
        %v853 = vld [vmem:[%s225 + $0x1208] sm:$0xff]
        %v854 = vld [vmem:[%s225 + $0x1210] sm:$0xff]
        %v855 = vld [vmem:[%s225 + $0x1218] sm:$0xff]
        %v856 = vld [vmem:[%s225 + $0x1220] sm:$0xff]
        %v857 = vld [vmem:[%s225 + $0x1228] sm:$0xff]
        %v858 = vld [vmem:[%s225 + $0x1230] sm:$0xff]
        %v859 = vld [vmem:[%s225 + $0x1238] sm:$0xff]
        %v860 = vld [vmem:[%s225 + $0x1240] sm:$0xff]
        %v861 = vld [vmem:[%s225 + $0x1248] sm:$0xff]
        %v862 = vld [vmem:[%s225 + $0x1250] sm:$0xff]
        %v863 = vld [vmem:[%s225 + $0x1258] sm:$0xff]
        %v864 = vld [vmem:[%s225 + $0x1260] sm:$0xff]
        %v865 = vld [vmem:[%s225 + $0x1268] sm:$0xff]
        %v866 = vld [vmem:[%s225 + $0x1270] sm:$0xff]
        %v867 = vld [vmem:[%s225 + $0x1278] sm:$0xff]
        %v868 = vld [vmem:[%s225 + $0x1280] sm:$0xff]
        %v869 = vld [vmem:[%s225 + $0x1288] sm:$0xff]
        %v870 = vld [vmem:[%s225 + $0x1290] sm:$0xff]
        %v871 = vld [vmem:[%s225 + $0x1298] sm:$0xff]
        %v872 = vld [vmem:[%s225 + $0x12a0] sm:$0xff]
        %v873 = vld [vmem:[%s225 + $0x12a8] sm:$0xff]
        %v874 = vld [vmem:[%s225 + $0x12b0] sm:$0xff]
        %v875 = vld [vmem:[%s225 + $0x12b8] sm:$0xff]
        %v876 = vld [vmem:[%s225 + $0x12c0] sm:$0xff]
        %v877 = vld [vmem:[%s225 + $0x12c8] sm:$0xff]
        %v878 = vld [vmem:[%s225 + $0x12d0] sm:$0xff]
        %v879 = vld [vmem:[%s225 + $0x12d8] sm:$0xff]
        %v880 = vld [vmem:[%s225 + $0x12e0] sm:$0xff]
        %v881 = vld [vmem:[%s225 + $0x12e8] sm:$0xff]
        %v882 = vld [vmem:[%s225 + $0x12f0] sm:$0xff]
        %v883 = vld [vmem:[%s225 + $0x12f8] sm:$0xff]
        %v884 = vld [vmem:[%s225 + $0x1300] sm:$0xff]
        %v885 = vld [vmem:[%s225 + $0x1308] sm:$0xff]
        %v886 = vld [vmem:[%s225 + $0x1310] sm:$0xff]
        %v887 = vld [vmem:[%s225 + $0x1318] sm:$0xff]
        %v888 = vld [vmem:[%s225 + $0x1320] sm:$0xff]
        %v889 = vld [vmem:[%s225 + $0x1328] sm:$0xff]
        %v890 = vld [vmem:[%s225 + $0x1330] sm:$0xff]
        %v891 = vld [vmem:[%s225 + $0x1338] sm:$0xff]
        %v892 = vld [vmem:[%s225 + $0x1340] sm:$0xff]
        %v893 = vld [vmem:[%s225 + $0x1348] sm:$0xff]
        %v894 = vld [vmem:[%s225 + $0x1350] sm:$0xff]
        %v895 = vld [vmem:[%s225 + $0x1358] sm:$0xff]
        %v896 = vld [vmem:[%s225 + $0x1360] sm:$0xff]
        %v897 = vld [vmem:[%s225 + $0x1368] sm:$0xff]
        %v898 = vld [vmem:[%s225 + $0x1370] sm:$0xff]
        %v899 = vld [vmem:[%s225 + $0x1378] sm:$0xff]
        %v900 = vld [vmem:[%s225 + $0x1380] sm:$0xff]
        %v901 = vld [vmem:[%s225 + $0x1388] sm:$0xff]
        %v902 = vld [vmem:[%s225 + $0x1390] sm:$0xff]
        %v903 = vld [vmem:[%s225 + $0x1398] sm:$0xff]
        %v904 = vld [vmem:[%s225 + $0x13a0] sm:$0xff]
        %v905 = vld [vmem:[%s225 + $0x13a8] sm:$0xff]
        %v906 = vld [vmem:[%s225 + $0x13b0] sm:$0xff]
        %v907 = vld [vmem:[%s225 + $0x13b8] sm:$0xff]
        %v908 = vld [vmem:[%s225 + $0x13c0] sm:$0xff]
        %v909 = vld [vmem:[%s225 + $0x13c8] sm:$0xff]
        %v910 = vld [vmem:[%s225 + $0x13d0] sm:$0xff]
        %v911 = vld [vmem:[%s225 + $0x13d8] sm:$0xff]
        %v912 = vld [vmem:[%s225 + $0x13e0] sm:$0xff]
        %v913 = vld [vmem:[%s225 + $0x13e8] sm:$0xff]
        %v914 = vld [vmem:[%s225 + $0x13f0] sm:$0xff]
        %v915 = vld [vmem:[%s225 + $0x13f8] sm:$0xff]
        %v916 = vld [vmem:[%s225 + $0x1400] sm:$0xff]
        %v917 = vld [vmem:[%s225 + $0x1408] sm:$0xff]
        %v918 = vld [vmem:[%s225 + $0x1410] sm:$0xff]
        %v919 = vld [vmem:[%s225 + $0x1418] sm:$0xff]
        %v920 = vld [vmem:[%s225 + $0x1420] sm:$0xff]
        %v921 = vld [vmem:[%s225 + $0x1428] sm:$0xff]
        %v922 = vld [vmem:[%s225 + $0x1430] sm:$0xff]
        %v923 = vld [vmem:[%s225 + $0x1438] sm:$0xff]
        %v924 = vld [vmem:[%s225 + $0x1440] sm:$0xff]
        %v925 = vld [vmem:[%s225 + $0x1448] sm:$0xff]
        %v926 = vld [vmem:[%s225 + $0x1450] sm:$0xff]
        %v927 = vld [vmem:[%s225 + $0x1458] sm:$0xff]
        %v928 = vld [vmem:[%s225 + $0x1460] sm:$0xff]
        %v929 = vld [vmem:[%s225 + $0x1468] sm:$0xff]
        %v930 = vld [vmem:[%s225 + $0x1470] sm:$0xff]
        %v931 = vld [vmem:[%s225 + $0x1478] sm:$0xff]
        %v932 = vld [vmem:[%s225 + $0x1480] sm:$0xff]
        %v933 = vld [vmem:[%s225 + $0x1488] sm:$0xff]
        %v934 = vld [vmem:[%s225 + $0x1490] sm:$0xff]
        %v935 = vld [vmem:[%s225 + $0x1498] sm:$0xff]
        %v936 = vld [vmem:[%s225 + $0x14a0] sm:$0xff]
        %v937 = vld [vmem:[%s225 + $0x14a8] sm:$0xff]
        %v938 = vld [vmem:[%s225 + $0x14b0] sm:$0xff]
        %v939 = vld [vmem:[%s225 + $0x14b8] sm:$0xff]
        %v940 = vld [vmem:[%s225 + $0x14c0] sm:$0xff]
        %v941 = vld [vmem:[%s225 + $0x14c8] sm:$0xff]
        %v942 = vld [vmem:[%s225 + $0x14d0] sm:$0xff]
        %v943 = vld [vmem:[%s225 + $0x14d8] sm:$0xff]
        %v944 = vld [vmem:[%s225 + $0x14e0] sm:$0xff]
        %v945 = vld [vmem:[%s225 + $0x14e8] sm:$0xff]
        %v946 = vld [vmem:[%s225 + $0x14f0] sm:$0xff]
        %v947 = vld [vmem:[%s225 + $0x14f8] sm:$0xff]
        %v948 = vld [vmem:[%s225 + $0x1500] sm:$0xff]
        %v949 = vld [vmem:[%s225 + $0x1508] sm:$0xff]
        %v950 = vld [vmem:[%s225 + $0x1510] sm:$0xff]
        %v951 = vld [vmem:[%s225 + $0x1518] sm:$0xff]
        %v952 = vld [vmem:[%s225 + $0x1520] sm:$0xff]
        %v953 = vld [vmem:[%s225 + $0x1528] sm:$0xff]
        %v954 = vld [vmem:[%s225 + $0x1530] sm:$0xff]
        %v955 = vld [vmem:[%s225 + $0x1538] sm:$0xff]
        %v956 = vld [vmem:[%s225 + $0x1540] sm:$0xff]
        %v957 = vld [vmem:[%s225 + $0x1548] sm:$0xff]
        %v958 = vld [vmem:[%s225 + $0x1550] sm:$0xff]
        %v959 = vld [vmem:[%s225 + $0x1558] sm:$0xff]
        %v960 = vld [vmem:[%s225 + $0x1560] sm:$0xff]
        %v961 = vld [vmem:[%s225 + $0x1568] sm:$0xff]
        %v962 = vld [vmem:[%s225 + $0x1570] sm:$0xff]
        %v963 = vld [vmem:[%s225 + $0x1578] sm:$0xff]
        %v964 = vld [vmem:[%s225 + $0x1580] sm:$0xff]
        %v965 = vld [vmem:[%s225 + $0x1588] sm:$0xff]
        %v966 = vld [vmem:[%s225 + $0x1590] sm:$0xff]
        %v967 = vld [vmem:[%s225 + $0x1598] sm:$0xff]
        %v968 = vld [vmem:[%s225 + $0x15a0] sm:$0xff]
        %v969 = vld [vmem:[%s225 + $0x15a8] sm:$0xff]
        %v970 = vld [vmem:[%s225 + $0x15b0] sm:$0xff]
        %v971 = vld [vmem:[%s225 + $0x15b8] sm:$0xff]
        %v972 = vld [vmem:[%s225 + $0x15c0] sm:$0xff]
        %v973 = vld [vmem:[%s225 + $0x15c8] sm:$0xff]
        %v974 = vld [vmem:[%s225 + $0x15d0] sm:$0xff]
        %v975 = vld [vmem:[%s225 + $0x15d8] sm:$0xff]
        %v976 = vld [vmem:[%s225 + $0x15e0] sm:$0xff]
        %v977 = vld [vmem:[%s225 + $0x15e8] sm:$0xff]
        %v978 = vld [vmem:[%s225 + $0x15f0] sm:$0xff]
        %v979 = vld [vmem:[%s225 + $0x15f8] sm:$0xff]
        %v980 = vld [vmem:[%s225 + $0x1600] sm:$0xff]
        %v981 = vld [vmem:[%s225 + $0x1608] sm:$0xff]
        %v982 = vld [vmem:[%s225 + $0x1610] sm:$0xff]
        %v983 = vld [vmem:[%s225 + $0x1618] sm:$0xff]
        %v984 = vld [vmem:[%s225 + $0x1620] sm:$0xff]
        %v985 = vld [vmem:[%s225 + $0x1628] sm:$0xff]
        %v986 = vld [vmem:[%s225 + $0x1630] sm:$0xff]
        %v987 = vld [vmem:[%s225 + $0x1638] sm:$0xff]
        %v988 = vld [vmem:[%s225 + $0x1640] sm:$0xff]
        %v989 = vld [vmem:[%s225 + $0x1648] sm:$0xff]
        %v990 = vld [vmem:[%s225 + $0x1650] sm:$0xff]
        %v991 = vld [vmem:[%s225 + $0x1658] sm:$0xff]
        %v992 = vld [vmem:[%s225 + $0x1660] sm:$0xff]
        %v993 = vld [vmem:[%s225 + $0x1668] sm:$0xff]
        %v994 = vld [vmem:[%s225 + $0x1670] sm:$0xff]
        %v995 = vld [vmem:[%s225 + $0x1678] sm:$0xff]
        %v996 = vld [vmem:[%s225 + $0x1680] sm:$0xff]
        %v997 = vld [vmem:[%s225 + $0x1688] sm:$0xff]
        %v998 = vld [vmem:[%s225 + $0x1690] sm:$0xff]
        %v999 = vld [vmem:[%s225 + $0x1698] sm:$0xff]
        %v1000 = vld [vmem:[%s225 + $0x16a0] sm:$0xff]
        %v1001 = vld [vmem:[%s225 + $0x16a8] sm:$0xff]
        %v1002 = vld [vmem:[%s225 + $0x16b0] sm:$0xff]
        %v1003 = vld [vmem:[%s225 + $0x16b8] sm:$0xff]
        %v1004 = vld [vmem:[%s225 + $0x16c0] sm:$0xff]
        %v1005 = vld [vmem:[%s225 + $0x16c8] sm:$0xff]
        %v1006 = vld [vmem:[%s225 + $0x16d0] sm:$0xff]
        %v1007 = vld [vmem:[%s225 + $0x16d8] sm:$0xff]
        %v1008 = vld [vmem:[%s225 + $0x16e0] sm:$0xff]
        %v1009 = vld [vmem:[%s225 + $0x16e8] sm:$0xff]
        %v1010 = vld [vmem:[%s225 + $0x16f0] sm:$0xff]
        %v1011 = vld [vmem:[%s225 + $0x16f8] sm:$0xff]
        %v1012 = vld [vmem:[%s225 + $0x1700] sm:$0xff]
        %v1013 = vld [vmem:[%s225 + $0x1708] sm:$0xff]
        %v1014 = vld [vmem:[%s225 + $0x1710] sm:$0xff]
        %v1015 = vld [vmem:[%s225 + $0x1718] sm:$0xff]
        %v1016 = vld [vmem:[%s225 + $0x1720] sm:$0xff]
        %v1017 = vld [vmem:[%s225 + $0x1728] sm:$0xff]
        %v1018 = vld [vmem:[%s225 + $0x1730] sm:$0xff]
        %v1019 = vld [vmem:[%s225 + $0x1738] sm:$0xff]
        %v1020 = vld [vmem:[%s225 + $0x1740] sm:$0xff]
        %v1021 = vld [vmem:[%s225 + $0x1748] sm:$0xff]
        %v1022 = vld [vmem:[%s225 + $0x1750] sm:$0xff]
        %v1023 = vld [vmem:[%s225 + $0x1758] sm:$0xff]
        %v1024 = vld [vmem:[%s225 + $0x1760] sm:$0xff]
        %v1025 = vld [vmem:[%s225 + $0x1768] sm:$0xff]
        %v1026 = vld [vmem:[%s225 + $0x1770] sm:$0xff]
        %v1027 = vld [vmem:[%s225 + $0x1778] sm:$0xff]
        %v1028 = vld [vmem:[%s225 + $0x1780] sm:$0xff]
        %v1029 = vld [vmem:[%s225 + $0x1788] sm:$0xff]
        %v1030 = vld [vmem:[%s225 + $0x1790] sm:$0xff]
        %v1031 = vld [vmem:[%s225 + $0x1798] sm:$0xff]
        %v1032 = vld [vmem:[%s225 + $0x17a0] sm:$0xff]
        %v1033 = vld [vmem:[%s225 + $0x17a8] sm:$0xff]
        %v1034 = vld [vmem:[%s225 + $0x17b0] sm:$0xff]
        %v1035 = vld [vmem:[%s225 + $0x17b8] sm:$0xff]
        %v1036 = vld [vmem:[%s225 + $0x17c0] sm:$0xff]
        %v1037 = vld [vmem:[%s225 + $0x17c8] sm:$0xff]
        %v1038 = vld [vmem:[%s225 + $0x17d0] sm:$0xff]
        %v1039 = vld [vmem:[%s225 + $0x17d8] sm:$0xff]
        %v1040 = vld [vmem:[%s225 + $0x17e0] sm:$0xff]
        %v1041 = vld [vmem:[%s225 + $0x17e8] sm:$0xff]
        %v1042 = vld [vmem:[%s225 + $0x17f0] sm:$0xff]
        %v1043 = vld [vmem:[%s225 + $0x17f8] sm:$0xff]
        %v1044 = vld [vmem:[%s225 + $0x1800] sm:$0xff]
        %v1045 = vld [vmem:[%s225 + $0x1808] sm:$0xff]
        %v1046 = vld [vmem:[%s225 + $0x1810] sm:$0xff]
        %v1047 = vld [vmem:[%s225 + $0x1818] sm:$0xff]
        %v1048 = vld [vmem:[%s225 + $0x1820] sm:$0xff]
        %v1049 = vld [vmem:[%s225 + $0x1828] sm:$0xff]
        %v1050 = vld [vmem:[%s225 + $0x1830] sm:$0xff]
        %v1051 = vld [vmem:[%s225 + $0x1838] sm:$0xff]
        %v1052 = vld [vmem:[%s225 + $0x1840] sm:$0xff]
        %v1053 = vld [vmem:[%s225 + $0x1848] sm:$0xff]
        %v1054 = vld [vmem:[%s225 + $0x1850] sm:$0xff]
        %v1055 = vld [vmem:[%s225 + $0x1858] sm:$0xff]
        %v1056 = vld [vmem:[%s225 + $0x1860] sm:$0xff]
        %v1057 = vld [vmem:[%s225 + $0x1868] sm:$0xff]
        %v1058 = vld [vmem:[%s225 + $0x1870] sm:$0xff]
        %v1059 = vld [vmem:[%s225 + $0x1878] sm:$0xff]
        %v1060 = vld [vmem:[%s225 + $0x1880] sm:$0xff]
        %v1061 = vld [vmem:[%s225 + $0x1888] sm:$0xff]
        %v1062 = vld [vmem:[%s225 + $0x1890] sm:$0xff]
        %v1063 = vld [vmem:[%s225 + $0x1898] sm:$0xff]
        %v1064 = vld [vmem:[%s225 + $0x18a0] sm:$0xff]
        %v1065 = vld [vmem:[%s225 + $0x18a8] sm:$0xff]
        %v1066 = vld [vmem:[%s225 + $0x18b0] sm:$0xff]
        %v1067 = vld [vmem:[%s225 + $0x18b8] sm:$0xff]
        %v1068 = vld [vmem:[%s225 + $0x18c0] sm:$0xff]
        %v1069 = vld [vmem:[%s225 + $0x18c8] sm:$0xff]
        %v1070 = vld [vmem:[%s225 + $0x18d0] sm:$0xff]
        %v1071 = vld [vmem:[%s225 + $0x18d8] sm:$0xff]
        %v1072 = vld [vmem:[%s225 + $0x18e0] sm:$0xff]
        %v1073 = vld [vmem:[%s225 + $0x18e8] sm:$0xff]
        %v1074 = vld [vmem:[%s225 + $0x18f0] sm:$0xff]
        %v1075 = vld [vmem:[%s225 + $0x18f8] sm:$0xff]
        %v1076 = vld [vmem:[%s225 + $0x1900] sm:$0xff]
        %v1077 = vld [vmem:[%s225 + $0x1908] sm:$0xff]
        %v1078 = vld [vmem:[%s225 + $0x1910] sm:$0xff]
        %v1079 = vld [vmem:[%s225 + $0x1918] sm:$0xff]
        %v1080 = vld [vmem:[%s225 + $0x1920] sm:$0xff]
        %v1081 = vld [vmem:[%s225 + $0x1928] sm:$0xff]
        %v1082 = vld [vmem:[%s225 + $0x1930] sm:$0xff]
        %v1083 = vld [vmem:[%s225 + $0x1938] sm:$0xff]
        %v1084 = vld [vmem:[%s225 + $0x1940] sm:$0xff]
        %v1085 = vld [vmem:[%s225 + $0x1948] sm:$0xff]
        %v1086 = vld [vmem:[%s225 + $0x1950] sm:$0xff]
        %v1087 = vld [vmem:[%s225 + $0x1958] sm:$0xff]
        %v1088 = vld [vmem:[%s225 + $0x1960] sm:$0xff]
        %v1089 = vld [vmem:[%s225 + $0x1968] sm:$0xff]
        %v1090 = vld [vmem:[%s225 + $0x1970] sm:$0xff]
        %v1091 = vld [vmem:[%s225 + $0x1978] sm:$0xff]
        %v1092 = vld [vmem:[%s225 + $0x1980] sm:$0xff]
        %v1093 = vld [vmem:[%s225 + $0x1988] sm:$0xff]
        %v1094 = vld [vmem:[%s225 + $0x1990] sm:$0xff]
        %v1095 = vld [vmem:[%s225 + $0x1998] sm:$0xff]
        %v1096 = vld [vmem:[%s225 + $0x19a0] sm:$0xff]
        %v1097 = vld [vmem:[%s225 + $0x19a8] sm:$0xff]
        %v1098 = vld [vmem:[%s225 + $0x19b0] sm:$0xff]
        %v1099 = vld [vmem:[%s225 + $0x19b8] sm:$0xff]
        %v1100 = vld [vmem:[%s225 + $0x19c0] sm:$0xff]
        %v1101 = vld [vmem:[%s225 + $0x19c8] sm:$0xff]
        %v1102 = vld [vmem:[%s225 + $0x19d0] sm:$0xff]
        %v1103 = vld [vmem:[%s225 + $0x19d8] sm:$0xff]
        %v1104 = vld [vmem:[%s225 + $0x19e0] sm:$0xff]
        %v1105 = vld [vmem:[%s225 + $0x19e8] sm:$0xff]
        %v1106 = vld [vmem:[%s225 + $0x19f0] sm:$0xff]
        %v1107 = vld [vmem:[%s225 + $0x19f8] sm:$0xff]
        %v1108 = vld [vmem:[%s225 + $0x1a00] sm:$0xff]
        %v1109 = vld [vmem:[%s225 + $0x1a08] sm:$0xff]
        %v1110 = vld [vmem:[%s225 + $0x1a10] sm:$0xff]
        %v1111 = vld [vmem:[%s225 + $0x1a18] sm:$0xff]
        %v1112 = vld [vmem:[%s225 + $0x1a20] sm:$0xff]
        %v1113 = vld [vmem:[%s225 + $0x1a28] sm:$0xff]
        %v1114 = vld [vmem:[%s225 + $0x1a30] sm:$0xff]
        %v1115 = vld [vmem:[%s225 + $0x1a38] sm:$0xff]
        %v1116 = vld [vmem:[%s225 + $0x1a40] sm:$0xff]
        %v1117 = vld [vmem:[%s225 + $0x1a48] sm:$0xff]
        %v1118 = vld [vmem:[%s225 + $0x1a50] sm:$0xff]
        %v1119 = vld [vmem:[%s225 + $0x1a58] sm:$0xff]
        %v1120 = vld [vmem:[%s225 + $0x1a60] sm:$0xff]
        %v1121 = vld [vmem:[%s225 + $0x1a68] sm:$0xff]
        %v1122 = vld [vmem:[%s225 + $0x1a70] sm:$0xff]
        %v1123 = vld [vmem:[%s225 + $0x1a78] sm:$0xff]
        %v1124 = vld [vmem:[%s225 + $0x1a80] sm:$0xff]
        %v1125 = vld [vmem:[%s225 + $0x1a88] sm:$0xff]
        %v1126 = vld [vmem:[%s225 + $0x1a90] sm:$0xff]
        %v1127 = vld [vmem:[%s225 + $0x1a98] sm:$0xff]
        %v1128 = vld [vmem:[%s225 + $0x1aa0] sm:$0xff]
        %v1129 = vld [vmem:[%s225 + $0x1aa8] sm:$0xff]
        %v1130 = vld [vmem:[%s225 + $0x1ab0] sm:$0xff]
        %v1131 = vld [vmem:[%s225 + $0x1ab8] sm:$0xff]
        %v1132 = vld [vmem:[%s225 + $0x1ac0] sm:$0xff]
        %v1133 = vld [vmem:[%s225 + $0x1ac8] sm:$0xff]
        %v1134 = vld [vmem:[%s225 + $0x1ad0] sm:$0xff]
        %v1135 = vld [vmem:[%s225 + $0x1ad8] sm:$0xff]
        %v1136 = vld [vmem:[%s225 + $0x1ae0] sm:$0xff]
        %v1137 = vld [vmem:[%s225 + $0x1ae8] sm:$0xff]
        %v1138 = vld [vmem:[%s225 + $0x1af0] sm:$0xff]
        %v1139 = vld [vmem:[%s225 + $0x1af8] sm:$0xff]
        %v1140 = vld [vmem:[%s225 + $0x1b00] sm:$0xff]
        %v1141 = vld [vmem:[%s225 + $0x1b08] sm:$0xff]
        %v1142 = vld [vmem:[%s225 + $0x1b10] sm:$0xff]
        %v1143 = vld [vmem:[%s225 + $0x1b18] sm:$0xff]
        %v1144 = vld [vmem:[%s225 + $0x1b20] sm:$0xff]
        %v1145 = vld [vmem:[%s225 + $0x1b28] sm:$0xff]
        %v1146 = vld [vmem:[%s225 + $0x1b30] sm:$0xff]
        %v1147 = vld [vmem:[%s225 + $0x1b38] sm:$0xff]
        %v1148 = vld [vmem:[%s225 + $0x1b40] sm:$0xff]
        %v1149 = vld [vmem:[%s225 + $0x1b48] sm:$0xff]
        %v1150 = vld [vmem:[%s225 + $0x1b50] sm:$0xff]
        %v1151 = vld [vmem:[%s225 + $0x1b58] sm:$0xff]
        %v1152 = vld [vmem:[%s225 + $0x1b60] sm:$0xff]
        %v1153 = vld [vmem:[%s225 + $0x1b68] sm:$0xff]
        %v1154 = vld [vmem:[%s225 + $0x1b70] sm:$0xff]
        %v1155 = vld [vmem:[%s225 + $0x1b78] sm:$0xff]
        %v1156 = vld [vmem:[%s225 + $0x1b80] sm:$0xff]
        %v1157 = vld [vmem:[%s225 + $0x1b88] sm:$0xff]
        %v1158 = vld [vmem:[%s225 + $0x1b90] sm:$0xff]
        %v1159 = vld [vmem:[%s225 + $0x1b98] sm:$0xff]
        %v1160 = vld [vmem:[%s225 + $0x1ba0] sm:$0xff]
        %v1161 = vld [vmem:[%s225 + $0x1ba8] sm:$0xff]
        %v1162 = vld [vmem:[%s225 + $0x1bb0] sm:$0xff]
        %v1163 = vld [vmem:[%s225 + $0x1bb8] sm:$0xff]
        %v1164 = vld [vmem:[%s225 + $0x1bc0] sm:$0xff]
        %v1165 = vld [vmem:[%s225 + $0x1bc8] sm:$0xff]
        %v1166 = vld [vmem:[%s225 + $0x1bd0] sm:$0xff]
        %v1167 = vld [vmem:[%s225 + $0x1bd8] sm:$0xff]
        %v1168 = vld [vmem:[%s225 + $0x1be0] sm:$0xff]
        %v1169 = vld [vmem:[%s225 + $0x1be8] sm:$0xff]
        %v1170 = vld [vmem:[%s225 + $0x1bf0] sm:$0xff]
        %v1171 = vld [vmem:[%s225 + $0x1bf8] sm:$0xff]
        %v1172 = vld [vmem:[%s225 + $0x1c00] sm:$0xff]
        %v1173 = vld [vmem:[%s225 + $0x1c08] sm:$0xff]
        %v1174 = vld [vmem:[%s225 + $0x1c10] sm:$0xff]
        %v1175 = vld [vmem:[%s225 + $0x1c18] sm:$0xff]
        %v1176 = vld [vmem:[%s225 + $0x1c20] sm:$0xff]
        %v1177 = vld [vmem:[%s225 + $0x1c28] sm:$0xff]
        %v1178 = vld [vmem:[%s225 + $0x1c30] sm:$0xff]
        %v1179 = vld [vmem:[%s225 + $0x1c38] sm:$0xff]
        %v1180 = vld [vmem:[%s225 + $0x1c40] sm:$0xff]
        %v1181 = vld [vmem:[%s225 + $0x1c48] sm:$0xff]
        %v1182 = vld [vmem:[%s225 + $0x1c50] sm:$0xff]
        %v1183 = vld [vmem:[%s225 + $0x1c58] sm:$0xff]
        %v1184 = vld [vmem:[%s225 + $0x1c60] sm:$0xff]
        %v1185 = vld [vmem:[%s225 + $0x1c68] sm:$0xff]
        %v1186 = vld [vmem:[%s225 + $0x1c70] sm:$0xff]
        %v1187 = vld [vmem:[%s225 + $0x1c78] sm:$0xff]
        %v1188 = vld [vmem:[%s225 + $0x1c80] sm:$0xff]
        %v1189 = vld [vmem:[%s225 + $0x1c88] sm:$0xff]
        %v1190 = vld [vmem:[%s225 + $0x1c90] sm:$0xff]
        %v1191 = vld [vmem:[%s225 + $0x1c98] sm:$0xff]
        %v1192 = vld [vmem:[%s225 + $0x1ca0] sm:$0xff]
        %v1193 = vld [vmem:[%s225 + $0x1ca8] sm:$0xff]
        %v1194 = vld [vmem:[%s225 + $0x1cb0] sm:$0xff]
        %v1195 = vld [vmem:[%s225 + $0x1cb8] sm:$0xff]
        %v1196 = vld [vmem:[%s225 + $0x1cc0] sm:$0xff]
        %v1197 = vld [vmem:[%s225 + $0x1cc8] sm:$0xff]
        %v1198 = vld [vmem:[%s225 + $0x1cd0] sm:$0xff]
        %v1199 = vld [vmem:[%s225 + $0x1cd8] sm:$0xff]
        %v1200 = vld [vmem:[%s225 + $0x1ce0] sm:$0xff]
        %v1201 = vld [vmem:[%s225 + $0x1ce8] sm:$0xff]
        %v1202 = vld [vmem:[%s225 + $0x1cf0] sm:$0xff]
        %v1203 = vld [vmem:[%s225 + $0x1cf8] sm:$0xff]
        %v1204 = vld [vmem:[%s225 + $0x1d00] sm:$0xff]
        %v1205 = vld [vmem:[%s225 + $0x1d08] sm:$0xff]
        %v1206 = vld [vmem:[%s225 + $0x1d10] sm:$0xff]
        %v1207 = vld [vmem:[%s225 + $0x1d18] sm:$0xff]
        %v1208 = vld [vmem:[%s225 + $0x1d20] sm:$0xff]
        %v1209 = vld [vmem:[%s225 + $0x1d28] sm:$0xff]
        %v1210 = vld [vmem:[%s225 + $0x1d30] sm:$0xff]
        %v1211 = vld [vmem:[%s225 + $0x1d38] sm:$0xff]
        %v1212 = vld [vmem:[%s225 + $0x1d40] sm:$0xff]
        %v1213 = vld [vmem:[%s225 + $0x1d48] sm:$0xff]
        %v1214 = vld [vmem:[%s225 + $0x1d50] sm:$0xff]
        %v1215 = vld [vmem:[%s225 + $0x1d58] sm:$0xff]
        %v1216 = vld [vmem:[%s225 + $0x1d60] sm:$0xff]
        %v1217 = vld [vmem:[%s225 + $0x1d68] sm:$0xff]
        %v1218 = vld [vmem:[%s225 + $0x1d70] sm:$0xff]
        %v1219 = vld [vmem:[%s225 + $0x1d78] sm:$0xff]
        %v1220 = vld [vmem:[%s225 + $0x1d80] sm:$0xff]
        %v1221 = vld [vmem:[%s225 + $0x1d88] sm:$0xff]
        %v1222 = vld [vmem:[%s225 + $0x1d90] sm:$0xff]
        %v1223 = vld [vmem:[%s225 + $0x1d98] sm:$0xff]
        %v1224 = vld [vmem:[%s225 + $0x1da0] sm:$0xff]
        %v1225 = vld [vmem:[%s225 + $0x1da8] sm:$0xff]
        %v1226 = vld [vmem:[%s225 + $0x1db0] sm:$0xff]
        %v1227 = vld [vmem:[%s225 + $0x1db8] sm:$0xff]
        %v1228 = vld [vmem:[%s225 + $0x1dc0] sm:$0xff]
        %v1229 = vld [vmem:[%s225 + $0x1dc8] sm:$0xff]
        %v1230 = vld [vmem:[%s225 + $0x1dd0] sm:$0xff]
        %v1231 = vld [vmem:[%s225 + $0x1dd8] sm:$0xff]
        %v1232 = vld [vmem:[%s225 + $0x1de0] sm:$0xff]
        %v1233 = vld [vmem:[%s225 + $0x1de8] sm:$0xff]
        %v1234 = vld [vmem:[%s225 + $0x1df0] sm:$0xff]
        %v1235 = vld [vmem:[%s225 + $0x1df8] sm:$0xff]
        %v1236 = vld [vmem:[%s225 + $0x1e00] sm:$0xff]
        %v1237 = vld [vmem:[%s225 + $0x1e08] sm:$0xff]
        %v1238 = vld [vmem:[%s225 + $0x1e10] sm:$0xff]
        %v1239 = vld [vmem:[%s225 + $0x1e18] sm:$0xff]
        %v1240 = vld [vmem:[%s225 + $0x1e20] sm:$0xff]
        %v1241 = vld [vmem:[%s225 + $0x1e28] sm:$0xff]
        %v1242 = vld [vmem:[%s225 + $0x1e30] sm:$0xff]
        %v1243 = vld [vmem:[%s225 + $0x1e38] sm:$0xff]
        %v1244 = vld [vmem:[%s225 + $0x1e40] sm:$0xff]
        %v1245 = vld [vmem:[%s225 + $0x1e48] sm:$0xff]
        %v1246 = vld [vmem:[%s225 + $0x1e50] sm:$0xff]
        %v1247 = vld [vmem:[%s225 + $0x1e58] sm:$0xff]
        %v1248 = vld [vmem:[%s225 + $0x1e60] sm:$0xff]
        %v1249 = vld [vmem:[%s225 + $0x1e68] sm:$0xff]
        %v1250 = vld [vmem:[%s225 + $0x1e70] sm:$0xff]
        %v1251 = vld [vmem:[%s225 + $0x1e78] sm:$0xff]
        %v1252 = vld [vmem:[%s225 + $0x1e80] sm:$0xff]
        %v1253 = vld [vmem:[%s225 + $0x1e88] sm:$0xff]
        %v1254 = vld [vmem:[%s225 + $0x1e90] sm:$0xff]
        %v1255 = vld [vmem:[%s225 + $0x1e98] sm:$0xff]
        %v1256 = vld [vmem:[%s225 + $0x1ea0] sm:$0xff]
        %v1257 = vld [vmem:[%s225 + $0x1ea8] sm:$0xff]
        %v1258 = vld [vmem:[%s225 + $0x1eb0] sm:$0xff]
        %v1259 = vld [vmem:[%s225 + $0x1eb8] sm:$0xff]
        %v1260 = vld [vmem:[%s225 + $0x1ec0] sm:$0xff]
        %v1261 = vld [vmem:[%s225 + $0x1ec8] sm:$0xff]
        %v1262 = vld [vmem:[%s225 + $0x1ed0] sm:$0xff]
        %v1263 = vld [vmem:[%s225 + $0x1ed8] sm:$0xff]
        %v1264 = vld [vmem:[%s225 + $0x1ee0] sm:$0xff]
        %v1265 = vld [vmem:[%s225 + $0x1ee8] sm:$0xff]
        %v1266 = vld [vmem:[%s225 + $0x1ef0] sm:$0xff]
        %v1267 = vld [vmem:[%s225 + $0x1ef8] sm:$0xff]
        %v1268 = vld [vmem:[%s225 + $0x1f00] sm:$0xff]
        %v1269 = vld [vmem:[%s225 + $0x1f08] sm:$0xff]
        %v1270 = vld [vmem:[%s225 + $0x1f10] sm:$0xff]
        %v1271 = vld [vmem:[%s225 + $0x1f18] sm:$0xff]
        %v1272 = vld [vmem:[%s225 + $0x1f20] sm:$0xff]
        %v1273 = vld [vmem:[%s225 + $0x1f28] sm:$0xff]
        %v1274 = vld [vmem:[%s225 + $0x1f30] sm:$0xff]
        %v1275 = vld [vmem:[%s225 + $0x1f38] sm:$0xff]
        %v1276 = vld [vmem:[%s225 + $0x1f40] sm:$0xff]
        %v1277 = vld [vmem:[%s225 + $0x1f48] sm:$0xff]
        %v1278 = vld [vmem:[%s225 + $0x1f50] sm:$0xff]
        %v1279 = vld [vmem:[%s225 + $0x1f58] sm:$0xff]
        %v1280 = vld [vmem:[%s225 + $0x1f60] sm:$0xff]
        %v1281 = vld [vmem:[%s225 + $0x1f68] sm:$0xff]
        %v1282 = vld [vmem:[%s225 + $0x1f70] sm:$0xff]
        %v1283 = vld [vmem:[%s225 + $0x1f78] sm:$0xff]
        %v1284 = vld [vmem:[%s225 + $0x1f80] sm:$0xff]
        %v1285 = vld [vmem:[%s225 + $0x1f88] sm:$0xff]
        %v1286 = vld [vmem:[%s225 + $0x1f90] sm:$0xff]
        %v1287 = vld [vmem:[%s225 + $0x1f98] sm:$0xff]
        %v1288 = vld [vmem:[%s225 + $0x1fa0] sm:$0xff]
        %v1289 = vld [vmem:[%s225 + $0x1fa8] sm:$0xff]
        %v1290 = vld [vmem:[%s225 + $0x1fb0] sm:$0xff]
        %v1291 = vld [vmem:[%s225 + $0x1fb8] sm:$0xff]
        %v1292 = vld [vmem:[%s225 + $0x1fc0] sm:$0xff]
        %v1293 = vld [vmem:[%s225 + $0x1fc8] sm:$0xff]
        %v1294 = vld [vmem:[%s225 + $0x1fd0] sm:$0xff]
        %v1295 = vld [vmem:[%s225 + $0x1fd8] sm:$0xff]
        %v1296 = vld [vmem:[%s225 + $0x1fe0] sm:$0xff]
        %v1297 = vld [vmem:[%s225 + $0x1fe8] sm:$0xff]
        %v1298 = vld [vmem:[%s225 + $0x1ff0] sm:$0xff]
        %v1299 = vld [vmem:[%s225 + $0x1ff8] sm:$0xff]
        %v1300 = vmax.f32 %v276, %v278
        %v1301 = vrot.slane %v1300, 4
        %v1302 = vmax.f32 %v1300, %v1301
        %v1303 = vrot.slane %v1302, 2
        %v1304 = vmax.f32 %v1302, %v1303
        %v1305 = vrot.slane %v1304, 1
        %v1306 = vmax.f32 %v1304, %v1305
        %v1307 = vmax.f32 %v277, %v279
        %v1308 = vrot.slane %v1307, 4
        %v1309 = vmax.f32 %v1307, %v1308
        %v1310 = vrot.slane %v1309, 2
        %v1311 = vmax.f32 %v1309, %v1310
        %v1312 = vrot.slane %v1311, 1
        %v1313 = vmax.f32 %v1311, %v1312
        %v1314 = vmax.f32 %v280, %v282
        %v1315 = vrot.slane %v1314, 4
        %v1316 = vmax.f32 %v1314, %v1315
        %v1317 = vrot.slane %v1316, 2
        %v1318 = vmax.f32 %v1316, %v1317
        %v1319 = vrot.slane %v1318, 1
        %v1320 = vmax.f32 %v1318, %v1319
        %v1321 = vmax.f32 %v281, %v283
        %v1322 = vrot.slane %v1321, 4
        %v1323 = vmax.f32 %v1321, %v1322
        %v1324 = vrot.slane %v1323, 2
        %v1325 = vmax.f32 %v1323, %v1324
        %v1326 = vrot.slane %v1325, 1
        %v1327 = vmax.f32 %v1325, %v1326
        %v1328 = vmax.f32 %v284, %v286
        %v1329 = vrot.slane %v1328, 4
        %v1330 = vmax.f32 %v1328, %v1329
        %v1331 = vrot.slane %v1330, 2
        %v1332 = vmax.f32 %v1330, %v1331
        %v1333 = vrot.slane %v1332, 1
        %v1334 = vmax.f32 %v1332, %v1333
        %v1335 = vmax.f32 %v285, %v287
        %v1336 = vrot.slane %v1335, 4
        %v1337 = vmax.f32 %v1335, %v1336
        %v1338 = vrot.slane %v1337, 2
        %v1339 = vmax.f32 %v1337, %v1338
        %v1340 = vrot.slane %v1339, 1
        %v1341 = vmax.f32 %v1339, %v1340
        %v1342 = vmax.f32 %v288, %v290
        %v1343 = vrot.slane %v1342, 4
        %v1344 = vmax.f32 %v1342, %v1343
        %v1345 = vrot.slane %v1344, 2
        %v1346 = vmax.f32 %v1344, %v1345
        %v1347 = vrot.slane %v1346, 1
        %v1348 = vmax.f32 %v1346, %v1347
        %v1349 = vmax.f32 %v289, %v291
        %v1350 = vrot.slane %v1349, 4
        %v1351 = vmax.f32 %v1349, %v1350
        %v1352 = vrot.slane %v1351, 2
        %v1353 = vmax.f32 %v1351, %v1352
        %v1354 = vrot.slane %v1353, 1
        %v1355 = vmax.f32 %v1353, %v1354
        %v1356 = vmax.f32 %v292, %v294
        %v1357 = vrot.slane %v1356, 4
        %v1358 = vmax.f32 %v1356, %v1357
        %v1359 = vrot.slane %v1358, 2
        %v1360 = vmax.f32 %v1358, %v1359
        %v1361 = vrot.slane %v1360, 1
        %v1362 = vmax.f32 %v1360, %v1361
        %v1363 = vmax.f32 %v293, %v295
        %v1364 = vrot.slane %v1363, 4
        %v1365 = vmax.f32 %v1363, %v1364
        %v1366 = vrot.slane %v1365, 2
        %v1367 = vmax.f32 %v1365, %v1366
        %v1368 = vrot.slane %v1367, 1
        %v1369 = vmax.f32 %v1367, %v1368
        %v1370 = vmax.f32 %v296, %v298
        %v1371 = vrot.slane %v1370, 4
        %v1372 = vmax.f32 %v1370, %v1371
        %v1373 = vrot.slane %v1372, 2
        %v1374 = vmax.f32 %v1372, %v1373
        %v1375 = vrot.slane %v1374, 1
        %v1376 = vmax.f32 %v1374, %v1375
        %v1377 = vmax.f32 %v297, %v299
        %v1378 = vrot.slane %v1377, 4
        %v1379 = vmax.f32 %v1377, %v1378
        %v1380 = vrot.slane %v1379, 2
        %v1381 = vmax.f32 %v1379, %v1380
        %v1382 = vrot.slane %v1381, 1
        %v1383 = vmax.f32 %v1381, %v1382
        %v1384 = vmax.f32 %v300, %v302
        %v1385 = vrot.slane %v1384, 4
        %v1386 = vmax.f32 %v1384, %v1385
        %v1387 = vrot.slane %v1386, 2
        %v1388 = vmax.f32 %v1386, %v1387
        %v1389 = vrot.slane %v1388, 1
        %v1390 = vmax.f32 %v1388, %v1389
        %v1391 = vmax.f32 %v301, %v303
        %v1392 = vrot.slane %v1391, 4
        %v1393 = vmax.f32 %v1391, %v1392
        %v1394 = vrot.slane %v1393, 2
        %v1395 = vmax.f32 %v1393, %v1394
        %v1396 = vrot.slane %v1395, 1
        %v1397 = vmax.f32 %v1395, %v1396
        %v1398 = vmax.f32 %v304, %v306
        %v1399 = vrot.slane %v1398, 4
        %v1400 = vmax.f32 %v1398, %v1399
        %v1401 = vrot.slane %v1400, 2
        %v1402 = vmax.f32 %v1400, %v1401
        %v1403 = vrot.slane %v1402, 1
        %v1404 = vmax.f32 %v1402, %v1403
        %v1405 = vmax.f32 %v305, %v307
        %v1406 = vrot.slane %v1405, 4
        %v1407 = vmax.f32 %v1405, %v1406
        %v1408 = vrot.slane %v1407, 2
        %v1409 = vmax.f32 %v1407, %v1408
        %v1410 = vrot.slane %v1409, 1
        %v1411 = vmax.f32 %v1409, %v1410
        %v1412 = vmax.f32 %v308, %v310
        %v1413 = vrot.slane %v1412, 4
        %v1414 = vmax.f32 %v1412, %v1413
        %v1415 = vrot.slane %v1414, 2
        %v1416 = vmax.f32 %v1414, %v1415
        %v1417 = vrot.slane %v1416, 1
        %v1418 = vmax.f32 %v1416, %v1417
        %v1419 = vmax.f32 %v309, %v311
        %v1420 = vrot.slane %v1419, 4
        %v1421 = vmax.f32 %v1419, %v1420
        %v1422 = vrot.slane %v1421, 2
        %v1423 = vmax.f32 %v1421, %v1422
        %v1424 = vrot.slane %v1423, 1
        %v1425 = vmax.f32 %v1423, %v1424
        %v1426 = vmax.f32 %v312, %v314
        %v1427 = vrot.slane %v1426, 4
        %v1428 = vmax.f32 %v1426, %v1427
        %v1429 = vrot.slane %v1428, 2
        %v1430 = vmax.f32 %v1428, %v1429
        %v1431 = vrot.slane %v1430, 1
        %v1432 = vmax.f32 %v1430, %v1431
        %v1433 = vmax.f32 %v313, %v315
        %v1434 = vrot.slane %v1433, 4
        %v1435 = vmax.f32 %v1433, %v1434
        %v1436 = vrot.slane %v1435, 2
        %v1437 = vmax.f32 %v1435, %v1436
        %v1438 = vrot.slane %v1437, 1
        %v1439 = vmax.f32 %v1437, %v1438
        %v1440 = vmax.f32 %v316, %v318
        %v1441 = vrot.slane %v1440, 4
        %v1442 = vmax.f32 %v1440, %v1441
        %v1443 = vrot.slane %v1442, 2
        %v1444 = vmax.f32 %v1442, %v1443
        %v1445 = vrot.slane %v1444, 1
        %v1446 = vmax.f32 %v1444, %v1445
        %v1447 = vmax.f32 %v317, %v319
        %v1448 = vrot.slane %v1447, 4
        %v1449 = vmax.f32 %v1447, %v1448
        %v1450 = vrot.slane %v1449, 2
        %v1451 = vmax.f32 %v1449, %v1450
        %v1452 = vrot.slane %v1451, 1
        %v1453 = vmax.f32 %v1451, %v1452
        %v1454 = vmax.f32 %v320, %v322
        %v1455 = vrot.slane %v1454, 4
        %v1456 = vmax.f32 %v1454, %v1455
        %v1457 = vrot.slane %v1456, 2
        %v1458 = vmax.f32 %v1456, %v1457
        %v1459 = vrot.slane %v1458, 1
        %v1460 = vmax.f32 %v1458, %v1459
        %v1461 = vmax.f32 %v321, %v323
        %v1462 = vrot.slane %v1461, 4
        %v1463 = vmax.f32 %v1461, %v1462
        %v1464 = vrot.slane %v1463, 2
        %v1465 = vmax.f32 %v1463, %v1464
        %v1466 = vrot.slane %v1465, 1
        %v1467 = vmax.f32 %v1465, %v1466
        %v1468 = vmax.f32 %v324, %v326
        %v1469 = vrot.slane %v1468, 4
        %v1470 = vmax.f32 %v1468, %v1469
        %v1471 = vrot.slane %v1470, 2
        %v1472 = vmax.f32 %v1470, %v1471
        %v1473 = vrot.slane %v1472, 1
        %v1474 = vmax.f32 %v1472, %v1473
        %v1475 = vmax.f32 %v325, %v327
        %v1476 = vrot.slane %v1475, 4
        %v1477 = vmax.f32 %v1475, %v1476
        %v1478 = vrot.slane %v1477, 2
        %v1479 = vmax.f32 %v1477, %v1478
        %v1480 = vrot.slane %v1479, 1
        %v1481 = vmax.f32 %v1479, %v1480
        %v1482 = vmax.f32 %v328, %v330
        %v1483 = vrot.slane %v1482, 4
        %v1484 = vmax.f32 %v1482, %v1483
        %v1485 = vrot.slane %v1484, 2
        %v1486 = vmax.f32 %v1484, %v1485
        %v1487 = vrot.slane %v1486, 1
        %v1488 = vmax.f32 %v1486, %v1487
        %v1489 = vmax.f32 %v329, %v331
        %v1490 = vrot.slane %v1489, 4
        %v1491 = vmax.f32 %v1489, %v1490
        %v1492 = vrot.slane %v1491, 2
        %v1493 = vmax.f32 %v1491, %v1492
        %v1494 = vrot.slane %v1493, 1
        %v1495 = vmax.f32 %v1493, %v1494
        %v1496 = vmax.f32 %v332, %v334
        %v1497 = vrot.slane %v1496, 4
        %v1498 = vmax.f32 %v1496, %v1497
        %v1499 = vrot.slane %v1498, 2
        %v1500 = vmax.f32 %v1498, %v1499
        %v1501 = vrot.slane %v1500, 1
        %v1502 = vmax.f32 %v1500, %v1501
        %v1503 = vmax.f32 %v333, %v335
        %v1504 = vrot.slane %v1503, 4
        %v1505 = vmax.f32 %v1503, %v1504
        %v1506 = vrot.slane %v1505, 2
        %v1507 = vmax.f32 %v1505, %v1506
        %v1508 = vrot.slane %v1507, 1
        %v1509 = vmax.f32 %v1507, %v1508
        %v1510 = vmax.f32 %v336, %v338
        %v1511 = vrot.slane %v1510, 4
        %v1512 = vmax.f32 %v1510, %v1511
        %v1513 = vrot.slane %v1512, 2
        %v1514 = vmax.f32 %v1512, %v1513
        %v1515 = vrot.slane %v1514, 1
        %v1516 = vmax.f32 %v1514, %v1515
        %v1517 = vmax.f32 %v337, %v339
        %v1518 = vrot.slane %v1517, 4
        %v1519 = vmax.f32 %v1517, %v1518
        %v1520 = vrot.slane %v1519, 2
        %v1521 = vmax.f32 %v1519, %v1520
        %v1522 = vrot.slane %v1521, 1
        %v1523 = vmax.f32 %v1521, %v1522
        %v1524 = vmax.f32 %v340, %v342
        %v1525 = vrot.slane %v1524, 4
        %v1526 = vmax.f32 %v1524, %v1525
        %v1527 = vrot.slane %v1526, 2
        %v1528 = vmax.f32 %v1526, %v1527
        %v1529 = vrot.slane %v1528, 1
        %v1530 = vmax.f32 %v1528, %v1529
        %v1531 = vmax.f32 %v341, %v343
        %v1532 = vrot.slane %v1531, 4
        %v1533 = vmax.f32 %v1531, %v1532
        %v1534 = vrot.slane %v1533, 2
        %v1535 = vmax.f32 %v1533, %v1534
        %v1536 = vrot.slane %v1535, 1
        %v1537 = vmax.f32 %v1535, %v1536
        %v1538 = vmax.f32 %v344, %v346
        %v1539 = vrot.slane %v1538, 4
        %v1540 = vmax.f32 %v1538, %v1539
        %v1541 = vrot.slane %v1540, 2
        %v1542 = vmax.f32 %v1540, %v1541
        %v1543 = vrot.slane %v1542, 1
        %v1544 = vmax.f32 %v1542, %v1543
        %v1545 = vmax.f32 %v345, %v347
        %v1546 = vrot.slane %v1545, 4
        %v1547 = vmax.f32 %v1545, %v1546
        %v1548 = vrot.slane %v1547, 2
        %v1549 = vmax.f32 %v1547, %v1548
        %v1550 = vrot.slane %v1549, 1
        %v1551 = vmax.f32 %v1549, %v1550
        %v1552 = vmax.f32 %v348, %v350
        %v1553 = vrot.slane %v1552, 4
        %v1554 = vmax.f32 %v1552, %v1553
        %v1555 = vrot.slane %v1554, 2
        %v1556 = vmax.f32 %v1554, %v1555
        %v1557 = vrot.slane %v1556, 1
        %v1558 = vmax.f32 %v1556, %v1557
        %v1559 = vmax.f32 %v349, %v351
        %v1560 = vrot.slane %v1559, 4
        %v1561 = vmax.f32 %v1559, %v1560
        %v1562 = vrot.slane %v1561, 2
        %v1563 = vmax.f32 %v1561, %v1562
        %v1564 = vrot.slane %v1563, 1
        %v1565 = vmax.f32 %v1563, %v1564
        %v1566 = vmax.f32 %v352, %v354
        %v1567 = vrot.slane %v1566, 4
        %v1568 = vmax.f32 %v1566, %v1567
        %v1569 = vrot.slane %v1568, 2
        %v1570 = vmax.f32 %v1568, %v1569
        %v1571 = vrot.slane %v1570, 1
        %v1572 = vmax.f32 %v1570, %v1571
        %v1573 = vmax.f32 %v353, %v355
        %v1574 = vrot.slane %v1573, 4
        %v1575 = vmax.f32 %v1573, %v1574
        %v1576 = vrot.slane %v1575, 2
        %v1577 = vmax.f32 %v1575, %v1576
        %v1578 = vrot.slane %v1577, 1
        %v1579 = vmax.f32 %v1577, %v1578
        %v1580 = vmax.f32 %v356, %v358
        %v1581 = vrot.slane %v1580, 4
        %v1582 = vmax.f32 %v1580, %v1581
        %v1583 = vrot.slane %v1582, 2
        %v1584 = vmax.f32 %v1582, %v1583
        %v1585 = vrot.slane %v1584, 1
        %v1586 = vmax.f32 %v1584, %v1585
        %v1587 = vmax.f32 %v357, %v359
        %v1588 = vrot.slane %v1587, 4
        %v1589 = vmax.f32 %v1587, %v1588
        %v1590 = vrot.slane %v1589, 2
        %v1591 = vmax.f32 %v1589, %v1590
        %v1592 = vrot.slane %v1591, 1
        %v1593 = vmax.f32 %v1591, %v1592
        %v1594 = vmax.f32 %v360, %v362
        %v1595 = vrot.slane %v1594, 4
        %v1596 = vmax.f32 %v1594, %v1595
        %v1597 = vrot.slane %v1596, 2
        %v1598 = vmax.f32 %v1596, %v1597
        %v1599 = vrot.slane %v1598, 1
        %v1600 = vmax.f32 %v1598, %v1599
        %v1601 = vmax.f32 %v361, %v363
        %v1602 = vrot.slane %v1601, 4
        %v1603 = vmax.f32 %v1601, %v1602
        %v1604 = vrot.slane %v1603, 2
        %v1605 = vmax.f32 %v1603, %v1604
        %v1606 = vrot.slane %v1605, 1
        %v1607 = vmax.f32 %v1605, %v1606
        %v1608 = vmax.f32 %v364, %v366
        %v1609 = vrot.slane %v1608, 4
        %v1610 = vmax.f32 %v1608, %v1609
        %v1611 = vrot.slane %v1610, 2
        %v1612 = vmax.f32 %v1610, %v1611
        %v1613 = vrot.slane %v1612, 1
        %v1614 = vmax.f32 %v1612, %v1613
        %v1615 = vmax.f32 %v365, %v367
        %v1616 = vrot.slane %v1615, 4
        %v1617 = vmax.f32 %v1615, %v1616
        %v1618 = vrot.slane %v1617, 2
        %v1619 = vmax.f32 %v1617, %v1618
        %v1620 = vrot.slane %v1619, 1
        %v1621 = vmax.f32 %v1619, %v1620
        %v1622 = vmax.f32 %v368, %v370
        %v1623 = vrot.slane %v1622, 4
        %v1624 = vmax.f32 %v1622, %v1623
        %v1625 = vrot.slane %v1624, 2
        %v1626 = vmax.f32 %v1624, %v1625
        %v1627 = vrot.slane %v1626, 1
        %v1628 = vmax.f32 %v1626, %v1627
        %v1629 = vmax.f32 %v369, %v371
        %v1630 = vrot.slane %v1629, 4
        %v1631 = vmax.f32 %v1629, %v1630
        %v1632 = vrot.slane %v1631, 2
        %v1633 = vmax.f32 %v1631, %v1632
        %v1634 = vrot.slane %v1633, 1
        %v1635 = vmax.f32 %v1633, %v1634
        %v1636 = vmax.f32 %v372, %v374
        %v1637 = vrot.slane %v1636, 4
        %v1638 = vmax.f32 %v1636, %v1637
        %v1639 = vrot.slane %v1638, 2
        %v1640 = vmax.f32 %v1638, %v1639
        %v1641 = vrot.slane %v1640, 1
        %v1642 = vmax.f32 %v1640, %v1641
        %v1643 = vmax.f32 %v373, %v375
        %v1644 = vrot.slane %v1643, 4
        %v1645 = vmax.f32 %v1643, %v1644
        %v1646 = vrot.slane %v1645, 2
        %v1647 = vmax.f32 %v1645, %v1646
        %v1648 = vrot.slane %v1647, 1
        %v1649 = vmax.f32 %v1647, %v1648
        %v1650 = vmax.f32 %v376, %v378
        %v1651 = vrot.slane %v1650, 4
        %v1652 = vmax.f32 %v1650, %v1651
        %v1653 = vrot.slane %v1652, 2
        %v1654 = vmax.f32 %v1652, %v1653
        %v1655 = vrot.slane %v1654, 1
        %v1656 = vmax.f32 %v1654, %v1655
        %v1657 = vmax.f32 %v377, %v379
        %v1658 = vrot.slane %v1657, 4
        %v1659 = vmax.f32 %v1657, %v1658
        %v1660 = vrot.slane %v1659, 2
        %v1661 = vmax.f32 %v1659, %v1660
        %v1662 = vrot.slane %v1661, 1
        %v1663 = vmax.f32 %v1661, %v1662
        %v1664 = vmax.f32 %v380, %v382
        %v1665 = vrot.slane %v1664, 4
        %v1666 = vmax.f32 %v1664, %v1665
        %v1667 = vrot.slane %v1666, 2
        %v1668 = vmax.f32 %v1666, %v1667
        %v1669 = vrot.slane %v1668, 1
        %v1670 = vmax.f32 %v1668, %v1669
        %v1671 = vmax.f32 %v381, %v383
        %v1672 = vrot.slane %v1671, 4
        %v1673 = vmax.f32 %v1671, %v1672
        %v1674 = vrot.slane %v1673, 2
        %v1675 = vmax.f32 %v1673, %v1674
        %v1676 = vrot.slane %v1675, 1
        %v1677 = vmax.f32 %v1675, %v1676
        %v1678 = vmax.f32 %v384, %v386
        %v1679 = vrot.slane %v1678, 4
        %v1680 = vmax.f32 %v1678, %v1679
        %v1681 = vrot.slane %v1680, 2
        %v1682 = vmax.f32 %v1680, %v1681
        %v1683 = vrot.slane %v1682, 1
        %v1684 = vmax.f32 %v1682, %v1683
        %v1685 = vmax.f32 %v385, %v387
        %v1686 = vrot.slane %v1685, 4
        %v1687 = vmax.f32 %v1685, %v1686
        %v1688 = vrot.slane %v1687, 2
        %v1689 = vmax.f32 %v1687, %v1688
        %v1690 = vrot.slane %v1689, 1
        %v1691 = vmax.f32 %v1689, %v1690
        %v1692 = vmax.f32 %v388, %v390
        %v1693 = vrot.slane %v1692, 4
        %v1694 = vmax.f32 %v1692, %v1693
        %v1695 = vrot.slane %v1694, 2
        %v1696 = vmax.f32 %v1694, %v1695
        %v1697 = vrot.slane %v1696, 1
        %v1698 = vmax.f32 %v1696, %v1697
        %v1699 = vmax.f32 %v389, %v391
        %v1700 = vrot.slane %v1699, 4
        %v1701 = vmax.f32 %v1699, %v1700
        %v1702 = vrot.slane %v1701, 2
        %v1703 = vmax.f32 %v1701, %v1702
        %v1704 = vrot.slane %v1703, 1
        %v1705 = vmax.f32 %v1703, %v1704
        %v1706 = vmax.f32 %v392, %v394
        %v1707 = vrot.slane %v1706, 4
        %v1708 = vmax.f32 %v1706, %v1707
        %v1709 = vrot.slane %v1708, 2
        %v1710 = vmax.f32 %v1708, %v1709
        %v1711 = vrot.slane %v1710, 1
        %v1712 = vmax.f32 %v1710, %v1711
        %v1713 = vmax.f32 %v393, %v395
        %v1714 = vrot.slane %v1713, 4
        %v1715 = vmax.f32 %v1713, %v1714
        %v1716 = vrot.slane %v1715, 2
        %v1717 = vmax.f32 %v1715, %v1716
        %v1718 = vrot.slane %v1717, 1
        %v1719 = vmax.f32 %v1717, %v1718
        %v1720 = vmax.f32 %v396, %v398
        %v1721 = vrot.slane %v1720, 4
        %v1722 = vmax.f32 %v1720, %v1721
        %v1723 = vrot.slane %v1722, 2
        %v1724 = vmax.f32 %v1722, %v1723
        %v1725 = vrot.slane %v1724, 1
        %v1726 = vmax.f32 %v1724, %v1725
        %v1727 = vmax.f32 %v397, %v399
        %v1728 = vrot.slane %v1727, 4
        %v1729 = vmax.f32 %v1727, %v1728
        %v1730 = vrot.slane %v1729, 2
        %v1731 = vmax.f32 %v1729, %v1730
        %v1732 = vrot.slane %v1731, 1
        %v1733 = vmax.f32 %v1731, %v1732
        %v1734 = vmax.f32 %v400, %v402
        %v1735 = vrot.slane %v1734, 4
        %v1736 = vmax.f32 %v1734, %v1735
        %v1737 = vrot.slane %v1736, 2
        %v1738 = vmax.f32 %v1736, %v1737
        %v1739 = vrot.slane %v1738, 1
        %v1740 = vmax.f32 %v1738, %v1739
        %v1741 = vmax.f32 %v401, %v403
        %v1742 = vrot.slane %v1741, 4
        %v1743 = vmax.f32 %v1741, %v1742
        %v1744 = vrot.slane %v1743, 2
        %v1745 = vmax.f32 %v1743, %v1744
        %v1746 = vrot.slane %v1745, 1
        %v1747 = vmax.f32 %v1745, %v1746
        %v1748 = vmax.f32 %v404, %v406
        %v1749 = vrot.slane %v1748, 4
        %v1750 = vmax.f32 %v1748, %v1749
        %v1751 = vrot.slane %v1750, 2
        %v1752 = vmax.f32 %v1750, %v1751
        %v1753 = vrot.slane %v1752, 1
        %v1754 = vmax.f32 %v1752, %v1753
        %v1755 = vmax.f32 %v405, %v407
        %v1756 = vrot.slane %v1755, 4
        %v1757 = vmax.f32 %v1755, %v1756
        %v1758 = vrot.slane %v1757, 2
        %v1759 = vmax.f32 %v1757, %v1758
        %v1760 = vrot.slane %v1759, 1
        %v1761 = vmax.f32 %v1759, %v1760
        %v1762 = vmax.f32 %v408, %v410
        %v1763 = vrot.slane %v1762, 4
        %v1764 = vmax.f32 %v1762, %v1763
        %v1765 = vrot.slane %v1764, 2
        %v1766 = vmax.f32 %v1764, %v1765
        %v1767 = vrot.slane %v1766, 1
        %v1768 = vmax.f32 %v1766, %v1767
        %v1769 = vmax.f32 %v409, %v411
        %v1770 = vrot.slane %v1769, 4
        %v1771 = vmax.f32 %v1769, %v1770
        %v1772 = vrot.slane %v1771, 2
        %v1773 = vmax.f32 %v1771, %v1772
        %v1774 = vrot.slane %v1773, 1
        %v1775 = vmax.f32 %v1773, %v1774
        %v1776 = vmax.f32 %v412, %v414
        %v1777 = vrot.slane %v1776, 4
        %v1778 = vmax.f32 %v1776, %v1777
        %v1779 = vrot.slane %v1778, 2
        %v1780 = vmax.f32 %v1778, %v1779
        %v1781 = vrot.slane %v1780, 1
        %v1782 = vmax.f32 %v1780, %v1781
        %v1783 = vmax.f32 %v413, %v415
        %v1784 = vrot.slane %v1783, 4
        %v1785 = vmax.f32 %v1783, %v1784
        %v1786 = vrot.slane %v1785, 2
        %v1787 = vmax.f32 %v1785, %v1786
        %v1788 = vrot.slane %v1787, 1
        %v1789 = vmax.f32 %v1787, %v1788
        %v1790 = vmax.f32 %v416, %v418
        %v1791 = vrot.slane %v1790, 4
        %v1792 = vmax.f32 %v1790, %v1791
        %v1793 = vrot.slane %v1792, 2
        %v1794 = vmax.f32 %v1792, %v1793
        %v1795 = vrot.slane %v1794, 1
        %v1796 = vmax.f32 %v1794, %v1795
        %v1797 = vmax.f32 %v417, %v419
        %v1798 = vrot.slane %v1797, 4
        %v1799 = vmax.f32 %v1797, %v1798
        %v1800 = vrot.slane %v1799, 2
        %v1801 = vmax.f32 %v1799, %v1800
        %v1802 = vrot.slane %v1801, 1
        %v1803 = vmax.f32 %v1801, %v1802
        %v1804 = vmax.f32 %v420, %v422
        %v1805 = vrot.slane %v1804, 4
        %v1806 = vmax.f32 %v1804, %v1805
        %v1807 = vrot.slane %v1806, 2
        %v1808 = vmax.f32 %v1806, %v1807
        %v1809 = vrot.slane %v1808, 1
        %v1810 = vmax.f32 %v1808, %v1809
        %v1811 = vmax.f32 %v421, %v423
        %v1812 = vrot.slane %v1811, 4
        %v1813 = vmax.f32 %v1811, %v1812
        %v1814 = vrot.slane %v1813, 2
        %v1815 = vmax.f32 %v1813, %v1814
        %v1816 = vrot.slane %v1815, 1
        %v1817 = vmax.f32 %v1815, %v1816
        %v1818 = vmax.f32 %v424, %v426
        %v1819 = vrot.slane %v1818, 4
        %v1820 = vmax.f32 %v1818, %v1819
        %v1821 = vrot.slane %v1820, 2
        %v1822 = vmax.f32 %v1820, %v1821
        %v1823 = vrot.slane %v1822, 1
        %v1824 = vmax.f32 %v1822, %v1823
        %v1825 = vmax.f32 %v425, %v427
        %v1826 = vrot.slane %v1825, 4
        %v1827 = vmax.f32 %v1825, %v1826
        %v1828 = vrot.slane %v1827, 2
        %v1829 = vmax.f32 %v1827, %v1828
        %v1830 = vrot.slane %v1829, 1
        %v1831 = vmax.f32 %v1829, %v1830
        %v1832 = vmax.f32 %v428, %v430
        %v1833 = vrot.slane %v1832, 4
        %v1834 = vmax.f32 %v1832, %v1833
        %v1835 = vrot.slane %v1834, 2
        %v1836 = vmax.f32 %v1834, %v1835
        %v1837 = vrot.slane %v1836, 1
        %v1838 = vmax.f32 %v1836, %v1837
        %v1839 = vmax.f32 %v429, %v431
        %v1840 = vrot.slane %v1839, 4
        %v1841 = vmax.f32 %v1839, %v1840
        %v1842 = vrot.slane %v1841, 2
        %v1843 = vmax.f32 %v1841, %v1842
        %v1844 = vrot.slane %v1843, 1
        %v1845 = vmax.f32 %v1843, %v1844
        %v1846 = vmax.f32 %v432, %v434
        %v1847 = vrot.slane %v1846, 4
        %v1848 = vmax.f32 %v1846, %v1847
        %v1849 = vrot.slane %v1848, 2
        %v1850 = vmax.f32 %v1848, %v1849
        %v1851 = vrot.slane %v1850, 1
        %v1852 = vmax.f32 %v1850, %v1851
        %v1853 = vmax.f32 %v433, %v435
        %v1854 = vrot.slane %v1853, 4
        %v1855 = vmax.f32 %v1853, %v1854
        %v1856 = vrot.slane %v1855, 2
        %v1857 = vmax.f32 %v1855, %v1856
        %v1858 = vrot.slane %v1857, 1
        %v1859 = vmax.f32 %v1857, %v1858
        %v1860 = vmax.f32 %v436, %v438
        %v1861 = vrot.slane %v1860, 4
        %v1862 = vmax.f32 %v1860, %v1861
        %v1863 = vrot.slane %v1862, 2
        %v1864 = vmax.f32 %v1862, %v1863
        %v1865 = vrot.slane %v1864, 1
        %v1866 = vmax.f32 %v1864, %v1865
        %v1867 = vmax.f32 %v437, %v439
        %v1868 = vrot.slane %v1867, 4
        %v1869 = vmax.f32 %v1867, %v1868
        %v1870 = vrot.slane %v1869, 2
        %v1871 = vmax.f32 %v1869, %v1870
        %v1872 = vrot.slane %v1871, 1
        %v1873 = vmax.f32 %v1871, %v1872
        %v1874 = vmax.f32 %v440, %v442
        %v1875 = vrot.slane %v1874, 4
        %v1876 = vmax.f32 %v1874, %v1875
        %v1877 = vrot.slane %v1876, 2
        %v1878 = vmax.f32 %v1876, %v1877
        %v1879 = vrot.slane %v1878, 1
        %v1880 = vmax.f32 %v1878, %v1879
        %v1881 = vmax.f32 %v441, %v443
        %v1882 = vrot.slane %v1881, 4
        %v1883 = vmax.f32 %v1881, %v1882
        %v1884 = vrot.slane %v1883, 2
        %v1885 = vmax.f32 %v1883, %v1884
        %v1886 = vrot.slane %v1885, 1
        %v1887 = vmax.f32 %v1885, %v1886
        %v1888 = vmax.f32 %v444, %v446
        %v1889 = vrot.slane %v1888, 4
        %v1890 = vmax.f32 %v1888, %v1889
        %v1891 = vrot.slane %v1890, 2
        %v1892 = vmax.f32 %v1890, %v1891
        %v1893 = vrot.slane %v1892, 1
        %v1894 = vmax.f32 %v1892, %v1893
        %v1895 = vmax.f32 %v445, %v447
        %v1896 = vrot.slane %v1895, 4
        %v1897 = vmax.f32 %v1895, %v1896
        %v1898 = vrot.slane %v1897, 2
        %v1899 = vmax.f32 %v1897, %v1898
        %v1900 = vrot.slane %v1899, 1
        %v1901 = vmax.f32 %v1899, %v1900
        %v1902 = vmax.f32 %v448, %v450
        %v1903 = vrot.slane %v1902, 4
        %v1904 = vmax.f32 %v1902, %v1903
        %v1905 = vrot.slane %v1904, 2
        %v1906 = vmax.f32 %v1904, %v1905
        %v1907 = vrot.slane %v1906, 1
        %v1908 = vmax.f32 %v1906, %v1907
        %v1909 = vmax.f32 %v449, %v451
        %v1910 = vrot.slane %v1909, 4
        %v1911 = vmax.f32 %v1909, %v1910
        %v1912 = vrot.slane %v1911, 2
        %v1913 = vmax.f32 %v1911, %v1912
        %v1914 = vrot.slane %v1913, 1
        %v1915 = vmax.f32 %v1913, %v1914
        %v1916 = vmax.f32 %v452, %v454
        %v1917 = vrot.slane %v1916, 4
        %v1918 = vmax.f32 %v1916, %v1917
        %v1919 = vrot.slane %v1918, 2
        %v1920 = vmax.f32 %v1918, %v1919
        %v1921 = vrot.slane %v1920, 1
        %v1922 = vmax.f32 %v1920, %v1921
        %v1923 = vmax.f32 %v453, %v455
        %v1924 = vrot.slane %v1923, 4
        %v1925 = vmax.f32 %v1923, %v1924
        %v1926 = vrot.slane %v1925, 2
        %v1927 = vmax.f32 %v1925, %v1926
        %v1928 = vrot.slane %v1927, 1
        %v1929 = vmax.f32 %v1927, %v1928
        %v1930 = vmax.f32 %v456, %v458
        %v1931 = vrot.slane %v1930, 4
        %v1932 = vmax.f32 %v1930, %v1931
        %v1933 = vrot.slane %v1932, 2
        %v1934 = vmax.f32 %v1932, %v1933
        %v1935 = vrot.slane %v1934, 1
        %v1936 = vmax.f32 %v1934, %v1935
        %v1937 = vmax.f32 %v457, %v459
        %v1938 = vrot.slane %v1937, 4
        %v1939 = vmax.f32 %v1937, %v1938
        %v1940 = vrot.slane %v1939, 2
        %v1941 = vmax.f32 %v1939, %v1940
        %v1942 = vrot.slane %v1941, 1
        %v1943 = vmax.f32 %v1941, %v1942
        %v1944 = vmax.f32 %v460, %v462
        %v1945 = vrot.slane %v1944, 4
        %v1946 = vmax.f32 %v1944, %v1945
        %v1947 = vrot.slane %v1946, 2
        %v1948 = vmax.f32 %v1946, %v1947
        %v1949 = vrot.slane %v1948, 1
        %v1950 = vmax.f32 %v1948, %v1949
        %v1951 = vmax.f32 %v461, %v463
        %v1952 = vrot.slane %v1951, 4
        %v1953 = vmax.f32 %v1951, %v1952
        %v1954 = vrot.slane %v1953, 2
        %v1955 = vmax.f32 %v1953, %v1954
        %v1956 = vrot.slane %v1955, 1
        %v1957 = vmax.f32 %v1955, %v1956
        %v1958 = vmax.f32 %v464, %v466
        %v1959 = vrot.slane %v1958, 4
        %v1960 = vmax.f32 %v1958, %v1959
        %v1961 = vrot.slane %v1960, 2
        %v1962 = vmax.f32 %v1960, %v1961
        %v1963 = vrot.slane %v1962, 1
        %v1964 = vmax.f32 %v1962, %v1963
        %v1965 = vmax.f32 %v465, %v467
        %v1966 = vrot.slane %v1965, 4
        %v1967 = vmax.f32 %v1965, %v1966
        %v1968 = vrot.slane %v1967, 2
        %v1969 = vmax.f32 %v1967, %v1968
        %v1970 = vrot.slane %v1969, 1
        %v1971 = vmax.f32 %v1969, %v1970
        %v1972 = vmax.f32 %v468, %v470
        %v1973 = vrot.slane %v1972, 4
        %v1974 = vmax.f32 %v1972, %v1973
        %v1975 = vrot.slane %v1974, 2
        %v1976 = vmax.f32 %v1974, %v1975
        %v1977 = vrot.slane %v1976, 1
        %v1978 = vmax.f32 %v1976, %v1977
        %v1979 = vmax.f32 %v469, %v471
        %v1980 = vrot.slane %v1979, 4
        %v1981 = vmax.f32 %v1979, %v1980
        %v1982 = vrot.slane %v1981, 2
        %v1983 = vmax.f32 %v1981, %v1982
        %v1984 = vrot.slane %v1983, 1
        %v1985 = vmax.f32 %v1983, %v1984
        %v1986 = vmax.f32 %v472, %v474
        %v1987 = vrot.slane %v1986, 4
        %v1988 = vmax.f32 %v1986, %v1987
        %v1989 = vrot.slane %v1988, 2
        %v1990 = vmax.f32 %v1988, %v1989
        %v1991 = vrot.slane %v1990, 1
        %v1992 = vmax.f32 %v1990, %v1991
        %v1993 = vmax.f32 %v473, %v475
        %v1994 = vrot.slane %v1993, 4
        %v1995 = vmax.f32 %v1993, %v1994
        %v1996 = vrot.slane %v1995, 2
        %v1997 = vmax.f32 %v1995, %v1996
        %v1998 = vrot.slane %v1997, 1
        %v1999 = vmax.f32 %v1997, %v1998
        %v2000 = vmax.f32 %v476, %v478
        %v2001 = vrot.slane %v2000, 4
        %v2002 = vmax.f32 %v2000, %v2001
        %v2003 = vrot.slane %v2002, 2
        %v2004 = vmax.f32 %v2002, %v2003
        %v2005 = vrot.slane %v2004, 1
        %v2006 = vmax.f32 %v2004, %v2005
        %v2007 = vmax.f32 %v477, %v479
        %v2008 = vrot.slane %v2007, 4
        %v2009 = vmax.f32 %v2007, %v2008
        %v2010 = vrot.slane %v2009, 2
        %v2011 = vmax.f32 %v2009, %v2010
        %v2012 = vrot.slane %v2011, 1
        %v2013 = vmax.f32 %v2011, %v2012
        %v2014 = vmax.f32 %v480, %v482
        %v2015 = vrot.slane %v2014, 4
        %v2016 = vmax.f32 %v2014, %v2015
        %v2017 = vrot.slane %v2016, 2
        %v2018 = vmax.f32 %v2016, %v2017
        %v2019 = vrot.slane %v2018, 1
        %v2020 = vmax.f32 %v2018, %v2019
        %v2021 = vmax.f32 %v481, %v483
        %v2022 = vrot.slane %v2021, 4
        %v2023 = vmax.f32 %v2021, %v2022
        %v2024 = vrot.slane %v2023, 2
        %v2025 = vmax.f32 %v2023, %v2024
        %v2026 = vrot.slane %v2025, 1
        %v2027 = vmax.f32 %v2025, %v2026
        %v2028 = vmax.f32 %v484, %v486
        %v2029 = vrot.slane %v2028, 4
        %v2030 = vmax.f32 %v2028, %v2029
        %v2031 = vrot.slane %v2030, 2
        %v2032 = vmax.f32 %v2030, %v2031
        %v2033 = vrot.slane %v2032, 1
        %v2034 = vmax.f32 %v2032, %v2033
        %v2035 = vmax.f32 %v485, %v487
        %v2036 = vrot.slane %v2035, 4
        %v2037 = vmax.f32 %v2035, %v2036
        %v2038 = vrot.slane %v2037, 2
        %v2039 = vmax.f32 %v2037, %v2038
        %v2040 = vrot.slane %v2039, 1
        %v2041 = vmax.f32 %v2039, %v2040
        %v2042 = vmax.f32 %v488, %v490
        %v2043 = vrot.slane %v2042, 4
        %v2044 = vmax.f32 %v2042, %v2043
        %v2045 = vrot.slane %v2044, 2
        %v2046 = vmax.f32 %v2044, %v2045
        %v2047 = vrot.slane %v2046, 1
        %v2048 = vmax.f32 %v2046, %v2047
        %v2049 = vmax.f32 %v489, %v491
        %v2050 = vrot.slane %v2049, 4
        %v2051 = vmax.f32 %v2049, %v2050
        %v2052 = vrot.slane %v2051, 2
        %v2053 = vmax.f32 %v2051, %v2052
        %v2054 = vrot.slane %v2053, 1
        %v2055 = vmax.f32 %v2053, %v2054
        %v2056 = vmax.f32 %v492, %v494
        %v2057 = vrot.slane %v2056, 4
        %v2058 = vmax.f32 %v2056, %v2057
        %v2059 = vrot.slane %v2058, 2
        %v2060 = vmax.f32 %v2058, %v2059
        %v2061 = vrot.slane %v2060, 1
        %v2062 = vmax.f32 %v2060, %v2061
        %v2063 = vmax.f32 %v493, %v495
        %v2064 = vrot.slane %v2063, 4
        %v2065 = vmax.f32 %v2063, %v2064
        %v2066 = vrot.slane %v2065, 2
        %v2067 = vmax.f32 %v2065, %v2066
        %v2068 = vrot.slane %v2067, 1
        %v2069 = vmax.f32 %v2067, %v2068
        %v2070 = vmax.f32 %v496, %v498
        %v2071 = vrot.slane %v2070, 4
        %v2072 = vmax.f32 %v2070, %v2071
        %v2073 = vrot.slane %v2072, 2
        %v2074 = vmax.f32 %v2072, %v2073
        %v2075 = vrot.slane %v2074, 1
        %v2076 = vmax.f32 %v2074, %v2075
        %v2077 = vmax.f32 %v497, %v499
        %v2078 = vrot.slane %v2077, 4
        %v2079 = vmax.f32 %v2077, %v2078
        %v2080 = vrot.slane %v2079, 2
        %v2081 = vmax.f32 %v2079, %v2080
        %v2082 = vrot.slane %v2081, 1
        %v2083 = vmax.f32 %v2081, %v2082
        %v2084 = vmax.f32 %v500, %v502
        %v2085 = vrot.slane %v2084, 4
        %v2086 = vmax.f32 %v2084, %v2085
        %v2087 = vrot.slane %v2086, 2
        %v2088 = vmax.f32 %v2086, %v2087
        %v2089 = vrot.slane %v2088, 1
        %v2090 = vmax.f32 %v2088, %v2089
        %v2091 = vmax.f32 %v501, %v503
        %v2092 = vrot.slane %v2091, 4
        %v2093 = vmax.f32 %v2091, %v2092
        %v2094 = vrot.slane %v2093, 2
        %v2095 = vmax.f32 %v2093, %v2094
        %v2096 = vrot.slane %v2095, 1
        %v2097 = vmax.f32 %v2095, %v2096
        %v2098 = vmax.f32 %v504, %v506
        %v2099 = vrot.slane %v2098, 4
        %v2100 = vmax.f32 %v2098, %v2099
        %v2101 = vrot.slane %v2100, 2
        %v2102 = vmax.f32 %v2100, %v2101
        %v2103 = vrot.slane %v2102, 1
        %v2104 = vmax.f32 %v2102, %v2103
        %v2105 = vmax.f32 %v505, %v507
        %v2106 = vrot.slane %v2105, 4
        %v2107 = vmax.f32 %v2105, %v2106
        %v2108 = vrot.slane %v2107, 2
        %v2109 = vmax.f32 %v2107, %v2108
        %v2110 = vrot.slane %v2109, 1
        %v2111 = vmax.f32 %v2109, %v2110
        %v2112 = vmax.f32 %v508, %v510
        %v2113 = vrot.slane %v2112, 4
        %v2114 = vmax.f32 %v2112, %v2113
        %v2115 = vrot.slane %v2114, 2
        %v2116 = vmax.f32 %v2114, %v2115
        %v2117 = vrot.slane %v2116, 1
        %v2118 = vmax.f32 %v2116, %v2117
        %v2119 = vmax.f32 %v509, %v511
        %v2120 = vrot.slane %v2119, 4
        %v2121 = vmax.f32 %v2119, %v2120
        %v2122 = vrot.slane %v2121, 2
        %v2123 = vmax.f32 %v2121, %v2122
        %v2124 = vrot.slane %v2123, 1
        %v2125 = vmax.f32 %v2123, %v2124
        %v2126 = vmax.f32 %v512, %v514
        %v2127 = vrot.slane %v2126, 4
        %v2128 = vmax.f32 %v2126, %v2127
        %v2129 = vrot.slane %v2128, 2
        %v2130 = vmax.f32 %v2128, %v2129
        %v2131 = vrot.slane %v2130, 1
        %v2132 = vmax.f32 %v2130, %v2131
        %v2133 = vmax.f32 %v513, %v515
        %v2134 = vrot.slane %v2133, 4
        %v2135 = vmax.f32 %v2133, %v2134
        %v2136 = vrot.slane %v2135, 2
        %v2137 = vmax.f32 %v2135, %v2136
        %v2138 = vrot.slane %v2137, 1
        %v2139 = vmax.f32 %v2137, %v2138
        %v2140 = vmax.f32 %v516, %v518
        %v2141 = vrot.slane %v2140, 4
        %v2142 = vmax.f32 %v2140, %v2141
        %v2143 = vrot.slane %v2142, 2
        %v2144 = vmax.f32 %v2142, %v2143
        %v2145 = vrot.slane %v2144, 1
        %v2146 = vmax.f32 %v2144, %v2145
        %v2147 = vmax.f32 %v517, %v519
        %v2148 = vrot.slane %v2147, 4
        %v2149 = vmax.f32 %v2147, %v2148
        %v2150 = vrot.slane %v2149, 2
        %v2151 = vmax.f32 %v2149, %v2150
        %v2152 = vrot.slane %v2151, 1
        %v2153 = vmax.f32 %v2151, %v2152
        %v2154 = vmax.f32 %v520, %v522
        %v2155 = vrot.slane %v2154, 4
        %v2156 = vmax.f32 %v2154, %v2155
        %v2157 = vrot.slane %v2156, 2
        %v2158 = vmax.f32 %v2156, %v2157
        %v2159 = vrot.slane %v2158, 1
        %v2160 = vmax.f32 %v2158, %v2159
        %v2161 = vmax.f32 %v521, %v523
        %v2162 = vrot.slane %v2161, 4
        %v2163 = vmax.f32 %v2161, %v2162
        %v2164 = vrot.slane %v2163, 2
        %v2165 = vmax.f32 %v2163, %v2164
        %v2166 = vrot.slane %v2165, 1
        %v2167 = vmax.f32 %v2165, %v2166
        %v2168 = vmax.f32 %v524, %v526
        %v2169 = vrot.slane %v2168, 4
        %v2170 = vmax.f32 %v2168, %v2169
        %v2171 = vrot.slane %v2170, 2
        %v2172 = vmax.f32 %v2170, %v2171
        %v2173 = vrot.slane %v2172, 1
        %v2174 = vmax.f32 %v2172, %v2173
        %v2175 = vmax.f32 %v525, %v527
        %v2176 = vrot.slane %v2175, 4
        %v2177 = vmax.f32 %v2175, %v2176
        %v2178 = vrot.slane %v2177, 2
        %v2179 = vmax.f32 %v2177, %v2178
        %v2180 = vrot.slane %v2179, 1
        %v2181 = vmax.f32 %v2179, %v2180
        %v2182 = vmax.f32 %v528, %v530
        %v2183 = vrot.slane %v2182, 4
        %v2184 = vmax.f32 %v2182, %v2183
        %v2185 = vrot.slane %v2184, 2
        %v2186 = vmax.f32 %v2184, %v2185
        %v2187 = vrot.slane %v2186, 1
        %v2188 = vmax.f32 %v2186, %v2187
        %v2189 = vmax.f32 %v529, %v531
        %v2190 = vrot.slane %v2189, 4
        %v2191 = vmax.f32 %v2189, %v2190
        %v2192 = vrot.slane %v2191, 2
        %v2193 = vmax.f32 %v2191, %v2192
        %v2194 = vrot.slane %v2193, 1
        %v2195 = vmax.f32 %v2193, %v2194
        %v2196 = vmax.f32 %v532, %v534
        %v2197 = vrot.slane %v2196, 4
        %v2198 = vmax.f32 %v2196, %v2197
        %v2199 = vrot.slane %v2198, 2
        %v2200 = vmax.f32 %v2198, %v2199
        %v2201 = vrot.slane %v2200, 1
        %v2202 = vmax.f32 %v2200, %v2201
        %v2203 = vmax.f32 %v533, %v535
        %v2204 = vrot.slane %v2203, 4
        %v2205 = vmax.f32 %v2203, %v2204
        %v2206 = vrot.slane %v2205, 2
        %v2207 = vmax.f32 %v2205, %v2206
        %v2208 = vrot.slane %v2207, 1
        %v2209 = vmax.f32 %v2207, %v2208
        %v2210 = vmax.f32 %v536, %v538
        %v2211 = vrot.slane %v2210, 4
        %v2212 = vmax.f32 %v2210, %v2211
        %v2213 = vrot.slane %v2212, 2
        %v2214 = vmax.f32 %v2212, %v2213
        %v2215 = vrot.slane %v2214, 1
        %v2216 = vmax.f32 %v2214, %v2215
        %v2217 = vmax.f32 %v537, %v539
        %v2218 = vrot.slane %v2217, 4
        %v2219 = vmax.f32 %v2217, %v2218
        %v2220 = vrot.slane %v2219, 2
        %v2221 = vmax.f32 %v2219, %v2220
        %v2222 = vrot.slane %v2221, 1
        %v2223 = vmax.f32 %v2221, %v2222
        %v2224 = vmax.f32 %v540, %v542
        %v2225 = vrot.slane %v2224, 4
        %v2226 = vmax.f32 %v2224, %v2225
        %v2227 = vrot.slane %v2226, 2
        %v2228 = vmax.f32 %v2226, %v2227
        %v2229 = vrot.slane %v2228, 1
        %v2230 = vmax.f32 %v2228, %v2229
        %v2231 = vmax.f32 %v541, %v543
        %v2232 = vrot.slane %v2231, 4
        %v2233 = vmax.f32 %v2231, %v2232
        %v2234 = vrot.slane %v2233, 2
        %v2235 = vmax.f32 %v2233, %v2234
        %v2236 = vrot.slane %v2235, 1
        %v2237 = vmax.f32 %v2235, %v2236
        %v2238 = vmax.f32 %v544, %v546
        %v2239 = vrot.slane %v2238, 4
        %v2240 = vmax.f32 %v2238, %v2239
        %v2241 = vrot.slane %v2240, 2
        %v2242 = vmax.f32 %v2240, %v2241
        %v2243 = vrot.slane %v2242, 1
        %v2244 = vmax.f32 %v2242, %v2243
        %v2245 = vmax.f32 %v545, %v547
        %v2246 = vrot.slane %v2245, 4
        %v2247 = vmax.f32 %v2245, %v2246
        %v2248 = vrot.slane %v2247, 2
        %v2249 = vmax.f32 %v2247, %v2248
        %v2250 = vrot.slane %v2249, 1
        %v2251 = vmax.f32 %v2249, %v2250
        %v2252 = vmax.f32 %v548, %v550
        %v2253 = vrot.slane %v2252, 4
        %v2254 = vmax.f32 %v2252, %v2253
        %v2255 = vrot.slane %v2254, 2
        %v2256 = vmax.f32 %v2254, %v2255
        %v2257 = vrot.slane %v2256, 1
        %v2258 = vmax.f32 %v2256, %v2257
        %v2259 = vmax.f32 %v549, %v551
        %v2260 = vrot.slane %v2259, 4
        %v2261 = vmax.f32 %v2259, %v2260
        %v2262 = vrot.slane %v2261, 2
        %v2263 = vmax.f32 %v2261, %v2262
        %v2264 = vrot.slane %v2263, 1
        %v2265 = vmax.f32 %v2263, %v2264
        %v2266 = vmax.f32 %v552, %v554
        %v2267 = vrot.slane %v2266, 4
        %v2268 = vmax.f32 %v2266, %v2267
        %v2269 = vrot.slane %v2268, 2
        %v2270 = vmax.f32 %v2268, %v2269
        %v2271 = vrot.slane %v2270, 1
        %v2272 = vmax.f32 %v2270, %v2271
        %v2273 = vmax.f32 %v553, %v555
        %v2274 = vrot.slane %v2273, 4
        %v2275 = vmax.f32 %v2273, %v2274
        %v2276 = vrot.slane %v2275, 2
        %v2277 = vmax.f32 %v2275, %v2276
        %v2278 = vrot.slane %v2277, 1
        %v2279 = vmax.f32 %v2277, %v2278
        %v2280 = vmax.f32 %v556, %v558
        %v2281 = vrot.slane %v2280, 4
        %v2282 = vmax.f32 %v2280, %v2281
        %v2283 = vrot.slane %v2282, 2
        %v2284 = vmax.f32 %v2282, %v2283
        %v2285 = vrot.slane %v2284, 1
        %v2286 = vmax.f32 %v2284, %v2285
        %v2287 = vmax.f32 %v557, %v559
        %v2288 = vrot.slane %v2287, 4
        %v2289 = vmax.f32 %v2287, %v2288
        %v2290 = vrot.slane %v2289, 2
        %v2291 = vmax.f32 %v2289, %v2290
        %v2292 = vrot.slane %v2291, 1
        %v2293 = vmax.f32 %v2291, %v2292
        %v2294 = vmax.f32 %v560, %v562
        %v2295 = vrot.slane %v2294, 4
        %v2296 = vmax.f32 %v2294, %v2295
        %v2297 = vrot.slane %v2296, 2
        %v2298 = vmax.f32 %v2296, %v2297
        %v2299 = vrot.slane %v2298, 1
        %v2300 = vmax.f32 %v2298, %v2299
        %v2301 = vmax.f32 %v561, %v563
        %v2302 = vrot.slane %v2301, 4
        %v2303 = vmax.f32 %v2301, %v2302
        %v2304 = vrot.slane %v2303, 2
        %v2305 = vmax.f32 %v2303, %v2304
        %v2306 = vrot.slane %v2305, 1
        %v2307 = vmax.f32 %v2305, %v2306
        %v2308 = vmax.f32 %v564, %v566
        %v2309 = vrot.slane %v2308, 4
        %v2310 = vmax.f32 %v2308, %v2309
        %v2311 = vrot.slane %v2310, 2
        %v2312 = vmax.f32 %v2310, %v2311
        %v2313 = vrot.slane %v2312, 1
        %v2314 = vmax.f32 %v2312, %v2313
        %v2315 = vmax.f32 %v565, %v567
        %v2316 = vrot.slane %v2315, 4
        %v2317 = vmax.f32 %v2315, %v2316
        %v2318 = vrot.slane %v2317, 2
        %v2319 = vmax.f32 %v2317, %v2318
        %v2320 = vrot.slane %v2319, 1
        %v2321 = vmax.f32 %v2319, %v2320
        %v2322 = vmax.f32 %v568, %v570
        %v2323 = vrot.slane %v2322, 4
        %v2324 = vmax.f32 %v2322, %v2323
        %v2325 = vrot.slane %v2324, 2
        %v2326 = vmax.f32 %v2324, %v2325
        %v2327 = vrot.slane %v2326, 1
        %v2328 = vmax.f32 %v2326, %v2327
        %v2329 = vmax.f32 %v569, %v571
        %v2330 = vrot.slane %v2329, 4
        %v2331 = vmax.f32 %v2329, %v2330
        %v2332 = vrot.slane %v2331, 2
        %v2333 = vmax.f32 %v2331, %v2332
        %v2334 = vrot.slane %v2333, 1
        %v2335 = vmax.f32 %v2333, %v2334
        %v2336 = vmax.f32 %v572, %v574
        %v2337 = vrot.slane %v2336, 4
        %v2338 = vmax.f32 %v2336, %v2337
        %v2339 = vrot.slane %v2338, 2
        %v2340 = vmax.f32 %v2338, %v2339
        %v2341 = vrot.slane %v2340, 1
        %v2342 = vmax.f32 %v2340, %v2341
        %v2343 = vmax.f32 %v573, %v575
        %v2344 = vrot.slane %v2343, 4
        %v2345 = vmax.f32 %v2343, %v2344
        %v2346 = vrot.slane %v2345, 2
        %v2347 = vmax.f32 %v2345, %v2346
        %v2348 = vrot.slane %v2347, 1
        %v2349 = vmax.f32 %v2347, %v2348
        %v2350 = vmax.f32 %v576, %v578
        %v2351 = vrot.slane %v2350, 4
        %v2352 = vmax.f32 %v2350, %v2351
        %v2353 = vrot.slane %v2352, 2
        %v2354 = vmax.f32 %v2352, %v2353
        %v2355 = vrot.slane %v2354, 1
        %v2356 = vmax.f32 %v2354, %v2355
        %v2357 = vmax.f32 %v577, %v579
        %v2358 = vrot.slane %v2357, 4
        %v2359 = vmax.f32 %v2357, %v2358
        %v2360 = vrot.slane %v2359, 2
        %v2361 = vmax.f32 %v2359, %v2360
        %v2362 = vrot.slane %v2361, 1
        %v2363 = vmax.f32 %v2361, %v2362
        %v2364 = vmax.f32 %v580, %v582
        %v2365 = vrot.slane %v2364, 4
        %v2366 = vmax.f32 %v2364, %v2365
        %v2367 = vrot.slane %v2366, 2
        %v2368 = vmax.f32 %v2366, %v2367
        %v2369 = vrot.slane %v2368, 1
        %v2370 = vmax.f32 %v2368, %v2369
        %v2371 = vmax.f32 %v581, %v583
        %v2372 = vrot.slane %v2371, 4
        %v2373 = vmax.f32 %v2371, %v2372
        %v2374 = vrot.slane %v2373, 2
        %v2375 = vmax.f32 %v2373, %v2374
        %v2376 = vrot.slane %v2375, 1
        %v2377 = vmax.f32 %v2375, %v2376
        %v2378 = vmax.f32 %v584, %v586
        %v2379 = vrot.slane %v2378, 4
        %v2380 = vmax.f32 %v2378, %v2379
        %v2381 = vrot.slane %v2380, 2
        %v2382 = vmax.f32 %v2380, %v2381
        %v2383 = vrot.slane %v2382, 1
        %v2384 = vmax.f32 %v2382, %v2383
        %v2385 = vmax.f32 %v585, %v587
        %v2386 = vrot.slane %v2385, 4
        %v2387 = vmax.f32 %v2385, %v2386
        %v2388 = vrot.slane %v2387, 2
        %v2389 = vmax.f32 %v2387, %v2388
        %v2390 = vrot.slane %v2389, 1
        %v2391 = vmax.f32 %v2389, %v2390
        %v2392 = vmax.f32 %v588, %v590
        %v2393 = vrot.slane %v2392, 4
        %v2394 = vmax.f32 %v2392, %v2393
        %v2395 = vrot.slane %v2394, 2
        %v2396 = vmax.f32 %v2394, %v2395
        %v2397 = vrot.slane %v2396, 1
        %v2398 = vmax.f32 %v2396, %v2397
        %v2399 = vmax.f32 %v589, %v591
        %v2400 = vrot.slane %v2399, 4
        %v2401 = vmax.f32 %v2399, %v2400
        %v2402 = vrot.slane %v2401, 2
        %v2403 = vmax.f32 %v2401, %v2402
        %v2404 = vrot.slane %v2403, 1
        %v2405 = vmax.f32 %v2403, %v2404
        %v2406 = vmax.f32 %v592, %v594
        %v2407 = vrot.slane %v2406, 4
        %v2408 = vmax.f32 %v2406, %v2407
        %v2409 = vrot.slane %v2408, 2
        %v2410 = vmax.f32 %v2408, %v2409
        %v2411 = vrot.slane %v2410, 1
        %v2412 = vmax.f32 %v2410, %v2411
        %v2413 = vmax.f32 %v593, %v595
        %v2414 = vrot.slane %v2413, 4
        %v2415 = vmax.f32 %v2413, %v2414
        %v2416 = vrot.slane %v2415, 2
        %v2417 = vmax.f32 %v2415, %v2416
        %v2418 = vrot.slane %v2417, 1
        %v2419 = vmax.f32 %v2417, %v2418
        %v2420 = vmax.f32 %v596, %v598
        %v2421 = vrot.slane %v2420, 4
        %v2422 = vmax.f32 %v2420, %v2421
        %v2423 = vrot.slane %v2422, 2
        %v2424 = vmax.f32 %v2422, %v2423
        %v2425 = vrot.slane %v2424, 1
        %v2426 = vmax.f32 %v2424, %v2425
        %v2427 = vmax.f32 %v597, %v599
        %v2428 = vrot.slane %v2427, 4
        %v2429 = vmax.f32 %v2427, %v2428
        %v2430 = vrot.slane %v2429, 2
        %v2431 = vmax.f32 %v2429, %v2430
        %v2432 = vrot.slane %v2431, 1
        %v2433 = vmax.f32 %v2431, %v2432
        %v2434 = vmax.f32 %v600, %v602
        %v2435 = vrot.slane %v2434, 4
        %v2436 = vmax.f32 %v2434, %v2435
        %v2437 = vrot.slane %v2436, 2
        %v2438 = vmax.f32 %v2436, %v2437
        %v2439 = vrot.slane %v2438, 1
        %v2440 = vmax.f32 %v2438, %v2439
        %v2441 = vmax.f32 %v601, %v603
        %v2442 = vrot.slane %v2441, 4
        %v2443 = vmax.f32 %v2441, %v2442
        %v2444 = vrot.slane %v2443, 2
        %v2445 = vmax.f32 %v2443, %v2444
        %v2446 = vrot.slane %v2445, 1
        %v2447 = vmax.f32 %v2445, %v2446
        %v2448 = vmax.f32 %v604, %v606
        %v2449 = vrot.slane %v2448, 4
        %v2450 = vmax.f32 %v2448, %v2449
        %v2451 = vrot.slane %v2450, 2
        %v2452 = vmax.f32 %v2450, %v2451
        %v2453 = vrot.slane %v2452, 1
        %v2454 = vmax.f32 %v2452, %v2453
        %v2455 = vmax.f32 %v605, %v607
        %v2456 = vrot.slane %v2455, 4
        %v2457 = vmax.f32 %v2455, %v2456
        %v2458 = vrot.slane %v2457, 2
        %v2459 = vmax.f32 %v2457, %v2458
        %v2460 = vrot.slane %v2459, 1
        %v2461 = vmax.f32 %v2459, %v2460
        %v2462 = vmax.f32 %v608, %v610
        %v2463 = vrot.slane %v2462, 4
        %v2464 = vmax.f32 %v2462, %v2463
        %v2465 = vrot.slane %v2464, 2
        %v2466 = vmax.f32 %v2464, %v2465
        %v2467 = vrot.slane %v2466, 1
        %v2468 = vmax.f32 %v2466, %v2467
        %v2469 = vmax.f32 %v609, %v611
        %v2470 = vrot.slane %v2469, 4
        %v2471 = vmax.f32 %v2469, %v2470
        %v2472 = vrot.slane %v2471, 2
        %v2473 = vmax.f32 %v2471, %v2472
        %v2474 = vrot.slane %v2473, 1
        %v2475 = vmax.f32 %v2473, %v2474
        %v2476 = vmax.f32 %v612, %v614
        %v2477 = vrot.slane %v2476, 4
        %v2478 = vmax.f32 %v2476, %v2477
        %v2479 = vrot.slane %v2478, 2
        %v2480 = vmax.f32 %v2478, %v2479
        %v2481 = vrot.slane %v2480, 1
        %v2482 = vmax.f32 %v2480, %v2481
        %v2483 = vmax.f32 %v613, %v615
        %v2484 = vrot.slane %v2483, 4
        %v2485 = vmax.f32 %v2483, %v2484
        %v2486 = vrot.slane %v2485, 2
        %v2487 = vmax.f32 %v2485, %v2486
        %v2488 = vrot.slane %v2487, 1
        %v2489 = vmax.f32 %v2487, %v2488
        %v2490 = vmax.f32 %v616, %v618
        %v2491 = vrot.slane %v2490, 4
        %v2492 = vmax.f32 %v2490, %v2491
        %v2493 = vrot.slane %v2492, 2
        %v2494 = vmax.f32 %v2492, %v2493
        %v2495 = vrot.slane %v2494, 1
        %v2496 = vmax.f32 %v2494, %v2495
        %v2497 = vmax.f32 %v617, %v619
        %v2498 = vrot.slane %v2497, 4
        %v2499 = vmax.f32 %v2497, %v2498
        %v2500 = vrot.slane %v2499, 2
        %v2501 = vmax.f32 %v2499, %v2500
        %v2502 = vrot.slane %v2501, 1
        %v2503 = vmax.f32 %v2501, %v2502
        %v2504 = vmax.f32 %v620, %v622
        %v2505 = vrot.slane %v2504, 4
        %v2506 = vmax.f32 %v2504, %v2505
        %v2507 = vrot.slane %v2506, 2
        %v2508 = vmax.f32 %v2506, %v2507
        %v2509 = vrot.slane %v2508, 1
        %v2510 = vmax.f32 %v2508, %v2509
        %v2511 = vmax.f32 %v621, %v623
        %v2512 = vrot.slane %v2511, 4
        %v2513 = vmax.f32 %v2511, %v2512
        %v2514 = vrot.slane %v2513, 2
        %v2515 = vmax.f32 %v2513, %v2514
        %v2516 = vrot.slane %v2515, 1
        %v2517 = vmax.f32 %v2515, %v2516
        %v2518 = vmax.f32 %v624, %v626
        %v2519 = vrot.slane %v2518, 4
        %v2520 = vmax.f32 %v2518, %v2519
        %v2521 = vrot.slane %v2520, 2
        %v2522 = vmax.f32 %v2520, %v2521
        %v2523 = vrot.slane %v2522, 1
        %v2524 = vmax.f32 %v2522, %v2523
        %v2525 = vmax.f32 %v625, %v627
        %v2526 = vrot.slane %v2525, 4
        %v2527 = vmax.f32 %v2525, %v2526
        %v2528 = vrot.slane %v2527, 2
        %v2529 = vmax.f32 %v2527, %v2528
        %v2530 = vrot.slane %v2529, 1
        %v2531 = vmax.f32 %v2529, %v2530
        %v2532 = vmax.f32 %v628, %v630
        %v2533 = vrot.slane %v2532, 4
        %v2534 = vmax.f32 %v2532, %v2533
        %v2535 = vrot.slane %v2534, 2
        %v2536 = vmax.f32 %v2534, %v2535
        %v2537 = vrot.slane %v2536, 1
        %v2538 = vmax.f32 %v2536, %v2537
        %v2539 = vmax.f32 %v629, %v631
        %v2540 = vrot.slane %v2539, 4
        %v2541 = vmax.f32 %v2539, %v2540
        %v2542 = vrot.slane %v2541, 2
        %v2543 = vmax.f32 %v2541, %v2542
        %v2544 = vrot.slane %v2543, 1
        %v2545 = vmax.f32 %v2543, %v2544
        %v2546 = vmax.f32 %v632, %v634
        %v2547 = vrot.slane %v2546, 4
        %v2548 = vmax.f32 %v2546, %v2547
        %v2549 = vrot.slane %v2548, 2
        %v2550 = vmax.f32 %v2548, %v2549
        %v2551 = vrot.slane %v2550, 1
        %v2552 = vmax.f32 %v2550, %v2551
        %v2553 = vmax.f32 %v633, %v635
        %v2554 = vrot.slane %v2553, 4
        %v2555 = vmax.f32 %v2553, %v2554
        %v2556 = vrot.slane %v2555, 2
        %v2557 = vmax.f32 %v2555, %v2556
        %v2558 = vrot.slane %v2557, 1
        %v2559 = vmax.f32 %v2557, %v2558
        %v2560 = vmax.f32 %v636, %v638
        %v2561 = vrot.slane %v2560, 4
        %v2562 = vmax.f32 %v2560, %v2561
        %v2563 = vrot.slane %v2562, 2
        %v2564 = vmax.f32 %v2562, %v2563
        %v2565 = vrot.slane %v2564, 1
        %v2566 = vmax.f32 %v2564, %v2565
        %v2567 = vmax.f32 %v637, %v639
        %v2568 = vrot.slane %v2567, 4
        %v2569 = vmax.f32 %v2567, %v2568
        %v2570 = vrot.slane %v2569, 2
        %v2571 = vmax.f32 %v2569, %v2570
        %v2572 = vrot.slane %v2571, 1
        %v2573 = vmax.f32 %v2571, %v2572
        %v2574 = vmax.f32 %v640, %v642
        %v2575 = vrot.slane %v2574, 4
        %v2576 = vmax.f32 %v2574, %v2575
        %v2577 = vrot.slane %v2576, 2
        %v2578 = vmax.f32 %v2576, %v2577
        %v2579 = vrot.slane %v2578, 1
        %v2580 = vmax.f32 %v2578, %v2579
        %v2581 = vmax.f32 %v641, %v643
        %v2582 = vrot.slane %v2581, 4
        %v2583 = vmax.f32 %v2581, %v2582
        %v2584 = vrot.slane %v2583, 2
        %v2585 = vmax.f32 %v2583, %v2584
        %v2586 = vrot.slane %v2585, 1
        %v2587 = vmax.f32 %v2585, %v2586
        %v2588 = vmax.f32 %v644, %v646
        %v2589 = vrot.slane %v2588, 4
        %v2590 = vmax.f32 %v2588, %v2589
        %v2591 = vrot.slane %v2590, 2
        %v2592 = vmax.f32 %v2590, %v2591
        %v2593 = vrot.slane %v2592, 1
        %v2594 = vmax.f32 %v2592, %v2593
        %v2595 = vmax.f32 %v645, %v647
        %v2596 = vrot.slane %v2595, 4
        %v2597 = vmax.f32 %v2595, %v2596
        %v2598 = vrot.slane %v2597, 2
        %v2599 = vmax.f32 %v2597, %v2598
        %v2600 = vrot.slane %v2599, 1
        %v2601 = vmax.f32 %v2599, %v2600
        %v2602 = vmax.f32 %v648, %v650
        %v2603 = vrot.slane %v2602, 4
        %v2604 = vmax.f32 %v2602, %v2603
        %v2605 = vrot.slane %v2604, 2
        %v2606 = vmax.f32 %v2604, %v2605
        %v2607 = vrot.slane %v2606, 1
        %v2608 = vmax.f32 %v2606, %v2607
        %v2609 = vmax.f32 %v649, %v651
        %v2610 = vrot.slane %v2609, 4
        %v2611 = vmax.f32 %v2609, %v2610
        %v2612 = vrot.slane %v2611, 2
        %v2613 = vmax.f32 %v2611, %v2612
        %v2614 = vrot.slane %v2613, 1
        %v2615 = vmax.f32 %v2613, %v2614
        %v2616 = vmax.f32 %v652, %v654
        %v2617 = vrot.slane %v2616, 4
        %v2618 = vmax.f32 %v2616, %v2617
        %v2619 = vrot.slane %v2618, 2
        %v2620 = vmax.f32 %v2618, %v2619
        %v2621 = vrot.slane %v2620, 1
        %v2622 = vmax.f32 %v2620, %v2621
        %v2623 = vmax.f32 %v653, %v655
        %v2624 = vrot.slane %v2623, 4
        %v2625 = vmax.f32 %v2623, %v2624
        %v2626 = vrot.slane %v2625, 2
        %v2627 = vmax.f32 %v2625, %v2626
        %v2628 = vrot.slane %v2627, 1
        %v2629 = vmax.f32 %v2627, %v2628
        %v2630 = vmax.f32 %v656, %v658
        %v2631 = vrot.slane %v2630, 4
        %v2632 = vmax.f32 %v2630, %v2631
        %v2633 = vrot.slane %v2632, 2
        %v2634 = vmax.f32 %v2632, %v2633
        %v2635 = vrot.slane %v2634, 1
        %v2636 = vmax.f32 %v2634, %v2635
        %v2637 = vmax.f32 %v657, %v659
        %v2638 = vrot.slane %v2637, 4
        %v2639 = vmax.f32 %v2637, %v2638
        %v2640 = vrot.slane %v2639, 2
        %v2641 = vmax.f32 %v2639, %v2640
        %v2642 = vrot.slane %v2641, 1
        %v2643 = vmax.f32 %v2641, %v2642
        %v2644 = vmax.f32 %v660, %v662
        %v2645 = vrot.slane %v2644, 4
        %v2646 = vmax.f32 %v2644, %v2645
        %v2647 = vrot.slane %v2646, 2
        %v2648 = vmax.f32 %v2646, %v2647
        %v2649 = vrot.slane %v2648, 1
        %v2650 = vmax.f32 %v2648, %v2649
        %v2651 = vmax.f32 %v661, %v663
        %v2652 = vrot.slane %v2651, 4
        %v2653 = vmax.f32 %v2651, %v2652
        %v2654 = vrot.slane %v2653, 2
        %v2655 = vmax.f32 %v2653, %v2654
        %v2656 = vrot.slane %v2655, 1
        %v2657 = vmax.f32 %v2655, %v2656
        %v2658 = vmax.f32 %v664, %v666
        %v2659 = vrot.slane %v2658, 4
        %v2660 = vmax.f32 %v2658, %v2659
        %v2661 = vrot.slane %v2660, 2
        %v2662 = vmax.f32 %v2660, %v2661
        %v2663 = vrot.slane %v2662, 1
        %v2664 = vmax.f32 %v2662, %v2663
        %v2665 = vmax.f32 %v665, %v667
        %v2666 = vrot.slane %v2665, 4
        %v2667 = vmax.f32 %v2665, %v2666
        %v2668 = vrot.slane %v2667, 2
        %v2669 = vmax.f32 %v2667, %v2668
        %v2670 = vrot.slane %v2669, 1
        %v2671 = vmax.f32 %v2669, %v2670
        %v2672 = vmax.f32 %v668, %v670
        %v2673 = vrot.slane %v2672, 4
        %v2674 = vmax.f32 %v2672, %v2673
        %v2675 = vrot.slane %v2674, 2
        %v2676 = vmax.f32 %v2674, %v2675
        %v2677 = vrot.slane %v2676, 1
        %v2678 = vmax.f32 %v2676, %v2677
        %v2679 = vmax.f32 %v669, %v671
        %v2680 = vrot.slane %v2679, 4
        %v2681 = vmax.f32 %v2679, %v2680
        %v2682 = vrot.slane %v2681, 2
        %v2683 = vmax.f32 %v2681, %v2682
        %v2684 = vrot.slane %v2683, 1
        %v2685 = vmax.f32 %v2683, %v2684
        %v2686 = vmax.f32 %v672, %v674
        %v2687 = vrot.slane %v2686, 4
        %v2688 = vmax.f32 %v2686, %v2687
        %v2689 = vrot.slane %v2688, 2
        %v2690 = vmax.f32 %v2688, %v2689
        %v2691 = vrot.slane %v2690, 1
        %v2692 = vmax.f32 %v2690, %v2691
        %v2693 = vmax.f32 %v673, %v675
        %v2694 = vrot.slane %v2693, 4
        %v2695 = vmax.f32 %v2693, %v2694
        %v2696 = vrot.slane %v2695, 2
        %v2697 = vmax.f32 %v2695, %v2696
        %v2698 = vrot.slane %v2697, 1
        %v2699 = vmax.f32 %v2697, %v2698
        %v2700 = vmax.f32 %v676, %v678
        %v2701 = vrot.slane %v2700, 4
        %v2702 = vmax.f32 %v2700, %v2701
        %v2703 = vrot.slane %v2702, 2
        %v2704 = vmax.f32 %v2702, %v2703
        %v2705 = vrot.slane %v2704, 1
        %v2706 = vmax.f32 %v2704, %v2705
        %v2707 = vmax.f32 %v677, %v679
        %v2708 = vrot.slane %v2707, 4
        %v2709 = vmax.f32 %v2707, %v2708
        %v2710 = vrot.slane %v2709, 2
        %v2711 = vmax.f32 %v2709, %v2710
        %v2712 = vrot.slane %v2711, 1
        %v2713 = vmax.f32 %v2711, %v2712
        %v2714 = vmax.f32 %v680, %v682
        %v2715 = vrot.slane %v2714, 4
        %v2716 = vmax.f32 %v2714, %v2715
        %v2717 = vrot.slane %v2716, 2
        %v2718 = vmax.f32 %v2716, %v2717
        %v2719 = vrot.slane %v2718, 1
        %v2720 = vmax.f32 %v2718, %v2719
        %v2721 = vmax.f32 %v681, %v683
        %v2722 = vrot.slane %v2721, 4
        %v2723 = vmax.f32 %v2721, %v2722
        %v2724 = vrot.slane %v2723, 2
        %v2725 = vmax.f32 %v2723, %v2724
        %v2726 = vrot.slane %v2725, 1
        %v2727 = vmax.f32 %v2725, %v2726
        %v2728 = vmax.f32 %v684, %v686
        %v2729 = vrot.slane %v2728, 4
        %v2730 = vmax.f32 %v2728, %v2729
        %v2731 = vrot.slane %v2730, 2
        %v2732 = vmax.f32 %v2730, %v2731
        %v2733 = vrot.slane %v2732, 1
        %v2734 = vmax.f32 %v2732, %v2733
        %v2735 = vmax.f32 %v685, %v687
        %v2736 = vrot.slane %v2735, 4
        %v2737 = vmax.f32 %v2735, %v2736
        %v2738 = vrot.slane %v2737, 2
        %v2739 = vmax.f32 %v2737, %v2738
        %v2740 = vrot.slane %v2739, 1
        %v2741 = vmax.f32 %v2739, %v2740
        %v2742 = vmax.f32 %v688, %v690
        %v2743 = vrot.slane %v2742, 4
        %v2744 = vmax.f32 %v2742, %v2743
        %v2745 = vrot.slane %v2744, 2
        %v2746 = vmax.f32 %v2744, %v2745
        %v2747 = vrot.slane %v2746, 1
        %v2748 = vmax.f32 %v2746, %v2747
        %v2749 = vmax.f32 %v689, %v691
        %v2750 = vrot.slane %v2749, 4
        %v2751 = vmax.f32 %v2749, %v2750
        %v2752 = vrot.slane %v2751, 2
        %v2753 = vmax.f32 %v2751, %v2752
        %v2754 = vrot.slane %v2753, 1
        %v2755 = vmax.f32 %v2753, %v2754
        %v2756 = vmax.f32 %v692, %v694
        %v2757 = vrot.slane %v2756, 4
        %v2758 = vmax.f32 %v2756, %v2757
        %v2759 = vrot.slane %v2758, 2
        %v2760 = vmax.f32 %v2758, %v2759
        %v2761 = vrot.slane %v2760, 1
        %v2762 = vmax.f32 %v2760, %v2761
        %v2763 = vmax.f32 %v693, %v695
        %v2764 = vrot.slane %v2763, 4
        %v2765 = vmax.f32 %v2763, %v2764
        %v2766 = vrot.slane %v2765, 2
        %v2767 = vmax.f32 %v2765, %v2766
        %v2768 = vrot.slane %v2767, 1
        %v2769 = vmax.f32 %v2767, %v2768
        %v2770 = vmax.f32 %v696, %v698
        %v2771 = vrot.slane %v2770, 4
        %v2772 = vmax.f32 %v2770, %v2771
        %v2773 = vrot.slane %v2772, 2
        %v2774 = vmax.f32 %v2772, %v2773
        %v2775 = vrot.slane %v2774, 1
        %v2776 = vmax.f32 %v2774, %v2775
        %v2777 = vmax.f32 %v697, %v699
        %v2778 = vrot.slane %v2777, 4
        %v2779 = vmax.f32 %v2777, %v2778
        %v2780 = vrot.slane %v2779, 2
        %v2781 = vmax.f32 %v2779, %v2780
        %v2782 = vrot.slane %v2781, 1
        %v2783 = vmax.f32 %v2781, %v2782
        %v2784 = vmax.f32 %v700, %v702
        %v2785 = vrot.slane %v2784, 4
        %v2786 = vmax.f32 %v2784, %v2785
        %v2787 = vrot.slane %v2786, 2
        %v2788 = vmax.f32 %v2786, %v2787
        %v2789 = vrot.slane %v2788, 1
        %v2790 = vmax.f32 %v2788, %v2789
        %v2791 = vmax.f32 %v701, %v703
        %v2792 = vrot.slane %v2791, 4
        %v2793 = vmax.f32 %v2791, %v2792
        %v2794 = vrot.slane %v2793, 2
        %v2795 = vmax.f32 %v2793, %v2794
        %v2796 = vrot.slane %v2795, 1
        %v2797 = vmax.f32 %v2795, %v2796
        %v2798 = vmax.f32 %v704, %v706
        %v2799 = vrot.slane %v2798, 4
        %v2800 = vmax.f32 %v2798, %v2799
        %v2801 = vrot.slane %v2800, 2
        %v2802 = vmax.f32 %v2800, %v2801
        %v2803 = vrot.slane %v2802, 1
        %v2804 = vmax.f32 %v2802, %v2803
        %v2805 = vmax.f32 %v705, %v707
        %v2806 = vrot.slane %v2805, 4
        %v2807 = vmax.f32 %v2805, %v2806
        %v2808 = vrot.slane %v2807, 2
        %v2809 = vmax.f32 %v2807, %v2808
        %v2810 = vrot.slane %v2809, 1
        %v2811 = vmax.f32 %v2809, %v2810
        %v2812 = vmax.f32 %v708, %v710
        %v2813 = vrot.slane %v2812, 4
        %v2814 = vmax.f32 %v2812, %v2813
        %v2815 = vrot.slane %v2814, 2
        %v2816 = vmax.f32 %v2814, %v2815
        %v2817 = vrot.slane %v2816, 1
        %v2818 = vmax.f32 %v2816, %v2817
        %v2819 = vmax.f32 %v709, %v711
        %v2820 = vrot.slane %v2819, 4
        %v2821 = vmax.f32 %v2819, %v2820
        %v2822 = vrot.slane %v2821, 2
        %v2823 = vmax.f32 %v2821, %v2822
        %v2824 = vrot.slane %v2823, 1
        %v2825 = vmax.f32 %v2823, %v2824
        %v2826 = vmax.f32 %v712, %v714
        %v2827 = vrot.slane %v2826, 4
        %v2828 = vmax.f32 %v2826, %v2827
        %v2829 = vrot.slane %v2828, 2
        %v2830 = vmax.f32 %v2828, %v2829
        %v2831 = vrot.slane %v2830, 1
        %v2832 = vmax.f32 %v2830, %v2831
        %v2833 = vmax.f32 %v713, %v715
        %v2834 = vrot.slane %v2833, 4
        %v2835 = vmax.f32 %v2833, %v2834
        %v2836 = vrot.slane %v2835, 2
        %v2837 = vmax.f32 %v2835, %v2836
        %v2838 = vrot.slane %v2837, 1
        %v2839 = vmax.f32 %v2837, %v2838
        %v2840 = vmax.f32 %v716, %v718
        %v2841 = vrot.slane %v2840, 4
        %v2842 = vmax.f32 %v2840, %v2841
        %v2843 = vrot.slane %v2842, 2
        %v2844 = vmax.f32 %v2842, %v2843
        %v2845 = vrot.slane %v2844, 1
        %v2846 = vmax.f32 %v2844, %v2845
        %v2847 = vmax.f32 %v717, %v719
        %v2848 = vrot.slane %v2847, 4
        %v2849 = vmax.f32 %v2847, %v2848
        %v2850 = vrot.slane %v2849, 2
        %v2851 = vmax.f32 %v2849, %v2850
        %v2852 = vrot.slane %v2851, 1
        %v2853 = vmax.f32 %v2851, %v2852
        %v2854 = vmax.f32 %v720, %v722
        %v2855 = vrot.slane %v2854, 4
        %v2856 = vmax.f32 %v2854, %v2855
        %v2857 = vrot.slane %v2856, 2
        %v2858 = vmax.f32 %v2856, %v2857
        %v2859 = vrot.slane %v2858, 1
        %v2860 = vmax.f32 %v2858, %v2859
        %v2861 = vmax.f32 %v721, %v723
        %v2862 = vrot.slane %v2861, 4
        %v2863 = vmax.f32 %v2861, %v2862
        %v2864 = vrot.slane %v2863, 2
        %v2865 = vmax.f32 %v2863, %v2864
        %v2866 = vrot.slane %v2865, 1
        %v2867 = vmax.f32 %v2865, %v2866
        %v2868 = vmax.f32 %v724, %v726
        %v2869 = vrot.slane %v2868, 4
        %v2870 = vmax.f32 %v2868, %v2869
        %v2871 = vrot.slane %v2870, 2
        %v2872 = vmax.f32 %v2870, %v2871
        %v2873 = vrot.slane %v2872, 1
        %v2874 = vmax.f32 %v2872, %v2873
        %v2875 = vmax.f32 %v725, %v727
        %v2876 = vrot.slane %v2875, 4
        %v2877 = vmax.f32 %v2875, %v2876
        %v2878 = vrot.slane %v2877, 2
        %v2879 = vmax.f32 %v2877, %v2878
        %v2880 = vrot.slane %v2879, 1
        %v2881 = vmax.f32 %v2879, %v2880
        %v2882 = vmax.f32 %v728, %v730
        %v2883 = vrot.slane %v2882, 4
        %v2884 = vmax.f32 %v2882, %v2883
        %v2885 = vrot.slane %v2884, 2
        %v2886 = vmax.f32 %v2884, %v2885
        %v2887 = vrot.slane %v2886, 1
        %v2888 = vmax.f32 %v2886, %v2887
        %v2889 = vmax.f32 %v729, %v731
        %v2890 = vrot.slane %v2889, 4
        %v2891 = vmax.f32 %v2889, %v2890
        %v2892 = vrot.slane %v2891, 2
        %v2893 = vmax.f32 %v2891, %v2892
        %v2894 = vrot.slane %v2893, 1
        %v2895 = vmax.f32 %v2893, %v2894
        %v2896 = vmax.f32 %v732, %v734
        %v2897 = vrot.slane %v2896, 4
        %v2898 = vmax.f32 %v2896, %v2897
        %v2899 = vrot.slane %v2898, 2
        %v2900 = vmax.f32 %v2898, %v2899
        %v2901 = vrot.slane %v2900, 1
        %v2902 = vmax.f32 %v2900, %v2901
        %v2903 = vmax.f32 %v733, %v735
        %v2904 = vrot.slane %v2903, 4
        %v2905 = vmax.f32 %v2903, %v2904
        %v2906 = vrot.slane %v2905, 2
        %v2907 = vmax.f32 %v2905, %v2906
        %v2908 = vrot.slane %v2907, 1
        %v2909 = vmax.f32 %v2907, %v2908
        %v2910 = vmax.f32 %v736, %v738
        %v2911 = vrot.slane %v2910, 4
        %v2912 = vmax.f32 %v2910, %v2911
        %v2913 = vrot.slane %v2912, 2
        %v2914 = vmax.f32 %v2912, %v2913
        %v2915 = vrot.slane %v2914, 1
        %v2916 = vmax.f32 %v2914, %v2915
        %v2917 = vmax.f32 %v737, %v739
        %v2918 = vrot.slane %v2917, 4
        %v2919 = vmax.f32 %v2917, %v2918
        %v2920 = vrot.slane %v2919, 2
        %v2921 = vmax.f32 %v2919, %v2920
        %v2922 = vrot.slane %v2921, 1
        %v2923 = vmax.f32 %v2921, %v2922
        %v2924 = vmax.f32 %v740, %v742
        %v2925 = vrot.slane %v2924, 4
        %v2926 = vmax.f32 %v2924, %v2925
        %v2927 = vrot.slane %v2926, 2
        %v2928 = vmax.f32 %v2926, %v2927
        %v2929 = vrot.slane %v2928, 1
        %v2930 = vmax.f32 %v2928, %v2929
        %v2931 = vmax.f32 %v741, %v743
        %v2932 = vrot.slane %v2931, 4
        %v2933 = vmax.f32 %v2931, %v2932
        %v2934 = vrot.slane %v2933, 2
        %v2935 = vmax.f32 %v2933, %v2934
        %v2936 = vrot.slane %v2935, 1
        %v2937 = vmax.f32 %v2935, %v2936
        %v2938 = vmax.f32 %v744, %v746
        %v2939 = vrot.slane %v2938, 4
        %v2940 = vmax.f32 %v2938, %v2939
        %v2941 = vrot.slane %v2940, 2
        %v2942 = vmax.f32 %v2940, %v2941
        %v2943 = vrot.slane %v2942, 1
        %v2944 = vmax.f32 %v2942, %v2943
        %v2945 = vmax.f32 %v745, %v747
        %v2946 = vrot.slane %v2945, 4
        %v2947 = vmax.f32 %v2945, %v2946
        %v2948 = vrot.slane %v2947, 2
        %v2949 = vmax.f32 %v2947, %v2948
        %v2950 = vrot.slane %v2949, 1
        %v2951 = vmax.f32 %v2949, %v2950
        %v2952 = vmax.f32 %v748, %v750
        %v2953 = vrot.slane %v2952, 4
        %v2954 = vmax.f32 %v2952, %v2953
        %v2955 = vrot.slane %v2954, 2
        %v2956 = vmax.f32 %v2954, %v2955
        %v2957 = vrot.slane %v2956, 1
        %v2958 = vmax.f32 %v2956, %v2957
        %v2959 = vmax.f32 %v749, %v751
        %v2960 = vrot.slane %v2959, 4
        %v2961 = vmax.f32 %v2959, %v2960
        %v2962 = vrot.slane %v2961, 2
        %v2963 = vmax.f32 %v2961, %v2962
        %v2964 = vrot.slane %v2963, 1
        %v2965 = vmax.f32 %v2963, %v2964
        %v2966 = vmax.f32 %v752, %v754
        %v2967 = vrot.slane %v2966, 4
        %v2968 = vmax.f32 %v2966, %v2967
        %v2969 = vrot.slane %v2968, 2
        %v2970 = vmax.f32 %v2968, %v2969
        %v2971 = vrot.slane %v2970, 1
        %v2972 = vmax.f32 %v2970, %v2971
        %v2973 = vmax.f32 %v753, %v755
        %v2974 = vrot.slane %v2973, 4
        %v2975 = vmax.f32 %v2973, %v2974
        %v2976 = vrot.slane %v2975, 2
        %v2977 = vmax.f32 %v2975, %v2976
        %v2978 = vrot.slane %v2977, 1
        %v2979 = vmax.f32 %v2977, %v2978
        %v2980 = vmax.f32 %v756, %v758
        %v2981 = vrot.slane %v2980, 4
        %v2982 = vmax.f32 %v2980, %v2981
        %v2983 = vrot.slane %v2982, 2
        %v2984 = vmax.f32 %v2982, %v2983
        %v2985 = vrot.slane %v2984, 1
        %v2986 = vmax.f32 %v2984, %v2985
        %v2987 = vmax.f32 %v757, %v759
        %v2988 = vrot.slane %v2987, 4
        %v2989 = vmax.f32 %v2987, %v2988
        %v2990 = vrot.slane %v2989, 2
        %v2991 = vmax.f32 %v2989, %v2990
        %v2992 = vrot.slane %v2991, 1
        %v2993 = vmax.f32 %v2991, %v2992
        %v2994 = vmax.f32 %v760, %v762
        %v2995 = vrot.slane %v2994, 4
        %v2996 = vmax.f32 %v2994, %v2995
        %v2997 = vrot.slane %v2996, 2
        %v2998 = vmax.f32 %v2996, %v2997
        %v2999 = vrot.slane %v2998, 1
        %v3000 = vmax.f32 %v2998, %v2999
        %v3001 = vmax.f32 %v761, %v763
        %v3002 = vrot.slane %v3001, 4
        %v3003 = vmax.f32 %v3001, %v3002
        %v3004 = vrot.slane %v3003, 2
        %v3005 = vmax.f32 %v3003, %v3004
        %v3006 = vrot.slane %v3005, 1
        %v3007 = vmax.f32 %v3005, %v3006
        %v3008 = vmax.f32 %v764, %v766
        %v3009 = vrot.slane %v3008, 4
        %v3010 = vmax.f32 %v3008, %v3009
        %v3011 = vrot.slane %v3010, 2
        %v3012 = vmax.f32 %v3010, %v3011
        %v3013 = vrot.slane %v3012, 1
        %v3014 = vmax.f32 %v3012, %v3013
        %v3015 = vmax.f32 %v765, %v767
        %v3016 = vrot.slane %v3015, 4
        %v3017 = vmax.f32 %v3015, %v3016
        %v3018 = vrot.slane %v3017, 2
        %v3019 = vmax.f32 %v3017, %v3018
        %v3020 = vrot.slane %v3019, 1
        %v3021 = vmax.f32 %v3019, %v3020
        %v3022 = vmax.f32 %v768, %v770
        %v3023 = vrot.slane %v3022, 4
        %v3024 = vmax.f32 %v3022, %v3023
        %v3025 = vrot.slane %v3024, 2
        %v3026 = vmax.f32 %v3024, %v3025
        %v3027 = vrot.slane %v3026, 1
        %v3028 = vmax.f32 %v3026, %v3027
        %v3029 = vmax.f32 %v769, %v771
        %v3030 = vrot.slane %v3029, 4
        %v3031 = vmax.f32 %v3029, %v3030
        %v3032 = vrot.slane %v3031, 2
        %v3033 = vmax.f32 %v3031, %v3032
        %v3034 = vrot.slane %v3033, 1
        %v3035 = vmax.f32 %v3033, %v3034
        %v3036 = vmax.f32 %v772, %v774
        %v3037 = vrot.slane %v3036, 4
        %v3038 = vmax.f32 %v3036, %v3037
        %v3039 = vrot.slane %v3038, 2
        %v3040 = vmax.f32 %v3038, %v3039
        %v3041 = vrot.slane %v3040, 1
        %v3042 = vmax.f32 %v3040, %v3041
        %v3043 = vmax.f32 %v773, %v775
        %v3044 = vrot.slane %v3043, 4
        %v3045 = vmax.f32 %v3043, %v3044
        %v3046 = vrot.slane %v3045, 2
        %v3047 = vmax.f32 %v3045, %v3046
        %v3048 = vrot.slane %v3047, 1
        %v3049 = vmax.f32 %v3047, %v3048
        %v3050 = vmax.f32 %v776, %v778
        %v3051 = vrot.slane %v3050, 4
        %v3052 = vmax.f32 %v3050, %v3051
        %v3053 = vrot.slane %v3052, 2
        %v3054 = vmax.f32 %v3052, %v3053
        %v3055 = vrot.slane %v3054, 1
        %v3056 = vmax.f32 %v3054, %v3055
        %v3057 = vmax.f32 %v777, %v779
        %v3058 = vrot.slane %v3057, 4
        %v3059 = vmax.f32 %v3057, %v3058
        %v3060 = vrot.slane %v3059, 2
        %v3061 = vmax.f32 %v3059, %v3060
        %v3062 = vrot.slane %v3061, 1
        %v3063 = vmax.f32 %v3061, %v3062
        %v3064 = vmax.f32 %v780, %v782
        %v3065 = vrot.slane %v3064, 4
        %v3066 = vmax.f32 %v3064, %v3065
        %v3067 = vrot.slane %v3066, 2
        %v3068 = vmax.f32 %v3066, %v3067
        %v3069 = vrot.slane %v3068, 1
        %v3070 = vmax.f32 %v3068, %v3069
        %v3071 = vmax.f32 %v781, %v783
        %v3072 = vrot.slane %v3071, 4
        %v3073 = vmax.f32 %v3071, %v3072
        %v3074 = vrot.slane %v3073, 2
        %v3075 = vmax.f32 %v3073, %v3074
        %v3076 = vrot.slane %v3075, 1
        %v3077 = vmax.f32 %v3075, %v3076
        %v3078 = vmax.f32 %v784, %v786
        %v3079 = vrot.slane %v3078, 4
        %v3080 = vmax.f32 %v3078, %v3079
        %v3081 = vrot.slane %v3080, 2
        %v3082 = vmax.f32 %v3080, %v3081
        %v3083 = vrot.slane %v3082, 1
        %v3084 = vmax.f32 %v3082, %v3083
        %v3085 = vmax.f32 %v785, %v787
        %v3086 = vrot.slane %v3085, 4
        %v3087 = vmax.f32 %v3085, %v3086
        %v3088 = vrot.slane %v3087, 2
        %v3089 = vmax.f32 %v3087, %v3088
        %v3090 = vrot.slane %v3089, 1
        %v3091 = vmax.f32 %v3089, %v3090
        %v3092 = vmax.f32 %v788, %v790
        %v3093 = vrot.slane %v3092, 4
        %v3094 = vmax.f32 %v3092, %v3093
        %v3095 = vrot.slane %v3094, 2
        %v3096 = vmax.f32 %v3094, %v3095
        %v3097 = vrot.slane %v3096, 1
        %v3098 = vmax.f32 %v3096, %v3097
        %v3099 = vmax.f32 %v789, %v791
        %v3100 = vrot.slane %v3099, 4
        %v3101 = vmax.f32 %v3099, %v3100
        %v3102 = vrot.slane %v3101, 2
        %v3103 = vmax.f32 %v3101, %v3102
        %v3104 = vrot.slane %v3103, 1
        %v3105 = vmax.f32 %v3103, %v3104
        %v3106 = vmax.f32 %v792, %v794
        %v3107 = vrot.slane %v3106, 4
        %v3108 = vmax.f32 %v3106, %v3107
        %v3109 = vrot.slane %v3108, 2
        %v3110 = vmax.f32 %v3108, %v3109
        %v3111 = vrot.slane %v3110, 1
        %v3112 = vmax.f32 %v3110, %v3111
        %v3113 = vmax.f32 %v793, %v795
        %v3114 = vrot.slane %v3113, 4
        %v3115 = vmax.f32 %v3113, %v3114
        %v3116 = vrot.slane %v3115, 2
        %v3117 = vmax.f32 %v3115, %v3116
        %v3118 = vrot.slane %v3117, 1
        %v3119 = vmax.f32 %v3117, %v3118
        %v3120 = vmax.f32 %v796, %v798
        %v3121 = vrot.slane %v3120, 4
        %v3122 = vmax.f32 %v3120, %v3121
        %v3123 = vrot.slane %v3122, 2
        %v3124 = vmax.f32 %v3122, %v3123
        %v3125 = vrot.slane %v3124, 1
        %v3126 = vmax.f32 %v3124, %v3125
        %v3127 = vmax.f32 %v797, %v799
        %v3128 = vrot.slane %v3127, 4
        %v3129 = vmax.f32 %v3127, %v3128
        %v3130 = vrot.slane %v3129, 2
        %v3131 = vmax.f32 %v3129, %v3130
        %v3132 = vrot.slane %v3131, 1
        %v3133 = vmax.f32 %v3131, %v3132
        %v3134 = vmax.f32 %v800, %v802
        %v3135 = vrot.slane %v3134, 4
        %v3136 = vmax.f32 %v3134, %v3135
        %v3137 = vrot.slane %v3136, 2
        %v3138 = vmax.f32 %v3136, %v3137
        %v3139 = vrot.slane %v3138, 1
        %v3140 = vmax.f32 %v3138, %v3139
        %v3141 = vmax.f32 %v801, %v803
        %v3142 = vrot.slane %v3141, 4
        %v3143 = vmax.f32 %v3141, %v3142
        %v3144 = vrot.slane %v3143, 2
        %v3145 = vmax.f32 %v3143, %v3144
        %v3146 = vrot.slane %v3145, 1
        %v3147 = vmax.f32 %v3145, %v3146
        %v3148 = vmax.f32 %v804, %v806
        %v3149 = vrot.slane %v3148, 4
        %v3150 = vmax.f32 %v3148, %v3149
        %v3151 = vrot.slane %v3150, 2
        %v3152 = vmax.f32 %v3150, %v3151
        %v3153 = vrot.slane %v3152, 1
        %v3154 = vmax.f32 %v3152, %v3153
        %v3155 = vmax.f32 %v805, %v807
        %v3156 = vrot.slane %v3155, 4
        %v3157 = vmax.f32 %v3155, %v3156
        %v3158 = vrot.slane %v3157, 2
        %v3159 = vmax.f32 %v3157, %v3158
        %v3160 = vrot.slane %v3159, 1
        %v3161 = vmax.f32 %v3159, %v3160
        %v3162 = vmax.f32 %v808, %v810
        %v3163 = vrot.slane %v3162, 4
        %v3164 = vmax.f32 %v3162, %v3163
        %v3165 = vrot.slane %v3164, 2
        %v3166 = vmax.f32 %v3164, %v3165
        %v3167 = vrot.slane %v3166, 1
        %v3168 = vmax.f32 %v3166, %v3167
        %v3169 = vmax.f32 %v809, %v811
        %v3170 = vrot.slane %v3169, 4
        %v3171 = vmax.f32 %v3169, %v3170
        %v3172 = vrot.slane %v3171, 2
        %v3173 = vmax.f32 %v3171, %v3172
        %v3174 = vrot.slane %v3173, 1
        %v3175 = vmax.f32 %v3173, %v3174
        %v3176 = vmax.f32 %v812, %v814
        %v3177 = vrot.slane %v3176, 4
        %v3178 = vmax.f32 %v3176, %v3177
        %v3179 = vrot.slane %v3178, 2
        %v3180 = vmax.f32 %v3178, %v3179
        %v3181 = vrot.slane %v3180, 1
        %v3182 = vmax.f32 %v3180, %v3181
        %v3183 = vmax.f32 %v813, %v815
        %v3184 = vrot.slane %v3183, 4
        %v3185 = vmax.f32 %v3183, %v3184
        %v3186 = vrot.slane %v3185, 2
        %v3187 = vmax.f32 %v3185, %v3186
        %v3188 = vrot.slane %v3187, 1
        %v3189 = vmax.f32 %v3187, %v3188
        %v3190 = vmax.f32 %v816, %v818
        %v3191 = vrot.slane %v3190, 4
        %v3192 = vmax.f32 %v3190, %v3191
        %v3193 = vrot.slane %v3192, 2
        %v3194 = vmax.f32 %v3192, %v3193
        %v3195 = vrot.slane %v3194, 1
        %v3196 = vmax.f32 %v3194, %v3195
        %v3197 = vmax.f32 %v817, %v819
        %v3198 = vrot.slane %v3197, 4
        %v3199 = vmax.f32 %v3197, %v3198
        %v3200 = vrot.slane %v3199, 2
        %v3201 = vmax.f32 %v3199, %v3200
        %v3202 = vrot.slane %v3201, 1
        %v3203 = vmax.f32 %v3201, %v3202
        %v3204 = vmax.f32 %v820, %v822
        %v3205 = vrot.slane %v3204, 4
        %v3206 = vmax.f32 %v3204, %v3205
        %v3207 = vrot.slane %v3206, 2
        %v3208 = vmax.f32 %v3206, %v3207
        %v3209 = vrot.slane %v3208, 1
        %v3210 = vmax.f32 %v3208, %v3209
        %v3211 = vmax.f32 %v821, %v823
        %v3212 = vrot.slane %v3211, 4
        %v3213 = vmax.f32 %v3211, %v3212
        %v3214 = vrot.slane %v3213, 2
        %v3215 = vmax.f32 %v3213, %v3214
        %v3216 = vrot.slane %v3215, 1
        %v3217 = vmax.f32 %v3215, %v3216
        %v3218 = vmax.f32 %v824, %v826
        %v3219 = vrot.slane %v3218, 4
        %v3220 = vmax.f32 %v3218, %v3219
        %v3221 = vrot.slane %v3220, 2
        %v3222 = vmax.f32 %v3220, %v3221
        %v3223 = vrot.slane %v3222, 1
        %v3224 = vmax.f32 %v3222, %v3223
        %v3225 = vmax.f32 %v825, %v827
        %v3226 = vrot.slane %v3225, 4
        %v3227 = vmax.f32 %v3225, %v3226
        %v3228 = vrot.slane %v3227, 2
        %v3229 = vmax.f32 %v3227, %v3228
        %v3230 = vrot.slane %v3229, 1
        %v3231 = vmax.f32 %v3229, %v3230
        %v3232 = vmax.f32 %v828, %v830
        %v3233 = vrot.slane %v3232, 4
        %v3234 = vmax.f32 %v3232, %v3233
        %v3235 = vrot.slane %v3234, 2
        %v3236 = vmax.f32 %v3234, %v3235
        %v3237 = vrot.slane %v3236, 1
        %v3238 = vmax.f32 %v3236, %v3237
        %v3239 = vmax.f32 %v829, %v831
        %v3240 = vrot.slane %v3239, 4
        %v3241 = vmax.f32 %v3239, %v3240
        %v3242 = vrot.slane %v3241, 2
        %v3243 = vmax.f32 %v3241, %v3242
        %v3244 = vrot.slane %v3243, 1
        %v3245 = vmax.f32 %v3243, %v3244
        %v3246 = vmax.f32 %v832, %v834
        %v3247 = vrot.slane %v3246, 4
        %v3248 = vmax.f32 %v3246, %v3247
        %v3249 = vrot.slane %v3248, 2
        %v3250 = vmax.f32 %v3248, %v3249
        %v3251 = vrot.slane %v3250, 1
        %v3252 = vmax.f32 %v3250, %v3251
        %v3253 = vmax.f32 %v833, %v835
        %v3254 = vrot.slane %v3253, 4
        %v3255 = vmax.f32 %v3253, %v3254
        %v3256 = vrot.slane %v3255, 2
        %v3257 = vmax.f32 %v3255, %v3256
        %v3258 = vrot.slane %v3257, 1
        %v3259 = vmax.f32 %v3257, %v3258
        %v3260 = vmax.f32 %v836, %v838
        %v3261 = vrot.slane %v3260, 4
        %v3262 = vmax.f32 %v3260, %v3261
        %v3263 = vrot.slane %v3262, 2
        %v3264 = vmax.f32 %v3262, %v3263
        %v3265 = vrot.slane %v3264, 1
        %v3266 = vmax.f32 %v3264, %v3265
        %v3267 = vmax.f32 %v837, %v839
        %v3268 = vrot.slane %v3267, 4
        %v3269 = vmax.f32 %v3267, %v3268
        %v3270 = vrot.slane %v3269, 2
        %v3271 = vmax.f32 %v3269, %v3270
        %v3272 = vrot.slane %v3271, 1
        %v3273 = vmax.f32 %v3271, %v3272
        %v3274 = vmax.f32 %v840, %v842
        %v3275 = vrot.slane %v3274, 4
        %v3276 = vmax.f32 %v3274, %v3275
        %v3277 = vrot.slane %v3276, 2
        %v3278 = vmax.f32 %v3276, %v3277
        %v3279 = vrot.slane %v3278, 1
        %v3280 = vmax.f32 %v3278, %v3279
        %v3281 = vmax.f32 %v841, %v843
        %v3282 = vrot.slane %v3281, 4
        %v3283 = vmax.f32 %v3281, %v3282
        %v3284 = vrot.slane %v3283, 2
        %v3285 = vmax.f32 %v3283, %v3284
        %v3286 = vrot.slane %v3285, 1
        %v3287 = vmax.f32 %v3285, %v3286
        %v3288 = vmax.f32 %v844, %v846
        %v3289 = vrot.slane %v3288, 4
        %v3290 = vmax.f32 %v3288, %v3289
        %v3291 = vrot.slane %v3290, 2
        %v3292 = vmax.f32 %v3290, %v3291
        %v3293 = vrot.slane %v3292, 1
        %v3294 = vmax.f32 %v3292, %v3293
        %v3295 = vmax.f32 %v845, %v847
        %v3296 = vrot.slane %v3295, 4
        %v3297 = vmax.f32 %v3295, %v3296
        %v3298 = vrot.slane %v3297, 2
        %v3299 = vmax.f32 %v3297, %v3298
        %v3300 = vrot.slane %v3299, 1
        %v3301 = vmax.f32 %v3299, %v3300
        %v3302 = vmax.f32 %v848, %v850
        %v3303 = vrot.slane %v3302, 4
        %v3304 = vmax.f32 %v3302, %v3303
        %v3305 = vrot.slane %v3304, 2
        %v3306 = vmax.f32 %v3304, %v3305
        %v3307 = vrot.slane %v3306, 1
        %v3308 = vmax.f32 %v3306, %v3307
        %v3309 = vmax.f32 %v849, %v851
        %v3310 = vrot.slane %v3309, 4
        %v3311 = vmax.f32 %v3309, %v3310
        %v3312 = vrot.slane %v3311, 2
        %v3313 = vmax.f32 %v3311, %v3312
        %v3314 = vrot.slane %v3313, 1
        %v3315 = vmax.f32 %v3313, %v3314
        %v3316 = vmax.f32 %v852, %v854
        %v3317 = vrot.slane %v3316, 4
        %v3318 = vmax.f32 %v3316, %v3317
        %v3319 = vrot.slane %v3318, 2
        %v3320 = vmax.f32 %v3318, %v3319
        %v3321 = vrot.slane %v3320, 1
        %v3322 = vmax.f32 %v3320, %v3321
        %v3323 = vmax.f32 %v853, %v855
        %v3324 = vrot.slane %v3323, 4
        %v3325 = vmax.f32 %v3323, %v3324
        %v3326 = vrot.slane %v3325, 2
        %v3327 = vmax.f32 %v3325, %v3326
        %v3328 = vrot.slane %v3327, 1
        %v3329 = vmax.f32 %v3327, %v3328
        %v3330 = vmax.f32 %v856, %v858
        %v3331 = vrot.slane %v3330, 4
        %v3332 = vmax.f32 %v3330, %v3331
        %v3333 = vrot.slane %v3332, 2
        %v3334 = vmax.f32 %v3332, %v3333
        %v3335 = vrot.slane %v3334, 1
        %v3336 = vmax.f32 %v3334, %v3335
        %v3337 = vmax.f32 %v857, %v859
        %v3338 = vrot.slane %v3337, 4
        %v3339 = vmax.f32 %v3337, %v3338
        %v3340 = vrot.slane %v3339, 2
        %v3341 = vmax.f32 %v3339, %v3340
        %v3342 = vrot.slane %v3341, 1
        %v3343 = vmax.f32 %v3341, %v3342
        %v3344 = vmax.f32 %v860, %v862
        %v3345 = vrot.slane %v3344, 4
        %v3346 = vmax.f32 %v3344, %v3345
        %v3347 = vrot.slane %v3346, 2
        %v3348 = vmax.f32 %v3346, %v3347
        %v3349 = vrot.slane %v3348, 1
        %v3350 = vmax.f32 %v3348, %v3349
        %v3351 = vmax.f32 %v861, %v863
        %v3352 = vrot.slane %v3351, 4
        %v3353 = vmax.f32 %v3351, %v3352
        %v3354 = vrot.slane %v3353, 2
        %v3355 = vmax.f32 %v3353, %v3354
        %v3356 = vrot.slane %v3355, 1
        %v3357 = vmax.f32 %v3355, %v3356
        %v3358 = vmax.f32 %v864, %v866
        %v3359 = vrot.slane %v3358, 4
        %v3360 = vmax.f32 %v3358, %v3359
        %v3361 = vrot.slane %v3360, 2
        %v3362 = vmax.f32 %v3360, %v3361
        %v3363 = vrot.slane %v3362, 1
        %v3364 = vmax.f32 %v3362, %v3363
        %v3365 = vmax.f32 %v865, %v867
        %v3366 = vrot.slane %v3365, 4
        %v3367 = vmax.f32 %v3365, %v3366
        %v3368 = vrot.slane %v3367, 2
        %v3369 = vmax.f32 %v3367, %v3368
        %v3370 = vrot.slane %v3369, 1
        %v3371 = vmax.f32 %v3369, %v3370
        %v3372 = vmax.f32 %v868, %v870
        %v3373 = vrot.slane %v3372, 4
        %v3374 = vmax.f32 %v3372, %v3373
        %v3375 = vrot.slane %v3374, 2
        %v3376 = vmax.f32 %v3374, %v3375
        %v3377 = vrot.slane %v3376, 1
        %v3378 = vmax.f32 %v3376, %v3377
        %v3379 = vmax.f32 %v869, %v871
        %v3380 = vrot.slane %v3379, 4
        %v3381 = vmax.f32 %v3379, %v3380
        %v3382 = vrot.slane %v3381, 2
        %v3383 = vmax.f32 %v3381, %v3382
        %v3384 = vrot.slane %v3383, 1
        %v3385 = vmax.f32 %v3383, %v3384
        %v3386 = vmax.f32 %v872, %v874
        %v3387 = vrot.slane %v3386, 4
        %v3388 = vmax.f32 %v3386, %v3387
        %v3389 = vrot.slane %v3388, 2
        %v3390 = vmax.f32 %v3388, %v3389
        %v3391 = vrot.slane %v3390, 1
        %v3392 = vmax.f32 %v3390, %v3391
        %v3393 = vmax.f32 %v873, %v875
        %v3394 = vrot.slane %v3393, 4
        %v3395 = vmax.f32 %v3393, %v3394
        %v3396 = vrot.slane %v3395, 2
        %v3397 = vmax.f32 %v3395, %v3396
        %v3398 = vrot.slane %v3397, 1
        %v3399 = vmax.f32 %v3397, %v3398
        %v3400 = vmax.f32 %v876, %v878
        %v3401 = vrot.slane %v3400, 4
        %v3402 = vmax.f32 %v3400, %v3401
        %v3403 = vrot.slane %v3402, 2
        %v3404 = vmax.f32 %v3402, %v3403
        %v3405 = vrot.slane %v3404, 1
        %v3406 = vmax.f32 %v3404, %v3405
        %v3407 = vmax.f32 %v877, %v879
        %v3408 = vrot.slane %v3407, 4
        %v3409 = vmax.f32 %v3407, %v3408
        %v3410 = vrot.slane %v3409, 2
        %v3411 = vmax.f32 %v3409, %v3410
        %v3412 = vrot.slane %v3411, 1
        %v3413 = vmax.f32 %v3411, %v3412
        %v3414 = vmax.f32 %v880, %v882
        %v3415 = vrot.slane %v3414, 4
        %v3416 = vmax.f32 %v3414, %v3415
        %v3417 = vrot.slane %v3416, 2
        %v3418 = vmax.f32 %v3416, %v3417
        %v3419 = vrot.slane %v3418, 1
        %v3420 = vmax.f32 %v3418, %v3419
        %v3421 = vmax.f32 %v881, %v883
        %v3422 = vrot.slane %v3421, 4
        %v3423 = vmax.f32 %v3421, %v3422
        %v3424 = vrot.slane %v3423, 2
        %v3425 = vmax.f32 %v3423, %v3424
        %v3426 = vrot.slane %v3425, 1
        %v3427 = vmax.f32 %v3425, %v3426
        %v3428 = vmax.f32 %v884, %v886
        %v3429 = vrot.slane %v3428, 4
        %v3430 = vmax.f32 %v3428, %v3429
        %v3431 = vrot.slane %v3430, 2
        %v3432 = vmax.f32 %v3430, %v3431
        %v3433 = vrot.slane %v3432, 1
        %v3434 = vmax.f32 %v3432, %v3433
        %v3435 = vmax.f32 %v885, %v887
        %v3436 = vrot.slane %v3435, 4
        %v3437 = vmax.f32 %v3435, %v3436
        %v3438 = vrot.slane %v3437, 2
        %v3439 = vmax.f32 %v3437, %v3438
        %v3440 = vrot.slane %v3439, 1
        %v3441 = vmax.f32 %v3439, %v3440
        %v3442 = vmax.f32 %v888, %v890
        %v3443 = vrot.slane %v3442, 4
        %v3444 = vmax.f32 %v3442, %v3443
        %v3445 = vrot.slane %v3444, 2
        %v3446 = vmax.f32 %v3444, %v3445
        %v3447 = vrot.slane %v3446, 1
        %v3448 = vmax.f32 %v3446, %v3447
        %v3449 = vmax.f32 %v889, %v891
        %v3450 = vrot.slane %v3449, 4
        %v3451 = vmax.f32 %v3449, %v3450
        %v3452 = vrot.slane %v3451, 2
        %v3453 = vmax.f32 %v3451, %v3452
        %v3454 = vrot.slane %v3453, 1
        %v3455 = vmax.f32 %v3453, %v3454
        %v3456 = vmax.f32 %v892, %v894
        %v3457 = vrot.slane %v3456, 4
        %v3458 = vmax.f32 %v3456, %v3457
        %v3459 = vrot.slane %v3458, 2
        %v3460 = vmax.f32 %v3458, %v3459
        %v3461 = vrot.slane %v3460, 1
        %v3462 = vmax.f32 %v3460, %v3461
        %v3463 = vmax.f32 %v893, %v895
        %v3464 = vrot.slane %v3463, 4
        %v3465 = vmax.f32 %v3463, %v3464
        %v3466 = vrot.slane %v3465, 2
        %v3467 = vmax.f32 %v3465, %v3466
        %v3468 = vrot.slane %v3467, 1
        %v3469 = vmax.f32 %v3467, %v3468
        %v3470 = vmax.f32 %v896, %v898
        %v3471 = vrot.slane %v3470, 4
        %v3472 = vmax.f32 %v3470, %v3471
        %v3473 = vrot.slane %v3472, 2
        %v3474 = vmax.f32 %v3472, %v3473
        %v3475 = vrot.slane %v3474, 1
        %v3476 = vmax.f32 %v3474, %v3475
        %v3477 = vmax.f32 %v897, %v899
        %v3478 = vrot.slane %v3477, 4
        %v3479 = vmax.f32 %v3477, %v3478
        %v3480 = vrot.slane %v3479, 2
        %v3481 = vmax.f32 %v3479, %v3480
        %v3482 = vrot.slane %v3481, 1
        %v3483 = vmax.f32 %v3481, %v3482
        %v3484 = vmax.f32 %v900, %v902
        %v3485 = vrot.slane %v3484, 4
        %v3486 = vmax.f32 %v3484, %v3485
        %v3487 = vrot.slane %v3486, 2
        %v3488 = vmax.f32 %v3486, %v3487
        %v3489 = vrot.slane %v3488, 1
        %v3490 = vmax.f32 %v3488, %v3489
        %v3491 = vmax.f32 %v901, %v903
        %v3492 = vrot.slane %v3491, 4
        %v3493 = vmax.f32 %v3491, %v3492
        %v3494 = vrot.slane %v3493, 2
        %v3495 = vmax.f32 %v3493, %v3494
        %v3496 = vrot.slane %v3495, 1
        %v3497 = vmax.f32 %v3495, %v3496
        %v3498 = vmax.f32 %v904, %v906
        %v3499 = vrot.slane %v3498, 4
        %v3500 = vmax.f32 %v3498, %v3499
        %v3501 = vrot.slane %v3500, 2
        %v3502 = vmax.f32 %v3500, %v3501
        %v3503 = vrot.slane %v3502, 1
        %v3504 = vmax.f32 %v3502, %v3503
        %v3505 = vmax.f32 %v905, %v907
        %v3506 = vrot.slane %v3505, 4
        %v3507 = vmax.f32 %v3505, %v3506
        %v3508 = vrot.slane %v3507, 2
        %v3509 = vmax.f32 %v3507, %v3508
        %v3510 = vrot.slane %v3509, 1
        %v3511 = vmax.f32 %v3509, %v3510
        %v3512 = vmax.f32 %v908, %v910
        %v3513 = vrot.slane %v3512, 4
        %v3514 = vmax.f32 %v3512, %v3513
        %v3515 = vrot.slane %v3514, 2
        %v3516 = vmax.f32 %v3514, %v3515
        %v3517 = vrot.slane %v3516, 1
        %v3518 = vmax.f32 %v3516, %v3517
        %v3519 = vmax.f32 %v909, %v911
        %v3520 = vrot.slane %v3519, 4
        %v3521 = vmax.f32 %v3519, %v3520
        %v3522 = vrot.slane %v3521, 2
        %v3523 = vmax.f32 %v3521, %v3522
        %v3524 = vrot.slane %v3523, 1
        %v3525 = vmax.f32 %v3523, %v3524
        %v3526 = vmax.f32 %v912, %v914
        %v3527 = vrot.slane %v3526, 4
        %v3528 = vmax.f32 %v3526, %v3527
        %v3529 = vrot.slane %v3528, 2
        %v3530 = vmax.f32 %v3528, %v3529
        %v3531 = vrot.slane %v3530, 1
        %v3532 = vmax.f32 %v3530, %v3531
        %v3533 = vmax.f32 %v913, %v915
        %v3534 = vrot.slane %v3533, 4
        %v3535 = vmax.f32 %v3533, %v3534
        %v3536 = vrot.slane %v3535, 2
        %v3537 = vmax.f32 %v3535, %v3536
        %v3538 = vrot.slane %v3537, 1
        %v3539 = vmax.f32 %v3537, %v3538
        %v3540 = vmax.f32 %v916, %v918
        %v3541 = vrot.slane %v3540, 4
        %v3542 = vmax.f32 %v3540, %v3541
        %v3543 = vrot.slane %v3542, 2
        %v3544 = vmax.f32 %v3542, %v3543
        %v3545 = vrot.slane %v3544, 1
        %v3546 = vmax.f32 %v3544, %v3545
        %v3547 = vmax.f32 %v917, %v919
        %v3548 = vrot.slane %v3547, 4
        %v3549 = vmax.f32 %v3547, %v3548
        %v3550 = vrot.slane %v3549, 2
        %v3551 = vmax.f32 %v3549, %v3550
        %v3552 = vrot.slane %v3551, 1
        %v3553 = vmax.f32 %v3551, %v3552
        %v3554 = vmax.f32 %v920, %v922
        %v3555 = vrot.slane %v3554, 4
        %v3556 = vmax.f32 %v3554, %v3555
        %v3557 = vrot.slane %v3556, 2
        %v3558 = vmax.f32 %v3556, %v3557
        %v3559 = vrot.slane %v3558, 1
        %v3560 = vmax.f32 %v3558, %v3559
        %v3561 = vmax.f32 %v921, %v923
        %v3562 = vrot.slane %v3561, 4
        %v3563 = vmax.f32 %v3561, %v3562
        %v3564 = vrot.slane %v3563, 2
        %v3565 = vmax.f32 %v3563, %v3564
        %v3566 = vrot.slane %v3565, 1
        %v3567 = vmax.f32 %v3565, %v3566
        %v3568 = vmax.f32 %v924, %v926
        %v3569 = vrot.slane %v3568, 4
        %v3570 = vmax.f32 %v3568, %v3569
        %v3571 = vrot.slane %v3570, 2
        %v3572 = vmax.f32 %v3570, %v3571
        %v3573 = vrot.slane %v3572, 1
        %v3574 = vmax.f32 %v3572, %v3573
        %v3575 = vmax.f32 %v925, %v927
        %v3576 = vrot.slane %v3575, 4
        %v3577 = vmax.f32 %v3575, %v3576
        %v3578 = vrot.slane %v3577, 2
        %v3579 = vmax.f32 %v3577, %v3578
        %v3580 = vrot.slane %v3579, 1
        %v3581 = vmax.f32 %v3579, %v3580
        %v3582 = vmax.f32 %v928, %v930
        %v3583 = vrot.slane %v3582, 4
        %v3584 = vmax.f32 %v3582, %v3583
        %v3585 = vrot.slane %v3584, 2
        %v3586 = vmax.f32 %v3584, %v3585
        %v3587 = vrot.slane %v3586, 1
        %v3588 = vmax.f32 %v3586, %v3587
        %v3589 = vmax.f32 %v929, %v931
        %v3590 = vrot.slane %v3589, 4
        %v3591 = vmax.f32 %v3589, %v3590
        %v3592 = vrot.slane %v3591, 2
        %v3593 = vmax.f32 %v3591, %v3592
        %v3594 = vrot.slane %v3593, 1
        %v3595 = vmax.f32 %v3593, %v3594
        %v3596 = vmax.f32 %v932, %v934
        %v3597 = vrot.slane %v3596, 4
        %v3598 = vmax.f32 %v3596, %v3597
        %v3599 = vrot.slane %v3598, 2
        %v3600 = vmax.f32 %v3598, %v3599
        %v3601 = vrot.slane %v3600, 1
        %v3602 = vmax.f32 %v3600, %v3601
        %v3603 = vmax.f32 %v933, %v935
        %v3604 = vrot.slane %v3603, 4
        %v3605 = vmax.f32 %v3603, %v3604
        %v3606 = vrot.slane %v3605, 2
        %v3607 = vmax.f32 %v3605, %v3606
        %v3608 = vrot.slane %v3607, 1
        %v3609 = vmax.f32 %v3607, %v3608
        %v3610 = vmax.f32 %v936, %v938
        %v3611 = vrot.slane %v3610, 4
        %v3612 = vmax.f32 %v3610, %v3611
        %v3613 = vrot.slane %v3612, 2
        %v3614 = vmax.f32 %v3612, %v3613
        %v3615 = vrot.slane %v3614, 1
        %v3616 = vmax.f32 %v3614, %v3615
        %v3617 = vmax.f32 %v937, %v939
        %v3618 = vrot.slane %v3617, 4
        %v3619 = vmax.f32 %v3617, %v3618
        %v3620 = vrot.slane %v3619, 2
        %v3621 = vmax.f32 %v3619, %v3620
        %v3622 = vrot.slane %v3621, 1
        %v3623 = vmax.f32 %v3621, %v3622
        %v3624 = vmax.f32 %v940, %v942
        %v3625 = vrot.slane %v3624, 4
        %v3626 = vmax.f32 %v3624, %v3625
        %v3627 = vrot.slane %v3626, 2
        %v3628 = vmax.f32 %v3626, %v3627
        %v3629 = vrot.slane %v3628, 1
        %v3630 = vmax.f32 %v3628, %v3629
        %v3631 = vmax.f32 %v941, %v943
        %v3632 = vrot.slane %v3631, 4
        %v3633 = vmax.f32 %v3631, %v3632
        %v3634 = vrot.slane %v3633, 2
        %v3635 = vmax.f32 %v3633, %v3634
        %v3636 = vrot.slane %v3635, 1
        %v3637 = vmax.f32 %v3635, %v3636
        %v3638 = vmax.f32 %v944, %v946
        %v3639 = vrot.slane %v3638, 4
        %v3640 = vmax.f32 %v3638, %v3639
        %v3641 = vrot.slane %v3640, 2
        %v3642 = vmax.f32 %v3640, %v3641
        %v3643 = vrot.slane %v3642, 1
        %v3644 = vmax.f32 %v3642, %v3643
        %v3645 = vmax.f32 %v945, %v947
        %v3646 = vrot.slane %v3645, 4
        %v3647 = vmax.f32 %v3645, %v3646
        %v3648 = vrot.slane %v3647, 2
        %v3649 = vmax.f32 %v3647, %v3648
        %v3650 = vrot.slane %v3649, 1
        %v3651 = vmax.f32 %v3649, %v3650
        %v3652 = vmax.f32 %v948, %v950
        %v3653 = vrot.slane %v3652, 4
        %v3654 = vmax.f32 %v3652, %v3653
        %v3655 = vrot.slane %v3654, 2
        %v3656 = vmax.f32 %v3654, %v3655
        %v3657 = vrot.slane %v3656, 1
        %v3658 = vmax.f32 %v3656, %v3657
        %v3659 = vmax.f32 %v949, %v951
        %v3660 = vrot.slane %v3659, 4
        %v3661 = vmax.f32 %v3659, %v3660
        %v3662 = vrot.slane %v3661, 2
        %v3663 = vmax.f32 %v3661, %v3662
        %v3664 = vrot.slane %v3663, 1
        %v3665 = vmax.f32 %v3663, %v3664
        %v3666 = vmax.f32 %v952, %v954
        %v3667 = vrot.slane %v3666, 4
        %v3668 = vmax.f32 %v3666, %v3667
        %v3669 = vrot.slane %v3668, 2
        %v3670 = vmax.f32 %v3668, %v3669
        %v3671 = vrot.slane %v3670, 1
        %v3672 = vmax.f32 %v3670, %v3671
        %v3673 = vmax.f32 %v953, %v955
        %v3674 = vrot.slane %v3673, 4
        %v3675 = vmax.f32 %v3673, %v3674
        %v3676 = vrot.slane %v3675, 2
        %v3677 = vmax.f32 %v3675, %v3676
        %v3678 = vrot.slane %v3677, 1
        %v3679 = vmax.f32 %v3677, %v3678
        %v3680 = vmax.f32 %v956, %v958
        %v3681 = vrot.slane %v3680, 4
        %v3682 = vmax.f32 %v3680, %v3681
        %v3683 = vrot.slane %v3682, 2
        %v3684 = vmax.f32 %v3682, %v3683
        %v3685 = vrot.slane %v3684, 1
        %v3686 = vmax.f32 %v3684, %v3685
        %v3687 = vmax.f32 %v957, %v959
        %v3688 = vrot.slane %v3687, 4
        %v3689 = vmax.f32 %v3687, %v3688
        %v3690 = vrot.slane %v3689, 2
        %v3691 = vmax.f32 %v3689, %v3690
        %v3692 = vrot.slane %v3691, 1
        %v3693 = vmax.f32 %v3691, %v3692
        %v3694 = vmax.f32 %v960, %v962
        %v3695 = vrot.slane %v3694, 4
        %v3696 = vmax.f32 %v3694, %v3695
        %v3697 = vrot.slane %v3696, 2
        %v3698 = vmax.f32 %v3696, %v3697
        %v3699 = vrot.slane %v3698, 1
        %v3700 = vmax.f32 %v3698, %v3699
        %v3701 = vmax.f32 %v961, %v963
        %v3702 = vrot.slane %v3701, 4
        %v3703 = vmax.f32 %v3701, %v3702
        %v3704 = vrot.slane %v3703, 2
        %v3705 = vmax.f32 %v3703, %v3704
        %v3706 = vrot.slane %v3705, 1
        %v3707 = vmax.f32 %v3705, %v3706
        %v3708 = vmax.f32 %v964, %v966
        %v3709 = vrot.slane %v3708, 4
        %v3710 = vmax.f32 %v3708, %v3709
        %v3711 = vrot.slane %v3710, 2
        %v3712 = vmax.f32 %v3710, %v3711
        %v3713 = vrot.slane %v3712, 1
        %v3714 = vmax.f32 %v3712, %v3713
        %v3715 = vmax.f32 %v965, %v967
        %v3716 = vrot.slane %v3715, 4
        %v3717 = vmax.f32 %v3715, %v3716
        %v3718 = vrot.slane %v3717, 2
        %v3719 = vmax.f32 %v3717, %v3718
        %v3720 = vrot.slane %v3719, 1
        %v3721 = vmax.f32 %v3719, %v3720
        %v3722 = vmax.f32 %v968, %v970
        %v3723 = vrot.slane %v3722, 4
        %v3724 = vmax.f32 %v3722, %v3723
        %v3725 = vrot.slane %v3724, 2
        %v3726 = vmax.f32 %v3724, %v3725
        %v3727 = vrot.slane %v3726, 1
        %v3728 = vmax.f32 %v3726, %v3727
        %v3729 = vmax.f32 %v969, %v971
        %v3730 = vrot.slane %v3729, 4
        %v3731 = vmax.f32 %v3729, %v3730
        %v3732 = vrot.slane %v3731, 2
        %v3733 = vmax.f32 %v3731, %v3732
        %v3734 = vrot.slane %v3733, 1
        %v3735 = vmax.f32 %v3733, %v3734
        %v3736 = vmax.f32 %v972, %v974
        %v3737 = vrot.slane %v3736, 4
        %v3738 = vmax.f32 %v3736, %v3737
        %v3739 = vrot.slane %v3738, 2
        %v3740 = vmax.f32 %v3738, %v3739
        %v3741 = vrot.slane %v3740, 1
        %v3742 = vmax.f32 %v3740, %v3741
        %v3743 = vmax.f32 %v973, %v975
        %v3744 = vrot.slane %v3743, 4
        %v3745 = vmax.f32 %v3743, %v3744
        %v3746 = vrot.slane %v3745, 2
        %v3747 = vmax.f32 %v3745, %v3746
        %v3748 = vrot.slane %v3747, 1
        %v3749 = vmax.f32 %v3747, %v3748
        %v3750 = vmax.f32 %v976, %v978
        %v3751 = vrot.slane %v3750, 4
        %v3752 = vmax.f32 %v3750, %v3751
        %v3753 = vrot.slane %v3752, 2
        %v3754 = vmax.f32 %v3752, %v3753
        %v3755 = vrot.slane %v3754, 1
        %v3756 = vmax.f32 %v3754, %v3755
        %v3757 = vmax.f32 %v977, %v979
        %v3758 = vrot.slane %v3757, 4
        %v3759 = vmax.f32 %v3757, %v3758
        %v3760 = vrot.slane %v3759, 2
        %v3761 = vmax.f32 %v3759, %v3760
        %v3762 = vrot.slane %v3761, 1
        %v3763 = vmax.f32 %v3761, %v3762
        %v3764 = vmax.f32 %v980, %v982
        %v3765 = vrot.slane %v3764, 4
        %v3766 = vmax.f32 %v3764, %v3765
        %v3767 = vrot.slane %v3766, 2
        %v3768 = vmax.f32 %v3766, %v3767
        %v3769 = vrot.slane %v3768, 1
        %v3770 = vmax.f32 %v3768, %v3769
        %v3771 = vmax.f32 %v981, %v983
        %v3772 = vrot.slane %v3771, 4
        %v3773 = vmax.f32 %v3771, %v3772
        %v3774 = vrot.slane %v3773, 2
        %v3775 = vmax.f32 %v3773, %v3774
        %v3776 = vrot.slane %v3775, 1
        %v3777 = vmax.f32 %v3775, %v3776
        %v3778 = vmax.f32 %v984, %v986
        %v3779 = vrot.slane %v3778, 4
        %v3780 = vmax.f32 %v3778, %v3779
        %v3781 = vrot.slane %v3780, 2
        %v3782 = vmax.f32 %v3780, %v3781
        %v3783 = vrot.slane %v3782, 1
        %v3784 = vmax.f32 %v3782, %v3783
        %v3785 = vmax.f32 %v985, %v987
        %v3786 = vrot.slane %v3785, 4
        %v3787 = vmax.f32 %v3785, %v3786
        %v3788 = vrot.slane %v3787, 2
        %v3789 = vmax.f32 %v3787, %v3788
        %v3790 = vrot.slane %v3789, 1
        %v3791 = vmax.f32 %v3789, %v3790
        %v3792 = vmax.f32 %v988, %v990
        %v3793 = vrot.slane %v3792, 4
        %v3794 = vmax.f32 %v3792, %v3793
        %v3795 = vrot.slane %v3794, 2
        %v3796 = vmax.f32 %v3794, %v3795
        %v3797 = vrot.slane %v3796, 1
        %v3798 = vmax.f32 %v3796, %v3797
        %v3799 = vmax.f32 %v989, %v991
        %v3800 = vrot.slane %v3799, 4
        %v3801 = vmax.f32 %v3799, %v3800
        %v3802 = vrot.slane %v3801, 2
        %v3803 = vmax.f32 %v3801, %v3802
        %v3804 = vrot.slane %v3803, 1
        %v3805 = vmax.f32 %v3803, %v3804
        %v3806 = vmax.f32 %v992, %v994
        %v3807 = vrot.slane %v3806, 4
        %v3808 = vmax.f32 %v3806, %v3807
        %v3809 = vrot.slane %v3808, 2
        %v3810 = vmax.f32 %v3808, %v3809
        %v3811 = vrot.slane %v3810, 1
        %v3812 = vmax.f32 %v3810, %v3811
        %v3813 = vmax.f32 %v993, %v995
        %v3814 = vrot.slane %v3813, 4
        %v3815 = vmax.f32 %v3813, %v3814
        %v3816 = vrot.slane %v3815, 2
        %v3817 = vmax.f32 %v3815, %v3816
        %v3818 = vrot.slane %v3817, 1
        %v3819 = vmax.f32 %v3817, %v3818
        %v3820 = vmax.f32 %v996, %v998
        %v3821 = vrot.slane %v3820, 4
        %v3822 = vmax.f32 %v3820, %v3821
        %v3823 = vrot.slane %v3822, 2
        %v3824 = vmax.f32 %v3822, %v3823
        %v3825 = vrot.slane %v3824, 1
        %v3826 = vmax.f32 %v3824, %v3825
        %v3827 = vmax.f32 %v997, %v999
        %v3828 = vrot.slane %v3827, 4
        %v3829 = vmax.f32 %v3827, %v3828
        %v3830 = vrot.slane %v3829, 2
        %v3831 = vmax.f32 %v3829, %v3830
        %v3832 = vrot.slane %v3831, 1
        %v3833 = vmax.f32 %v3831, %v3832
        %v3834 = vmax.f32 %v1000, %v1002
        %v3835 = vrot.slane %v3834, 4
        %v3836 = vmax.f32 %v3834, %v3835
        %v3837 = vrot.slane %v3836, 2
        %v3838 = vmax.f32 %v3836, %v3837
        %v3839 = vrot.slane %v3838, 1
        %v3840 = vmax.f32 %v3838, %v3839
        %v3841 = vmax.f32 %v1001, %v1003
        %v3842 = vrot.slane %v3841, 4
        %v3843 = vmax.f32 %v3841, %v3842
        %v3844 = vrot.slane %v3843, 2
        %v3845 = vmax.f32 %v3843, %v3844
        %v3846 = vrot.slane %v3845, 1
        %v3847 = vmax.f32 %v3845, %v3846
        %v3848 = vmax.f32 %v1004, %v1006
        %v3849 = vrot.slane %v3848, 4
        %v3850 = vmax.f32 %v3848, %v3849
        %v3851 = vrot.slane %v3850, 2
        %v3852 = vmax.f32 %v3850, %v3851
        %v3853 = vrot.slane %v3852, 1
        %v3854 = vmax.f32 %v3852, %v3853
        %v3855 = vmax.f32 %v1005, %v1007
        %v3856 = vrot.slane %v3855, 4
        %v3857 = vmax.f32 %v3855, %v3856
        %v3858 = vrot.slane %v3857, 2
        %v3859 = vmax.f32 %v3857, %v3858
        %v3860 = vrot.slane %v3859, 1
        %v3861 = vmax.f32 %v3859, %v3860
        %v3862 = vmax.f32 %v1008, %v1010
        %v3863 = vrot.slane %v3862, 4
        %v3864 = vmax.f32 %v3862, %v3863
        %v3865 = vrot.slane %v3864, 2
        %v3866 = vmax.f32 %v3864, %v3865
        %v3867 = vrot.slane %v3866, 1
        %v3868 = vmax.f32 %v3866, %v3867
        %v3869 = vmax.f32 %v1009, %v1011
        %v3870 = vrot.slane %v3869, 4
        %v3871 = vmax.f32 %v3869, %v3870
        %v3872 = vrot.slane %v3871, 2
        %v3873 = vmax.f32 %v3871, %v3872
        %v3874 = vrot.slane %v3873, 1
        %v3875 = vmax.f32 %v3873, %v3874
        %v3876 = vmax.f32 %v1012, %v1014
        %v3877 = vrot.slane %v3876, 4
        %v3878 = vmax.f32 %v3876, %v3877
        %v3879 = vrot.slane %v3878, 2
        %v3880 = vmax.f32 %v3878, %v3879
        %v3881 = vrot.slane %v3880, 1
        %v3882 = vmax.f32 %v3880, %v3881
        %v3883 = vmax.f32 %v1013, %v1015
        %v3884 = vrot.slane %v3883, 4
        %v3885 = vmax.f32 %v3883, %v3884
        %v3886 = vrot.slane %v3885, 2
        %v3887 = vmax.f32 %v3885, %v3886
        %v3888 = vrot.slane %v3887, 1
        %v3889 = vmax.f32 %v3887, %v3888
        %v3890 = vmax.f32 %v1016, %v1018
        %v3891 = vrot.slane %v3890, 4
        %v3892 = vmax.f32 %v3890, %v3891
        %v3893 = vrot.slane %v3892, 2
        %v3894 = vmax.f32 %v3892, %v3893
        %v3895 = vrot.slane %v3894, 1
        %v3896 = vmax.f32 %v3894, %v3895
        %v3897 = vmax.f32 %v1017, %v1019
        %v3898 = vrot.slane %v3897, 4
        %v3899 = vmax.f32 %v3897, %v3898
        %v3900 = vrot.slane %v3899, 2
        %v3901 = vmax.f32 %v3899, %v3900
        %v3902 = vrot.slane %v3901, 1
        %v3903 = vmax.f32 %v3901, %v3902
        %v3904 = vmax.f32 %v1020, %v1022
        %v3905 = vrot.slane %v3904, 4
        %v3906 = vmax.f32 %v3904, %v3905
        %v3907 = vrot.slane %v3906, 2
        %v3908 = vmax.f32 %v3906, %v3907
        %v3909 = vrot.slane %v3908, 1
        %v3910 = vmax.f32 %v3908, %v3909
        %v3911 = vmax.f32 %v1021, %v1023
        %v3912 = vrot.slane %v3911, 4
        %v3913 = vmax.f32 %v3911, %v3912
        %v3914 = vrot.slane %v3913, 2
        %v3915 = vmax.f32 %v3913, %v3914
        %v3916 = vrot.slane %v3915, 1
        %v3917 = vmax.f32 %v3915, %v3916
        %v3918 = vmax.f32 %v1024, %v1026
        %v3919 = vrot.slane %v3918, 4
        %v3920 = vmax.f32 %v3918, %v3919
        %v3921 = vrot.slane %v3920, 2
        %v3922 = vmax.f32 %v3920, %v3921
        %v3923 = vrot.slane %v3922, 1
        %v3924 = vmax.f32 %v3922, %v3923
        %v3925 = vmax.f32 %v1025, %v1027
        %v3926 = vrot.slane %v3925, 4
        %v3927 = vmax.f32 %v3925, %v3926
        %v3928 = vrot.slane %v3927, 2
        %v3929 = vmax.f32 %v3927, %v3928
        %v3930 = vrot.slane %v3929, 1
        %v3931 = vmax.f32 %v3929, %v3930
        %v3932 = vmax.f32 %v1028, %v1030
        %v3933 = vrot.slane %v3932, 4
        %v3934 = vmax.f32 %v3932, %v3933
        %v3935 = vrot.slane %v3934, 2
        %v3936 = vmax.f32 %v3934, %v3935
        %v3937 = vrot.slane %v3936, 1
        %v3938 = vmax.f32 %v3936, %v3937
        %v3939 = vmax.f32 %v1029, %v1031
        %v3940 = vrot.slane %v3939, 4
        %v3941 = vmax.f32 %v3939, %v3940
        %v3942 = vrot.slane %v3941, 2
        %v3943 = vmax.f32 %v3941, %v3942
        %v3944 = vrot.slane %v3943, 1
        %v3945 = vmax.f32 %v3943, %v3944
        %v3946 = vmax.f32 %v1032, %v1034
        %v3947 = vrot.slane %v3946, 4
        %v3948 = vmax.f32 %v3946, %v3947
        %v3949 = vrot.slane %v3948, 2
        %v3950 = vmax.f32 %v3948, %v3949
        %v3951 = vrot.slane %v3950, 1
        %v3952 = vmax.f32 %v3950, %v3951
        %v3953 = vmax.f32 %v1033, %v1035
        %v3954 = vrot.slane %v3953, 4
        %v3955 = vmax.f32 %v3953, %v3954
        %v3956 = vrot.slane %v3955, 2
        %v3957 = vmax.f32 %v3955, %v3956
        %v3958 = vrot.slane %v3957, 1
        %v3959 = vmax.f32 %v3957, %v3958
        %v3960 = vmax.f32 %v1036, %v1038
        %v3961 = vrot.slane %v3960, 4
        %v3962 = vmax.f32 %v3960, %v3961
        %v3963 = vrot.slane %v3962, 2
        %v3964 = vmax.f32 %v3962, %v3963
        %v3965 = vrot.slane %v3964, 1
        %v3966 = vmax.f32 %v3964, %v3965
        %v3967 = vmax.f32 %v1037, %v1039
        %v3968 = vrot.slane %v3967, 4
        %v3969 = vmax.f32 %v3967, %v3968
        %v3970 = vrot.slane %v3969, 2
        %v3971 = vmax.f32 %v3969, %v3970
        %v3972 = vrot.slane %v3971, 1
        %v3973 = vmax.f32 %v3971, %v3972
        %v3974 = vmax.f32 %v1040, %v1042
        %v3975 = vrot.slane %v3974, 4
        %v3976 = vmax.f32 %v3974, %v3975
        %v3977 = vrot.slane %v3976, 2
        %v3978 = vmax.f32 %v3976, %v3977
        %v3979 = vrot.slane %v3978, 1
        %v3980 = vmax.f32 %v3978, %v3979
        %v3981 = vmax.f32 %v1041, %v1043
        %v3982 = vrot.slane %v3981, 4
        %v3983 = vmax.f32 %v3981, %v3982
        %v3984 = vrot.slane %v3983, 2
        %v3985 = vmax.f32 %v3983, %v3984
        %v3986 = vrot.slane %v3985, 1
        %v3987 = vmax.f32 %v3985, %v3986
        %v3988 = vmax.f32 %v1044, %v1046
        %v3989 = vrot.slane %v3988, 4
        %v3990 = vmax.f32 %v3988, %v3989
        %v3991 = vrot.slane %v3990, 2
        %v3992 = vmax.f32 %v3990, %v3991
        %v3993 = vrot.slane %v3992, 1
        %v3994 = vmax.f32 %v3992, %v3993
        %v3995 = vmax.f32 %v1045, %v1047
        %v3996 = vrot.slane %v3995, 4
        %v3997 = vmax.f32 %v3995, %v3996
        %v3998 = vrot.slane %v3997, 2
        %v3999 = vmax.f32 %v3997, %v3998
        %v4000 = vrot.slane %v3999, 1
        %v4001 = vmax.f32 %v3999, %v4000
        %v4002 = vmax.f32 %v1048, %v1050
        %v4003 = vrot.slane %v4002, 4
        %v4004 = vmax.f32 %v4002, %v4003
        %v4005 = vrot.slane %v4004, 2
        %v4006 = vmax.f32 %v4004, %v4005
        %v4007 = vrot.slane %v4006, 1
        %v4008 = vmax.f32 %v4006, %v4007
        %v4009 = vmax.f32 %v1049, %v1051
        %v4010 = vrot.slane %v4009, 4
        %v4011 = vmax.f32 %v4009, %v4010
        %v4012 = vrot.slane %v4011, 2
        %v4013 = vmax.f32 %v4011, %v4012
        %v4014 = vrot.slane %v4013, 1
        %v4015 = vmax.f32 %v4013, %v4014
        %v4016 = vmax.f32 %v1052, %v1054
        %v4017 = vrot.slane %v4016, 4
        %v4018 = vmax.f32 %v4016, %v4017
        %v4019 = vrot.slane %v4018, 2
        %v4020 = vmax.f32 %v4018, %v4019
        %v4021 = vrot.slane %v4020, 1
        %v4022 = vmax.f32 %v4020, %v4021
        %v4023 = vmax.f32 %v1053, %v1055
        %v4024 = vrot.slane %v4023, 4
        %v4025 = vmax.f32 %v4023, %v4024
        %v4026 = vrot.slane %v4025, 2
        %v4027 = vmax.f32 %v4025, %v4026
        %v4028 = vrot.slane %v4027, 1
        %v4029 = vmax.f32 %v4027, %v4028
        %v4030 = vmax.f32 %v1056, %v1058
        %v4031 = vrot.slane %v4030, 4
        %v4032 = vmax.f32 %v4030, %v4031
        %v4033 = vrot.slane %v4032, 2
        %v4034 = vmax.f32 %v4032, %v4033
        %v4035 = vrot.slane %v4034, 1
        %v4036 = vmax.f32 %v4034, %v4035
        %v4037 = vmax.f32 %v1057, %v1059
        %v4038 = vrot.slane %v4037, 4
        %v4039 = vmax.f32 %v4037, %v4038
        %v4040 = vrot.slane %v4039, 2
        %v4041 = vmax.f32 %v4039, %v4040
        %v4042 = vrot.slane %v4041, 1
        %v4043 = vmax.f32 %v4041, %v4042
        %v4044 = vmax.f32 %v1060, %v1062
        %v4045 = vrot.slane %v4044, 4
        %v4046 = vmax.f32 %v4044, %v4045
        %v4047 = vrot.slane %v4046, 2
        %v4048 = vmax.f32 %v4046, %v4047
        %v4049 = vrot.slane %v4048, 1
        %v4050 = vmax.f32 %v4048, %v4049
        %v4051 = vmax.f32 %v1061, %v1063
        %v4052 = vrot.slane %v4051, 4
        %v4053 = vmax.f32 %v4051, %v4052
        %v4054 = vrot.slane %v4053, 2
        %v4055 = vmax.f32 %v4053, %v4054
        %v4056 = vrot.slane %v4055, 1
        %v4057 = vmax.f32 %v4055, %v4056
        %v4058 = vmax.f32 %v1064, %v1066
        %v4059 = vrot.slane %v4058, 4
        %v4060 = vmax.f32 %v4058, %v4059
        %v4061 = vrot.slane %v4060, 2
        %v4062 = vmax.f32 %v4060, %v4061
        %v4063 = vrot.slane %v4062, 1
        %v4064 = vmax.f32 %v4062, %v4063
        %v4065 = vmax.f32 %v1065, %v1067
        %v4066 = vrot.slane %v4065, 4
        %v4067 = vmax.f32 %v4065, %v4066
        %v4068 = vrot.slane %v4067, 2
        %v4069 = vmax.f32 %v4067, %v4068
        %v4070 = vrot.slane %v4069, 1
        %v4071 = vmax.f32 %v4069, %v4070
        %v4072 = vmax.f32 %v1068, %v1070
        %v4073 = vrot.slane %v4072, 4
        %v4074 = vmax.f32 %v4072, %v4073
        %v4075 = vrot.slane %v4074, 2
        %v4076 = vmax.f32 %v4074, %v4075
        %v4077 = vrot.slane %v4076, 1
        %v4078 = vmax.f32 %v4076, %v4077
        %v4079 = vmax.f32 %v1069, %v1071
        %v4080 = vrot.slane %v4079, 4
        %v4081 = vmax.f32 %v4079, %v4080
        %v4082 = vrot.slane %v4081, 2
        %v4083 = vmax.f32 %v4081, %v4082
        %v4084 = vrot.slane %v4083, 1
        %v4085 = vmax.f32 %v4083, %v4084
        %v4086 = vmax.f32 %v1072, %v1074
        %v4087 = vrot.slane %v4086, 4
        %v4088 = vmax.f32 %v4086, %v4087
        %v4089 = vrot.slane %v4088, 2
        %v4090 = vmax.f32 %v4088, %v4089
        %v4091 = vrot.slane %v4090, 1
        %v4092 = vmax.f32 %v4090, %v4091
        %v4093 = vmax.f32 %v1073, %v1075
        %v4094 = vrot.slane %v4093, 4
        %v4095 = vmax.f32 %v4093, %v4094
        %v4096 = vrot.slane %v4095, 2
        %v4097 = vmax.f32 %v4095, %v4096
        %v4098 = vrot.slane %v4097, 1
        %v4099 = vmax.f32 %v4097, %v4098
        %v4100 = vmax.f32 %v1076, %v1078
        %v4101 = vrot.slane %v4100, 4
        %v4102 = vmax.f32 %v4100, %v4101
        %v4103 = vrot.slane %v4102, 2
        %v4104 = vmax.f32 %v4102, %v4103
        %v4105 = vrot.slane %v4104, 1
        %v4106 = vmax.f32 %v4104, %v4105
        %v4107 = vmax.f32 %v1077, %v1079
        %v4108 = vrot.slane %v4107, 4
        %v4109 = vmax.f32 %v4107, %v4108
        %v4110 = vrot.slane %v4109, 2
        %v4111 = vmax.f32 %v4109, %v4110
        %v4112 = vrot.slane %v4111, 1
        %v4113 = vmax.f32 %v4111, %v4112
        %v4114 = vmax.f32 %v1080, %v1082
        %v4115 = vrot.slane %v4114, 4
        %v4116 = vmax.f32 %v4114, %v4115
        %v4117 = vrot.slane %v4116, 2
        %v4118 = vmax.f32 %v4116, %v4117
        %v4119 = vrot.slane %v4118, 1
        %v4120 = vmax.f32 %v4118, %v4119
        %v4121 = vmax.f32 %v1081, %v1083
        %v4122 = vrot.slane %v4121, 4
        %v4123 = vmax.f32 %v4121, %v4122
        %v4124 = vrot.slane %v4123, 2
        %v4125 = vmax.f32 %v4123, %v4124
        %v4126 = vrot.slane %v4125, 1
        %v4127 = vmax.f32 %v4125, %v4126
        %v4128 = vmax.f32 %v1084, %v1086
        %v4129 = vrot.slane %v4128, 4
        %v4130 = vmax.f32 %v4128, %v4129
        %v4131 = vrot.slane %v4130, 2
        %v4132 = vmax.f32 %v4130, %v4131
        %v4133 = vrot.slane %v4132, 1
        %v4134 = vmax.f32 %v4132, %v4133
        %v4135 = vmax.f32 %v1085, %v1087
        %v4136 = vrot.slane %v4135, 4
        %v4137 = vmax.f32 %v4135, %v4136
        %v4138 = vrot.slane %v4137, 2
        %v4139 = vmax.f32 %v4137, %v4138
        %v4140 = vrot.slane %v4139, 1
        %v4141 = vmax.f32 %v4139, %v4140
        %v4142 = vmax.f32 %v1088, %v1090
        %v4143 = vrot.slane %v4142, 4
        %v4144 = vmax.f32 %v4142, %v4143
        %v4145 = vrot.slane %v4144, 2
        %v4146 = vmax.f32 %v4144, %v4145
        %v4147 = vrot.slane %v4146, 1
        %v4148 = vmax.f32 %v4146, %v4147
        %v4149 = vmax.f32 %v1089, %v1091
        %v4150 = vrot.slane %v4149, 4
        %v4151 = vmax.f32 %v4149, %v4150
        %v4152 = vrot.slane %v4151, 2
        %v4153 = vmax.f32 %v4151, %v4152
        %v4154 = vrot.slane %v4153, 1
        %v4155 = vmax.f32 %v4153, %v4154
        %v4156 = vmax.f32 %v1092, %v1094
        %v4157 = vrot.slane %v4156, 4
        %v4158 = vmax.f32 %v4156, %v4157
        %v4159 = vrot.slane %v4158, 2
        %v4160 = vmax.f32 %v4158, %v4159
        %v4161 = vrot.slane %v4160, 1
        %v4162 = vmax.f32 %v4160, %v4161
        %v4163 = vmax.f32 %v1093, %v1095
        %v4164 = vrot.slane %v4163, 4
        %v4165 = vmax.f32 %v4163, %v4164
        %v4166 = vrot.slane %v4165, 2
        %v4167 = vmax.f32 %v4165, %v4166
        %v4168 = vrot.slane %v4167, 1
        %v4169 = vmax.f32 %v4167, %v4168
        %v4170 = vmax.f32 %v1096, %v1098
        %v4171 = vrot.slane %v4170, 4
        %v4172 = vmax.f32 %v4170, %v4171
        %v4173 = vrot.slane %v4172, 2
        %v4174 = vmax.f32 %v4172, %v4173
        %v4175 = vrot.slane %v4174, 1
        %v4176 = vmax.f32 %v4174, %v4175
        %v4177 = vmax.f32 %v1097, %v1099
        %v4178 = vrot.slane %v4177, 4
        %v4179 = vmax.f32 %v4177, %v4178
        %v4180 = vrot.slane %v4179, 2
        %v4181 = vmax.f32 %v4179, %v4180
        %v4182 = vrot.slane %v4181, 1
        %v4183 = vmax.f32 %v4181, %v4182
        %v4184 = vmax.f32 %v1100, %v1102
        %v4185 = vrot.slane %v4184, 4
        %v4186 = vmax.f32 %v4184, %v4185
        %v4187 = vrot.slane %v4186, 2
        %v4188 = vmax.f32 %v4186, %v4187
        %v4189 = vrot.slane %v4188, 1
        %v4190 = vmax.f32 %v4188, %v4189
        %v4191 = vmax.f32 %v1101, %v1103
        %v4192 = vrot.slane %v4191, 4
        %v4193 = vmax.f32 %v4191, %v4192
        %v4194 = vrot.slane %v4193, 2
        %v4195 = vmax.f32 %v4193, %v4194
        %v4196 = vrot.slane %v4195, 1
        %v4197 = vmax.f32 %v4195, %v4196
        %v4198 = vmax.f32 %v1104, %v1106
        %v4199 = vrot.slane %v4198, 4
        %v4200 = vmax.f32 %v4198, %v4199
        %v4201 = vrot.slane %v4200, 2
        %v4202 = vmax.f32 %v4200, %v4201
        %v4203 = vrot.slane %v4202, 1
        %v4204 = vmax.f32 %v4202, %v4203
        %v4205 = vmax.f32 %v1105, %v1107
        %v4206 = vrot.slane %v4205, 4
        %v4207 = vmax.f32 %v4205, %v4206
        %v4208 = vrot.slane %v4207, 2
        %v4209 = vmax.f32 %v4207, %v4208
        %v4210 = vrot.slane %v4209, 1
        %v4211 = vmax.f32 %v4209, %v4210
        %v4212 = vmax.f32 %v1108, %v1110
        %v4213 = vrot.slane %v4212, 4
        %v4214 = vmax.f32 %v4212, %v4213
        %v4215 = vrot.slane %v4214, 2
        %v4216 = vmax.f32 %v4214, %v4215
        %v4217 = vrot.slane %v4216, 1
        %v4218 = vmax.f32 %v4216, %v4217
        %v4219 = vmax.f32 %v1109, %v1111
        %v4220 = vrot.slane %v4219, 4
        %v4221 = vmax.f32 %v4219, %v4220
        %v4222 = vrot.slane %v4221, 2
        %v4223 = vmax.f32 %v4221, %v4222
        %v4224 = vrot.slane %v4223, 1
        %v4225 = vmax.f32 %v4223, %v4224
        %v4226 = vmax.f32 %v1112, %v1114
        %v4227 = vrot.slane %v4226, 4
        %v4228 = vmax.f32 %v4226, %v4227
        %v4229 = vrot.slane %v4228, 2
        %v4230 = vmax.f32 %v4228, %v4229
        %v4231 = vrot.slane %v4230, 1
        %v4232 = vmax.f32 %v4230, %v4231
        %v4233 = vmax.f32 %v1113, %v1115
        %v4234 = vrot.slane %v4233, 4
        %v4235 = vmax.f32 %v4233, %v4234
        %v4236 = vrot.slane %v4235, 2
        %v4237 = vmax.f32 %v4235, %v4236
        %v4238 = vrot.slane %v4237, 1
        %v4239 = vmax.f32 %v4237, %v4238
        %v4240 = vmax.f32 %v1116, %v1118
        %v4241 = vrot.slane %v4240, 4
        %v4242 = vmax.f32 %v4240, %v4241
        %v4243 = vrot.slane %v4242, 2
        %v4244 = vmax.f32 %v4242, %v4243
        %v4245 = vrot.slane %v4244, 1
        %v4246 = vmax.f32 %v4244, %v4245
        %v4247 = vmax.f32 %v1117, %v1119
        %v4248 = vrot.slane %v4247, 4
        %v4249 = vmax.f32 %v4247, %v4248
        %v4250 = vrot.slane %v4249, 2
        %v4251 = vmax.f32 %v4249, %v4250
        %v4252 = vrot.slane %v4251, 1
        %v4253 = vmax.f32 %v4251, %v4252
        %v4254 = vmax.f32 %v1120, %v1122
        %v4255 = vrot.slane %v4254, 4
        %v4256 = vmax.f32 %v4254, %v4255
        %v4257 = vrot.slane %v4256, 2
        %v4258 = vmax.f32 %v4256, %v4257
        %v4259 = vrot.slane %v4258, 1
        %v4260 = vmax.f32 %v4258, %v4259
        %v4261 = vmax.f32 %v1121, %v1123
        %v4262 = vrot.slane %v4261, 4
        %v4263 = vmax.f32 %v4261, %v4262
        %v4264 = vrot.slane %v4263, 2
        %v4265 = vmax.f32 %v4263, %v4264
        %v4266 = vrot.slane %v4265, 1
        %v4267 = vmax.f32 %v4265, %v4266
        %v4268 = vmax.f32 %v1124, %v1126
        %v4269 = vrot.slane %v4268, 4
        %v4270 = vmax.f32 %v4268, %v4269
        %v4271 = vrot.slane %v4270, 2
        %v4272 = vmax.f32 %v4270, %v4271
        %v4273 = vrot.slane %v4272, 1
        %v4274 = vmax.f32 %v4272, %v4273
        %v4275 = vmax.f32 %v1125, %v1127
        %v4276 = vrot.slane %v4275, 4
        %v4277 = vmax.f32 %v4275, %v4276
        %v4278 = vrot.slane %v4277, 2
        %v4279 = vmax.f32 %v4277, %v4278
        %v4280 = vrot.slane %v4279, 1
        %v4281 = vmax.f32 %v4279, %v4280
        %v4282 = vmax.f32 %v1128, %v1130
        %v4283 = vrot.slane %v4282, 4
        %v4284 = vmax.f32 %v4282, %v4283
        %v4285 = vrot.slane %v4284, 2
        %v4286 = vmax.f32 %v4284, %v4285
        %v4287 = vrot.slane %v4286, 1
        %v4288 = vmax.f32 %v4286, %v4287
        %v4289 = vmax.f32 %v1129, %v1131
        %v4290 = vrot.slane %v4289, 4
        %v4291 = vmax.f32 %v4289, %v4290
        %v4292 = vrot.slane %v4291, 2
        %v4293 = vmax.f32 %v4291, %v4292
        %v4294 = vrot.slane %v4293, 1
        %v4295 = vmax.f32 %v4293, %v4294
        %v4296 = vmax.f32 %v1132, %v1134
        %v4297 = vrot.slane %v4296, 4
        %v4298 = vmax.f32 %v4296, %v4297
        %v4299 = vrot.slane %v4298, 2
        %v4300 = vmax.f32 %v4298, %v4299
        %v4301 = vrot.slane %v4300, 1
        %v4302 = vmax.f32 %v4300, %v4301
        %v4303 = vmax.f32 %v1133, %v1135
        %v4304 = vrot.slane %v4303, 4
        %v4305 = vmax.f32 %v4303, %v4304
        %v4306 = vrot.slane %v4305, 2
        %v4307 = vmax.f32 %v4305, %v4306
        %v4308 = vrot.slane %v4307, 1
        %v4309 = vmax.f32 %v4307, %v4308
        %v4310 = vmax.f32 %v1136, %v1138
        %v4311 = vrot.slane %v4310, 4
        %v4312 = vmax.f32 %v4310, %v4311
        %v4313 = vrot.slane %v4312, 2
        %v4314 = vmax.f32 %v4312, %v4313
        %v4315 = vrot.slane %v4314, 1
        %v4316 = vmax.f32 %v4314, %v4315
        %v4317 = vmax.f32 %v1137, %v1139
        %v4318 = vrot.slane %v4317, 4
        %v4319 = vmax.f32 %v4317, %v4318
        %v4320 = vrot.slane %v4319, 2
        %v4321 = vmax.f32 %v4319, %v4320
        %v4322 = vrot.slane %v4321, 1
        %v4323 = vmax.f32 %v4321, %v4322
        %v4324 = vmax.f32 %v1140, %v1142
        %v4325 = vrot.slane %v4324, 4
        %v4326 = vmax.f32 %v4324, %v4325
        %v4327 = vrot.slane %v4326, 2
        %v4328 = vmax.f32 %v4326, %v4327
        %v4329 = vrot.slane %v4328, 1
        %v4330 = vmax.f32 %v4328, %v4329
        %v4331 = vmax.f32 %v1141, %v1143
        %v4332 = vrot.slane %v4331, 4
        %v4333 = vmax.f32 %v4331, %v4332
        %v4334 = vrot.slane %v4333, 2
        %v4335 = vmax.f32 %v4333, %v4334
        %v4336 = vrot.slane %v4335, 1
        %v4337 = vmax.f32 %v4335, %v4336
        %v4338 = vmax.f32 %v1144, %v1146
        %v4339 = vrot.slane %v4338, 4
        %v4340 = vmax.f32 %v4338, %v4339
        %v4341 = vrot.slane %v4340, 2
        %v4342 = vmax.f32 %v4340, %v4341
        %v4343 = vrot.slane %v4342, 1
        %v4344 = vmax.f32 %v4342, %v4343
        %v4345 = vmax.f32 %v1145, %v1147
        %v4346 = vrot.slane %v4345, 4
        %v4347 = vmax.f32 %v4345, %v4346
        %v4348 = vrot.slane %v4347, 2
        %v4349 = vmax.f32 %v4347, %v4348
        %v4350 = vrot.slane %v4349, 1
        %v4351 = vmax.f32 %v4349, %v4350
        %v4352 = vmax.f32 %v1148, %v1150
        %v4353 = vrot.slane %v4352, 4
        %v4354 = vmax.f32 %v4352, %v4353
        %v4355 = vrot.slane %v4354, 2
        %v4356 = vmax.f32 %v4354, %v4355
        %v4357 = vrot.slane %v4356, 1
        %v4358 = vmax.f32 %v4356, %v4357
        %v4359 = vmax.f32 %v1149, %v1151
        %v4360 = vrot.slane %v4359, 4
        %v4361 = vmax.f32 %v4359, %v4360
        %v4362 = vrot.slane %v4361, 2
        %v4363 = vmax.f32 %v4361, %v4362
        %v4364 = vrot.slane %v4363, 1
        %v4365 = vmax.f32 %v4363, %v4364
        %v4366 = vmax.f32 %v1152, %v1154
        %v4367 = vrot.slane %v4366, 4
        %v4368 = vmax.f32 %v4366, %v4367
        %v4369 = vrot.slane %v4368, 2
        %v4370 = vmax.f32 %v4368, %v4369
        %v4371 = vrot.slane %v4370, 1
        %v4372 = vmax.f32 %v4370, %v4371
        %v4373 = vmax.f32 %v1153, %v1155
        %v4374 = vrot.slane %v4373, 4
        %v4375 = vmax.f32 %v4373, %v4374
        %v4376 = vrot.slane %v4375, 2
        %v4377 = vmax.f32 %v4375, %v4376
        %v4378 = vrot.slane %v4377, 1
        %v4379 = vmax.f32 %v4377, %v4378
        %v4380 = vmax.f32 %v1156, %v1158
        %v4381 = vrot.slane %v4380, 4
        %v4382 = vmax.f32 %v4380, %v4381
        %v4383 = vrot.slane %v4382, 2
        %v4384 = vmax.f32 %v4382, %v4383
        %v4385 = vrot.slane %v4384, 1
        %v4386 = vmax.f32 %v4384, %v4385
        %v4387 = vmax.f32 %v1157, %v1159
        %v4388 = vrot.slane %v4387, 4
        %v4389 = vmax.f32 %v4387, %v4388
        %v4390 = vrot.slane %v4389, 2
        %v4391 = vmax.f32 %v4389, %v4390
        %v4392 = vrot.slane %v4391, 1
        %v4393 = vmax.f32 %v4391, %v4392
        %v4394 = vmax.f32 %v1160, %v1162
        %v4395 = vrot.slane %v4394, 4
        %v4396 = vmax.f32 %v4394, %v4395
        %v4397 = vrot.slane %v4396, 2
        %v4398 = vmax.f32 %v4396, %v4397
        %v4399 = vrot.slane %v4398, 1
        %v4400 = vmax.f32 %v4398, %v4399
        %v4401 = vmax.f32 %v1161, %v1163
        %v4402 = vrot.slane %v4401, 4
        %v4403 = vmax.f32 %v4401, %v4402
        %v4404 = vrot.slane %v4403, 2
        %v4405 = vmax.f32 %v4403, %v4404
        %v4406 = vrot.slane %v4405, 1
        %v4407 = vmax.f32 %v4405, %v4406
        %v4408 = vmax.f32 %v1164, %v1166
        %v4409 = vrot.slane %v4408, 4
        %v4410 = vmax.f32 %v4408, %v4409
        %v4411 = vrot.slane %v4410, 2
        %v4412 = vmax.f32 %v4410, %v4411
        %v4413 = vrot.slane %v4412, 1
        %v4414 = vmax.f32 %v4412, %v4413
        %v4415 = vmax.f32 %v1165, %v1167
        %v4416 = vrot.slane %v4415, 4
        %v4417 = vmax.f32 %v4415, %v4416
        %v4418 = vrot.slane %v4417, 2
        %v4419 = vmax.f32 %v4417, %v4418
        %v4420 = vrot.slane %v4419, 1
        %v4421 = vmax.f32 %v4419, %v4420
        %v4422 = vmax.f32 %v1168, %v1170
        %v4423 = vrot.slane %v4422, 4
        %v4424 = vmax.f32 %v4422, %v4423
        %v4425 = vrot.slane %v4424, 2
        %v4426 = vmax.f32 %v4424, %v4425
        %v4427 = vrot.slane %v4426, 1
        %v4428 = vmax.f32 %v4426, %v4427
        %v4429 = vmax.f32 %v1169, %v1171
        %v4430 = vrot.slane %v4429, 4
        %v4431 = vmax.f32 %v4429, %v4430
        %v4432 = vrot.slane %v4431, 2
        %v4433 = vmax.f32 %v4431, %v4432
        %v4434 = vrot.slane %v4433, 1
        %v4435 = vmax.f32 %v4433, %v4434
        %v4436 = vmax.f32 %v1172, %v1174
        %v4437 = vrot.slane %v4436, 4
        %v4438 = vmax.f32 %v4436, %v4437
        %v4439 = vrot.slane %v4438, 2
        %v4440 = vmax.f32 %v4438, %v4439
        %v4441 = vrot.slane %v4440, 1
        %v4442 = vmax.f32 %v4440, %v4441
        %v4443 = vmax.f32 %v1173, %v1175
        %v4444 = vrot.slane %v4443, 4
        %v4445 = vmax.f32 %v4443, %v4444
        %v4446 = vrot.slane %v4445, 2
        %v4447 = vmax.f32 %v4445, %v4446
        %v4448 = vrot.slane %v4447, 1
        %v4449 = vmax.f32 %v4447, %v4448
        %v4450 = vmax.f32 %v1176, %v1178
        %v4451 = vrot.slane %v4450, 4
        %v4452 = vmax.f32 %v4450, %v4451
        %v4453 = vrot.slane %v4452, 2
        %v4454 = vmax.f32 %v4452, %v4453
        %v4455 = vrot.slane %v4454, 1
        %v4456 = vmax.f32 %v4454, %v4455
        %v4457 = vmax.f32 %v1177, %v1179
        %v4458 = vrot.slane %v4457, 4
        %v4459 = vmax.f32 %v4457, %v4458
        %v4460 = vrot.slane %v4459, 2
        %v4461 = vmax.f32 %v4459, %v4460
        %v4462 = vrot.slane %v4461, 1
        %v4463 = vmax.f32 %v4461, %v4462
        %v4464 = vmax.f32 %v1180, %v1182
        %v4465 = vrot.slane %v4464, 4
        %v4466 = vmax.f32 %v4464, %v4465
        %v4467 = vrot.slane %v4466, 2
        %v4468 = vmax.f32 %v4466, %v4467
        %v4469 = vrot.slane %v4468, 1
        %v4470 = vmax.f32 %v4468, %v4469
        %v4471 = vmax.f32 %v1181, %v1183
        %v4472 = vrot.slane %v4471, 4
        %v4473 = vmax.f32 %v4471, %v4472
        %v4474 = vrot.slane %v4473, 2
        %v4475 = vmax.f32 %v4473, %v4474
        %v4476 = vrot.slane %v4475, 1
        %v4477 = vmax.f32 %v4475, %v4476
        %v4478 = vmax.f32 %v1184, %v1186
        %v4479 = vrot.slane %v4478, 4
        %v4480 = vmax.f32 %v4478, %v4479
        %v4481 = vrot.slane %v4480, 2
        %v4482 = vmax.f32 %v4480, %v4481
        %v4483 = vrot.slane %v4482, 1
        %v4484 = vmax.f32 %v4482, %v4483
        %v4485 = vmax.f32 %v1185, %v1187
        %v4486 = vrot.slane %v4485, 4
        %v4487 = vmax.f32 %v4485, %v4486
        %v4488 = vrot.slane %v4487, 2
        %v4489 = vmax.f32 %v4487, %v4488
        %v4490 = vrot.slane %v4489, 1
        %v4491 = vmax.f32 %v4489, %v4490
        %v4492 = vmax.f32 %v1188, %v1190
        %v4493 = vrot.slane %v4492, 4
        %v4494 = vmax.f32 %v4492, %v4493
        %v4495 = vrot.slane %v4494, 2
        %v4496 = vmax.f32 %v4494, %v4495
        %v4497 = vrot.slane %v4496, 1
        %v4498 = vmax.f32 %v4496, %v4497
        %v4499 = vmax.f32 %v1189, %v1191
        %v4500 = vrot.slane %v4499, 4
        %v4501 = vmax.f32 %v4499, %v4500
        %v4502 = vrot.slane %v4501, 2
        %v4503 = vmax.f32 %v4501, %v4502
        %v4504 = vrot.slane %v4503, 1
        %v4505 = vmax.f32 %v4503, %v4504
        %v4506 = vmax.f32 %v1192, %v1194
        %v4507 = vrot.slane %v4506, 4
        %v4508 = vmax.f32 %v4506, %v4507
        %v4509 = vrot.slane %v4508, 2
        %v4510 = vmax.f32 %v4508, %v4509
        %v4511 = vrot.slane %v4510, 1
        %v4512 = vmax.f32 %v4510, %v4511
        %v4513 = vmax.f32 %v1193, %v1195
        %v4514 = vrot.slane %v4513, 4
        %v4515 = vmax.f32 %v4513, %v4514
        %v4516 = vrot.slane %v4515, 2
        %v4517 = vmax.f32 %v4515, %v4516
        %v4518 = vrot.slane %v4517, 1
        %v4519 = vmax.f32 %v4517, %v4518
        %v4520 = vmax.f32 %v1196, %v1198
        %v4521 = vrot.slane %v4520, 4
        %v4522 = vmax.f32 %v4520, %v4521
        %v4523 = vrot.slane %v4522, 2
        %v4524 = vmax.f32 %v4522, %v4523
        %v4525 = vrot.slane %v4524, 1
        %v4526 = vmax.f32 %v4524, %v4525
        %v4527 = vmax.f32 %v1197, %v1199
        %v4528 = vrot.slane %v4527, 4
        %v4529 = vmax.f32 %v4527, %v4528
        %v4530 = vrot.slane %v4529, 2
        %v4531 = vmax.f32 %v4529, %v4530
        %v4532 = vrot.slane %v4531, 1
        %v4533 = vmax.f32 %v4531, %v4532
        %v4534 = vmax.f32 %v1200, %v1202
        %v4535 = vrot.slane %v4534, 4
        %v4536 = vmax.f32 %v4534, %v4535
        %v4537 = vrot.slane %v4536, 2
        %v4538 = vmax.f32 %v4536, %v4537
        %v4539 = vrot.slane %v4538, 1
        %v4540 = vmax.f32 %v4538, %v4539
        %v4541 = vmax.f32 %v1201, %v1203
        %v4542 = vrot.slane %v4541, 4
        %v4543 = vmax.f32 %v4541, %v4542
        %v4544 = vrot.slane %v4543, 2
        %v4545 = vmax.f32 %v4543, %v4544
        %v4546 = vrot.slane %v4545, 1
        %v4547 = vmax.f32 %v4545, %v4546
        %v4548 = vmax.f32 %v1204, %v1206
        %v4549 = vrot.slane %v4548, 4
        %v4550 = vmax.f32 %v4548, %v4549
        %v4551 = vrot.slane %v4550, 2
        %v4552 = vmax.f32 %v4550, %v4551
        %v4553 = vrot.slane %v4552, 1
        %v4554 = vmax.f32 %v4552, %v4553
        %v4555 = vmax.f32 %v1205, %v1207
        %v4556 = vrot.slane %v4555, 4
        %v4557 = vmax.f32 %v4555, %v4556
        %v4558 = vrot.slane %v4557, 2
        %v4559 = vmax.f32 %v4557, %v4558
        %v4560 = vrot.slane %v4559, 1
        %v4561 = vmax.f32 %v4559, %v4560
        %v4562 = vmax.f32 %v1208, %v1210
        %v4563 = vrot.slane %v4562, 4
        %v4564 = vmax.f32 %v4562, %v4563
        %v4565 = vrot.slane %v4564, 2
        %v4566 = vmax.f32 %v4564, %v4565
        %v4567 = vrot.slane %v4566, 1
        %v4568 = vmax.f32 %v4566, %v4567
        %v4569 = vmax.f32 %v1209, %v1211
        %v4570 = vrot.slane %v4569, 4
        %v4571 = vmax.f32 %v4569, %v4570
        %v4572 = vrot.slane %v4571, 2
        %v4573 = vmax.f32 %v4571, %v4572
        %v4574 = vrot.slane %v4573, 1
        %v4575 = vmax.f32 %v4573, %v4574
        %v4576 = vmax.f32 %v1212, %v1214
        %v4577 = vrot.slane %v4576, 4
        %v4578 = vmax.f32 %v4576, %v4577
        %v4579 = vrot.slane %v4578, 2
        %v4580 = vmax.f32 %v4578, %v4579
        %v4581 = vrot.slane %v4580, 1
        %v4582 = vmax.f32 %v4580, %v4581
        %v4583 = vmax.f32 %v1213, %v1215
        %v4584 = vrot.slane %v4583, 4
        %v4585 = vmax.f32 %v4583, %v4584
        %v4586 = vrot.slane %v4585, 2
        %v4587 = vmax.f32 %v4585, %v4586
        %v4588 = vrot.slane %v4587, 1
        %v4589 = vmax.f32 %v4587, %v4588
        %v4590 = vmax.f32 %v1216, %v1218
        %v4591 = vrot.slane %v4590, 4
        %v4592 = vmax.f32 %v4590, %v4591
        %v4593 = vrot.slane %v4592, 2
        %v4594 = vmax.f32 %v4592, %v4593
        %v4595 = vrot.slane %v4594, 1
        %v4596 = vmax.f32 %v4594, %v4595
        %v4597 = vmax.f32 %v1217, %v1219
        %v4598 = vrot.slane %v4597, 4
        %v4599 = vmax.f32 %v4597, %v4598
        %v4600 = vrot.slane %v4599, 2
        %v4601 = vmax.f32 %v4599, %v4600
        %v4602 = vrot.slane %v4601, 1
        %v4603 = vmax.f32 %v4601, %v4602
        %v4604 = vmax.f32 %v1220, %v1222
        %v4605 = vrot.slane %v4604, 4
        %v4606 = vmax.f32 %v4604, %v4605
        %v4607 = vrot.slane %v4606, 2
        %v4608 = vmax.f32 %v4606, %v4607
        %v4609 = vrot.slane %v4608, 1
        %v4610 = vmax.f32 %v4608, %v4609
        %v4611 = vmax.f32 %v1221, %v1223
        %v4612 = vrot.slane %v4611, 4
        %v4613 = vmax.f32 %v4611, %v4612
        %v4614 = vrot.slane %v4613, 2
        %v4615 = vmax.f32 %v4613, %v4614
        %v4616 = vrot.slane %v4615, 1
        %v4617 = vmax.f32 %v4615, %v4616
        %v4618 = vmax.f32 %v1224, %v1226
        %v4619 = vrot.slane %v4618, 4
        %v4620 = vmax.f32 %v4618, %v4619
        %v4621 = vrot.slane %v4620, 2
        %v4622 = vmax.f32 %v4620, %v4621
        %v4623 = vrot.slane %v4622, 1
        %v4624 = vmax.f32 %v4622, %v4623
        %v4625 = vmax.f32 %v1225, %v1227
        %v4626 = vrot.slane %v4625, 4
        %v4627 = vmax.f32 %v4625, %v4626
        %v4628 = vrot.slane %v4627, 2
        %v4629 = vmax.f32 %v4627, %v4628
        %v4630 = vrot.slane %v4629, 1
        %v4631 = vmax.f32 %v4629, %v4630
        %v4632 = vmax.f32 %v1228, %v1230
        %v4633 = vrot.slane %v4632, 4
        %v4634 = vmax.f32 %v4632, %v4633
        %v4635 = vrot.slane %v4634, 2
        %v4636 = vmax.f32 %v4634, %v4635
        %v4637 = vrot.slane %v4636, 1
        %v4638 = vmax.f32 %v4636, %v4637
        %v4639 = vmax.f32 %v1229, %v1231
        %v4640 = vrot.slane %v4639, 4
        %v4641 = vmax.f32 %v4639, %v4640
        %v4642 = vrot.slane %v4641, 2
        %v4643 = vmax.f32 %v4641, %v4642
        %v4644 = vrot.slane %v4643, 1
        %v4645 = vmax.f32 %v4643, %v4644
        %v4646 = vmax.f32 %v1232, %v1234
        %v4647 = vrot.slane %v4646, 4
        %v4648 = vmax.f32 %v4646, %v4647
        %v4649 = vrot.slane %v4648, 2
        %v4650 = vmax.f32 %v4648, %v4649
        %v4651 = vrot.slane %v4650, 1
        %v4652 = vmax.f32 %v4650, %v4651
        %v4653 = vmax.f32 %v1233, %v1235
        %v4654 = vrot.slane %v4653, 4
        %v4655 = vmax.f32 %v4653, %v4654
        %v4656 = vrot.slane %v4655, 2
        %v4657 = vmax.f32 %v4655, %v4656
        %v4658 = vrot.slane %v4657, 1
        %v4659 = vmax.f32 %v4657, %v4658
        %v4660 = vmax.f32 %v1236, %v1238
        %v4661 = vrot.slane %v4660, 4
        %v4662 = vmax.f32 %v4660, %v4661
        %v4663 = vrot.slane %v4662, 2
        %v4664 = vmax.f32 %v4662, %v4663
        %v4665 = vrot.slane %v4664, 1
        %v4666 = vmax.f32 %v4664, %v4665
        %v4667 = vmax.f32 %v1237, %v1239
        %v4668 = vrot.slane %v4667, 4
        %v4669 = vmax.f32 %v4667, %v4668
        %v4670 = vrot.slane %v4669, 2
        %v4671 = vmax.f32 %v4669, %v4670
        %v4672 = vrot.slane %v4671, 1
        %v4673 = vmax.f32 %v4671, %v4672
        %v4674 = vmax.f32 %v1240, %v1242
        %v4675 = vrot.slane %v4674, 4
        %v4676 = vmax.f32 %v4674, %v4675
        %v4677 = vrot.slane %v4676, 2
        %v4678 = vmax.f32 %v4676, %v4677
        %v4679 = vrot.slane %v4678, 1
        %v4680 = vmax.f32 %v4678, %v4679
        %v4681 = vmax.f32 %v1241, %v1243
        %v4682 = vrot.slane %v4681, 4
        %v4683 = vmax.f32 %v4681, %v4682
        %v4684 = vrot.slane %v4683, 2
        %v4685 = vmax.f32 %v4683, %v4684
        %v4686 = vrot.slane %v4685, 1
        %v4687 = vmax.f32 %v4685, %v4686
        %v4688 = vmax.f32 %v1244, %v1246
        %v4689 = vrot.slane %v4688, 4
        %v4690 = vmax.f32 %v4688, %v4689
        %v4691 = vrot.slane %v4690, 2
        %v4692 = vmax.f32 %v4690, %v4691
        %v4693 = vrot.slane %v4692, 1
        %v4694 = vmax.f32 %v4692, %v4693
        %v4695 = vmax.f32 %v1245, %v1247
        %v4696 = vrot.slane %v4695, 4
        %v4697 = vmax.f32 %v4695, %v4696
        %v4698 = vrot.slane %v4697, 2
        %v4699 = vmax.f32 %v4697, %v4698
        %v4700 = vrot.slane %v4699, 1
        %v4701 = vmax.f32 %v4699, %v4700
        %v4702 = vmax.f32 %v1248, %v1250
        %v4703 = vrot.slane %v4702, 4
        %v4704 = vmax.f32 %v4702, %v4703
        %v4705 = vrot.slane %v4704, 2
        %v4706 = vmax.f32 %v4704, %v4705
        %v4707 = vrot.slane %v4706, 1
        %v4708 = vmax.f32 %v4706, %v4707
        %v4709 = vmax.f32 %v1249, %v1251
        %v4710 = vrot.slane %v4709, 4
        %v4711 = vmax.f32 %v4709, %v4710
        %v4712 = vrot.slane %v4711, 2
        %v4713 = vmax.f32 %v4711, %v4712
        %v4714 = vrot.slane %v4713, 1
        %v4715 = vmax.f32 %v4713, %v4714
        %v4716 = vmax.f32 %v1252, %v1254
        %v4717 = vrot.slane %v4716, 4
        %v4718 = vmax.f32 %v4716, %v4717
        %v4719 = vrot.slane %v4718, 2
        %v4720 = vmax.f32 %v4718, %v4719
        %v4721 = vrot.slane %v4720, 1
        %v4722 = vmax.f32 %v4720, %v4721
        %v4723 = vmax.f32 %v1253, %v1255
        %v4724 = vrot.slane %v4723, 4
        %v4725 = vmax.f32 %v4723, %v4724
        %v4726 = vrot.slane %v4725, 2
        %v4727 = vmax.f32 %v4725, %v4726
        %v4728 = vrot.slane %v4727, 1
        %v4729 = vmax.f32 %v4727, %v4728
        %v4730 = vmax.f32 %v1256, %v1258
        %v4731 = vrot.slane %v4730, 4
        %v4732 = vmax.f32 %v4730, %v4731
        %v4733 = vrot.slane %v4732, 2
        %v4734 = vmax.f32 %v4732, %v4733
        %v4735 = vrot.slane %v4734, 1
        %v4736 = vmax.f32 %v4734, %v4735
        %v4737 = vmax.f32 %v1257, %v1259
        %v4738 = vrot.slane %v4737, 4
        %v4739 = vmax.f32 %v4737, %v4738
        %v4740 = vrot.slane %v4739, 2
        %v4741 = vmax.f32 %v4739, %v4740
        %v4742 = vrot.slane %v4741, 1
        %v4743 = vmax.f32 %v4741, %v4742
        %v4744 = vmax.f32 %v1260, %v1262
        %v4745 = vrot.slane %v4744, 4
        %v4746 = vmax.f32 %v4744, %v4745
        %v4747 = vrot.slane %v4746, 2
        %v4748 = vmax.f32 %v4746, %v4747
        %v4749 = vrot.slane %v4748, 1
        %v4750 = vmax.f32 %v4748, %v4749
        %v4751 = vmax.f32 %v1261, %v1263
        %v4752 = vrot.slane %v4751, 4
        %v4753 = vmax.f32 %v4751, %v4752
        %v4754 = vrot.slane %v4753, 2
        %v4755 = vmax.f32 %v4753, %v4754
        %v4756 = vrot.slane %v4755, 1
        %v4757 = vmax.f32 %v4755, %v4756
        %v4758 = vmax.f32 %v1264, %v1266
        %v4759 = vrot.slane %v4758, 4
        %v4760 = vmax.f32 %v4758, %v4759
        %v4761 = vrot.slane %v4760, 2
        %v4762 = vmax.f32 %v4760, %v4761
        %v4763 = vrot.slane %v4762, 1
        %v4764 = vmax.f32 %v4762, %v4763
        %v4765 = vmax.f32 %v1265, %v1267
        %v4766 = vrot.slane %v4765, 4
        %v4767 = vmax.f32 %v4765, %v4766
        %v4768 = vrot.slane %v4767, 2
        %v4769 = vmax.f32 %v4767, %v4768
        %v4770 = vrot.slane %v4769, 1
        %v4771 = vmax.f32 %v4769, %v4770
        %v4772 = vmax.f32 %v1268, %v1270
        %v4773 = vrot.slane %v4772, 4
        %v4774 = vmax.f32 %v4772, %v4773
        %v4775 = vrot.slane %v4774, 2
        %v4776 = vmax.f32 %v4774, %v4775
        %v4777 = vrot.slane %v4776, 1
        %v4778 = vmax.f32 %v4776, %v4777
        %v4779 = vmax.f32 %v1269, %v1271
        %v4780 = vrot.slane %v4779, 4
        %v4781 = vmax.f32 %v4779, %v4780
        %v4782 = vrot.slane %v4781, 2
        %v4783 = vmax.f32 %v4781, %v4782
        %v4784 = vrot.slane %v4783, 1
        %v4785 = vmax.f32 %v4783, %v4784
        %v4786 = vmax.f32 %v1272, %v1274
        %v4787 = vrot.slane %v4786, 4
        %v4788 = vmax.f32 %v4786, %v4787
        %v4789 = vrot.slane %v4788, 2
        %v4790 = vmax.f32 %v4788, %v4789
        %v4791 = vrot.slane %v4790, 1
        %v4792 = vmax.f32 %v4790, %v4791
        %v4793 = vmax.f32 %v1273, %v1275
        %v4794 = vrot.slane %v4793, 4
        %v4795 = vmax.f32 %v4793, %v4794
        %v4796 = vrot.slane %v4795, 2
        %v4797 = vmax.f32 %v4795, %v4796
        %v4798 = vrot.slane %v4797, 1
        %v4799 = vmax.f32 %v4797, %v4798
        %v4800 = vmax.f32 %v1276, %v1278
        %v4801 = vrot.slane %v4800, 4
        %v4802 = vmax.f32 %v4800, %v4801
        %v4803 = vrot.slane %v4802, 2
        %v4804 = vmax.f32 %v4802, %v4803
        %v4805 = vrot.slane %v4804, 1
        %v4806 = vmax.f32 %v4804, %v4805
        %v4807 = vmax.f32 %v1277, %v1279
        %v4808 = vrot.slane %v4807, 4
        %v4809 = vmax.f32 %v4807, %v4808
        %v4810 = vrot.slane %v4809, 2
        %v4811 = vmax.f32 %v4809, %v4810
        %v4812 = vrot.slane %v4811, 1
        %v4813 = vmax.f32 %v4811, %v4812
        %v4814 = vmax.f32 %v1280, %v1282
        %v4815 = vrot.slane %v4814, 4
        %v4816 = vmax.f32 %v4814, %v4815
        %v4817 = vrot.slane %v4816, 2
        %v4818 = vmax.f32 %v4816, %v4817
        %v4819 = vrot.slane %v4818, 1
        %v4820 = vmax.f32 %v4818, %v4819
        %v4821 = vmax.f32 %v1281, %v1283
        %v4822 = vrot.slane %v4821, 4
        %v4823 = vmax.f32 %v4821, %v4822
        %v4824 = vrot.slane %v4823, 2
        %v4825 = vmax.f32 %v4823, %v4824
        %v4826 = vrot.slane %v4825, 1
        %v4827 = vmax.f32 %v4825, %v4826
        %v4828 = vmax.f32 %v1284, %v1286
        %v4829 = vrot.slane %v4828, 4
        %v4830 = vmax.f32 %v4828, %v4829
        %v4831 = vrot.slane %v4830, 2
        %v4832 = vmax.f32 %v4830, %v4831
        %v4833 = vrot.slane %v4832, 1
        %v4834 = vmax.f32 %v4832, %v4833
        %v4835 = vmax.f32 %v1285, %v1287
        %v4836 = vrot.slane %v4835, 4
        %v4837 = vmax.f32 %v4835, %v4836
        %v4838 = vrot.slane %v4837, 2
        %v4839 = vmax.f32 %v4837, %v4838
        %v4840 = vrot.slane %v4839, 1
        %v4841 = vmax.f32 %v4839, %v4840
        %v4842 = vmax.f32 %v1288, %v1290
        %v4843 = vrot.slane %v4842, 4
        %v4844 = vmax.f32 %v4842, %v4843
        %v4845 = vrot.slane %v4844, 2
        %v4846 = vmax.f32 %v4844, %v4845
        %v4847 = vrot.slane %v4846, 1
        %v4848 = vmax.f32 %v4846, %v4847
        %v4849 = vmax.f32 %v1289, %v1291
        %v4850 = vrot.slane %v4849, 4
        %v4851 = vmax.f32 %v4849, %v4850
        %v4852 = vrot.slane %v4851, 2
        %v4853 = vmax.f32 %v4851, %v4852
        %v4854 = vrot.slane %v4853, 1
        %v4855 = vmax.f32 %v4853, %v4854
        %v4856 = vmax.f32 %v1292, %v1294
        %v4857 = vrot.slane %v4856, 4
        %v4858 = vmax.f32 %v4856, %v4857
        %v4859 = vrot.slane %v4858, 2
        %v4860 = vmax.f32 %v4858, %v4859
        %v4861 = vrot.slane %v4860, 1
        %v4862 = vmax.f32 %v4860, %v4861
        %v4863 = vmax.f32 %v1293, %v1295
        %v4864 = vrot.slane %v4863, 4
        %v4865 = vmax.f32 %v4863, %v4864
        %v4866 = vrot.slane %v4865, 2
        %v4867 = vmax.f32 %v4865, %v4866
        %v4868 = vrot.slane %v4867, 1
        %v4869 = vmax.f32 %v4867, %v4868
        %v4870 = vmax.f32 %v1296, %v1298
        %v4871 = vrot.slane %v4870, 4
        %v4872 = vmax.f32 %v4870, %v4871
        %v4873 = vrot.slane %v4872, 2
        %v4874 = vmax.f32 %v4872, %v4873
        %v4875 = vrot.slane %v4874, 1
        %v4876 = vmax.f32 %v4874, %v4875
        %v4877 = vmax.f32 %v1297, %v1299
        %v4878 = vrot.slane %v4877, 4
        %v4879 = vmax.f32 %v4877, %v4878
        %v4880 = vrot.slane %v4879, 2
        %v4881 = vmax.f32 %v4879, %v4880
        %v4882 = vrot.slane %v4881, 1
        %v4883 = vmax.f32 %v4881, %v4882
        %v4884 = vld [vmem:[#allocation4] sm:$0xff]
        %v4885 = vld [vmem:[#allocation4 + $0x8] sm:$0xff]
        %v4886 = vld [vmem:[#allocation4 + $0x10] sm:$0xff]
        %v4887 = vld [vmem:[#allocation4 + $0x18] sm:$0xff]
        %v4888 = vld [vmem:[#allocation4 + $0x20] sm:$0xff]
        %v4889 = vld [vmem:[#allocation4 + $0x28] sm:$0xff]
        %v4890 = vld [vmem:[#allocation4 + $0x30] sm:$0xff]
        %v4891 = vld [vmem:[#allocation4 + $0x38] sm:$0xff]
        %v4892 = vld [vmem:[#allocation4 + $0x40] sm:$0x1]
        %v4893 = vld [vmem:[#allocation4 + $0x48] sm:$0x1]
        %v4894 = vld [vmem:[#allocation6] sm:$0xff]
        %v4895 = vld [vmem:[#allocation6 + $0x8] sm:$0xff]
        %v4896 = vld [vmem:[#allocation6 + $0x10] sm:$0xff]
        %v4897 = vld [vmem:[#allocation6 + $0x18] sm:$0xff]
        %v4898 = vld [vmem:[#allocation6 + $0x20] sm:$0xff]
        %v4899 = vld [vmem:[#allocation6 + $0x28] sm:$0xff]
        %v4900 = vld [vmem:[#allocation6 + $0x30] sm:$0xff]
        %v4901 = vld [vmem:[#allocation6 + $0x38] sm:$0xff]
        %v4902 = vld [vmem:[#allocation6 + $0x40] sm:$0x1]
        %v4903 = vld [vmem:[#allocation6 + $0x48] sm:$0x1]
        %vm5416 = vcmask 1041409
        %v5417 = vsel %vm5416, %v1320, %v1306
        %vm5418 = vcmask 1042434
        %v5419 = vsel %vm5418, %v1334, %v5417
        %vm5420 = vcmask 1043459
        %v5421 = vsel %vm5420, %v1348, %v5419
        %vm5422 = vcmask 1044484
        %v5423 = vsel %vm5422, %v1362, %v5421
        %vm5424 = vcmask 1045509
        %v5425 = vsel %vm5424, %v1376, %v5423
        %vm5426 = vcmask 1046534
        %v5427 = vsel %vm5426, %v1390, %v5425
        %vm5428 = vcmask 1047559
        %v5429 = vsel %vm5428, %v1404, %v5427
        %v5430 = vsel %vm5416, %v1327, %v1313
        %v5431 = vsel %vm5418, %v1341, %v5430
        %v5432 = vsel %vm5420, %v1355, %v5431
        %v5433 = vsel %vm5422, %v1369, %v5432
        %v5434 = vsel %vm5424, %v1383, %v5433
        %v5435 = vsel %vm5426, %v1397, %v5434
        %v5436 = vsel %vm5428, %v1411, %v5435
        %v5437 = vsel %vm5416, %v1432, %v1418
        %v5438 = vsel %vm5418, %v1446, %v5437
        %v5439 = vsel %vm5420, %v1460, %v5438
        %v5440 = vsel %vm5422, %v1474, %v5439
        %v5441 = vsel %vm5424, %v1488, %v5440
        %v5442 = vsel %vm5426, %v1502, %v5441
        %v5443 = vsel %vm5428, %v1516, %v5442
        %v5444 = vsel %vm5416, %v1439, %v1425
        %v5445 = vsel %vm5418, %v1453, %v5444
        %v5446 = vsel %vm5420, %v1467, %v5445
        %v5447 = vsel %vm5422, %v1481, %v5446
        %v5448 = vsel %vm5424, %v1495, %v5447
        %v5449 = vsel %vm5426, %v1509, %v5448
        %v5450 = vsel %vm5428, %v1523, %v5449
        %v5451 = vsel %vm5416, %v1544, %v1530
        %v5452 = vsel %vm5418, %v1558, %v5451
        %v5453 = vsel %vm5420, %v1572, %v5452
        %v5454 = vsel %vm5422, %v1586, %v5453
        %v5455 = vsel %vm5424, %v1600, %v5454
        %v5456 = vsel %vm5426, %v1614, %v5455
        %v5457 = vsel %vm5428, %v1628, %v5456
        %v5458 = vsel %vm5416, %v1551, %v1537
        %v5459 = vsel %vm5418, %v1565, %v5458
        %v5460 = vsel %vm5420, %v1579, %v5459
        %v5461 = vsel %vm5422, %v1593, %v5460
        %v5462 = vsel %vm5424, %v1607, %v5461
        %v5463 = vsel %vm5426, %v1621, %v5462
        %v5464 = vsel %vm5428, %v1635, %v5463
        %v5465 = vsel %vm5416, %v1656, %v1642
        %v5466 = vsel %vm5418, %v1670, %v5465
        %v5467 = vsel %vm5420, %v1684, %v5466
        %v5468 = vsel %vm5422, %v1698, %v5467
        %v5469 = vsel %vm5424, %v1712, %v5468
        %v5470 = vsel %vm5426, %v1726, %v5469
        %v5471 = vsel %vm5428, %v1740, %v5470
        %v5472 = vsel %vm5416, %v1663, %v1649
        %v5473 = vsel %vm5418, %v1677, %v5472
        %v5474 = vsel %vm5420, %v1691, %v5473
        %v5475 = vsel %vm5422, %v1705, %v5474
        %v5476 = vsel %vm5424, %v1719, %v5475
        %v5477 = vsel %vm5426, %v1733, %v5476
        %v5478 = vsel %vm5428, %v1747, %v5477
        %v5479 = vsel %vm5416, %v1768, %v1754
        %v5480 = vsel %vm5418, %v1782, %v5479
        %v5481 = vsel %vm5420, %v1796, %v5480
        %v5482 = vsel %vm5422, %v1810, %v5481
        %v5483 = vsel %vm5424, %v1824, %v5482
        %v5484 = vsel %vm5426, %v1838, %v5483
        %v5485 = vsel %vm5428, %v1852, %v5484
        %v5486 = vsel %vm5416, %v1775, %v1761
        %v5487 = vsel %vm5418, %v1789, %v5486
        %v5488 = vsel %vm5420, %v1803, %v5487
        %v5489 = vsel %vm5422, %v1817, %v5488
        %v5490 = vsel %vm5424, %v1831, %v5489
        %v5491 = vsel %vm5426, %v1845, %v5490
        %v5492 = vsel %vm5428, %v1859, %v5491
        %v5493 = vsel %vm5416, %v1880, %v1866
        %v5494 = vsel %vm5418, %v1894, %v5493
        %v5495 = vsel %vm5420, %v1908, %v5494
        %v5496 = vsel %vm5422, %v1922, %v5495
        %v5497 = vsel %vm5424, %v1936, %v5496
        %v5498 = vsel %vm5426, %v1950, %v5497
        %v5499 = vsel %vm5428, %v1964, %v5498
        %v5500 = vsel %vm5416, %v1887, %v1873
        %v5501 = vsel %vm5418, %v1901, %v5500
        %v5502 = vsel %vm5420, %v1915, %v5501
        %v5503 = vsel %vm5422, %v1929, %v5502
        %v5504 = vsel %vm5424, %v1943, %v5503
        %v5505 = vsel %vm5426, %v1957, %v5504
        %v5506 = vsel %vm5428, %v1971, %v5505
        %v5507 = vsel %vm5416, %v1992, %v1978
        %v5508 = vsel %vm5418, %v2006, %v5507
        %v5509 = vsel %vm5420, %v2020, %v5508
        %v5510 = vsel %vm5422, %v2034, %v5509
        %v5511 = vsel %vm5424, %v2048, %v5510
        %v5512 = vsel %vm5426, %v2062, %v5511
        %v5513 = vsel %vm5428, %v2076, %v5512
        %v5514 = vsel %vm5416, %v1999, %v1985
        %v5515 = vsel %vm5418, %v2013, %v5514
        %v5516 = vsel %vm5420, %v2027, %v5515
        %v5517 = vsel %vm5422, %v2041, %v5516
        %v5518 = vsel %vm5424, %v2055, %v5517
        %v5519 = vsel %vm5426, %v2069, %v5518
        %v5520 = vsel %vm5428, %v2083, %v5519
        %v5521 = vsel %vm5416, %v2104, %v2090
        %v5522 = vsel %vm5418, %v2118, %v5521
        %v5523 = vsel %vm5420, %v2132, %v5522
        %v5524 = vsel %vm5422, %v2146, %v5523
        %v5525 = vsel %vm5424, %v2160, %v5524
        %v5526 = vsel %vm5426, %v2174, %v5525
        %v5527 = vsel %vm5428, %v2188, %v5526
        %v5528 = vsel %vm5416, %v2111, %v2097
        %v5529 = vsel %vm5418, %v2125, %v5528
        %v5530 = vsel %vm5420, %v2139, %v5529
        %v5531 = vsel %vm5422, %v2153, %v5530
        %v5532 = vsel %vm5424, %v2167, %v5531
        %v5533 = vsel %vm5426, %v2181, %v5532
        %v5534 = vsel %vm5428, %v2195, %v5533
        %v5535 = vsel %vm5416, %v2216, %v2202
        %v5536 = vsel %vm5418, %v2230, %v5535
        %v5537 = vsel %vm5420, %v2244, %v5536
        %v5538 = vsel %vm5422, %v2258, %v5537
        %v5539 = vsel %vm5424, %v2272, %v5538
        %v5540 = vsel %vm5426, %v2286, %v5539
        %v5541 = vsel %vm5428, %v2300, %v5540
        %v5542 = vsel %vm5416, %v2223, %v2209
        %v5543 = vsel %vm5418, %v2237, %v5542
        %v5544 = vsel %vm5420, %v2251, %v5543
        %v5545 = vsel %vm5422, %v2265, %v5544
        %v5546 = vsel %vm5424, %v2279, %v5545
        %v5547 = vsel %vm5426, %v2293, %v5546
        %v5548 = vsel %vm5428, %v2307, %v5547
        %v5549 = vsel %vm5416, %v2328, %v2314
        %v5550 = vsel %vm5418, %v2342, %v5549
        %v5551 = vsel %vm5420, %v2356, %v5550
        %v5552 = vsel %vm5422, %v2370, %v5551
        %v5553 = vsel %vm5424, %v2384, %v5552
        %v5554 = vsel %vm5426, %v2398, %v5553
        %v5555 = vsel %vm5428, %v2412, %v5554
        %v5556 = vsel %vm5416, %v2335, %v2321
        %v5557 = vsel %vm5418, %v2349, %v5556
        %v5558 = vsel %vm5420, %v2363, %v5557
        %v5559 = vsel %vm5422, %v2377, %v5558
        %v5560 = vsel %vm5424, %v2391, %v5559
        %v5561 = vsel %vm5426, %v2405, %v5560
        %v5562 = vsel %vm5428, %v2419, %v5561
        %v5563 = vsel %vm5416, %v2440, %v2426
        %v5564 = vsel %vm5418, %v2454, %v5563
        %v5565 = vsel %vm5420, %v2468, %v5564
        %v5566 = vsel %vm5422, %v2482, %v5565
        %v5567 = vsel %vm5424, %v2496, %v5566
        %v5568 = vsel %vm5426, %v2510, %v5567
        %v5569 = vsel %vm5428, %v2524, %v5568
        %v5570 = vsel %vm5416, %v2447, %v2433
        %v5571 = vsel %vm5418, %v2461, %v5570
        %v5572 = vsel %vm5420, %v2475, %v5571
        %v5573 = vsel %vm5422, %v2489, %v5572
        %v5574 = vsel %vm5424, %v2503, %v5573
        %v5575 = vsel %vm5426, %v2517, %v5574
        %v5576 = vsel %vm5428, %v2531, %v5575
        %v5577 = vsel %vm5416, %v2552, %v2538
        %v5578 = vsel %vm5418, %v2566, %v5577
        %v5579 = vsel %vm5420, %v2580, %v5578
        %v5580 = vsel %vm5422, %v2594, %v5579
        %v5581 = vsel %vm5424, %v2608, %v5580
        %v5582 = vsel %vm5426, %v2622, %v5581
        %v5583 = vsel %vm5428, %v2636, %v5582
        %v5584 = vsel %vm5416, %v2559, %v2545
        %v5585 = vsel %vm5418, %v2573, %v5584
        %v5586 = vsel %vm5420, %v2587, %v5585
        %v5587 = vsel %vm5422, %v2601, %v5586
        %v5588 = vsel %vm5424, %v2615, %v5587
        %v5589 = vsel %vm5426, %v2629, %v5588
        %v5590 = vsel %vm5428, %v2643, %v5589
        %v5591 = vsel %vm5416, %v2664, %v2650
        %v5592 = vsel %vm5418, %v2678, %v5591
        %v5593 = vsel %vm5420, %v2692, %v5592
        %v5594 = vsel %vm5422, %v2706, %v5593
        %v5595 = vsel %vm5424, %v2720, %v5594
        %v5596 = vsel %vm5426, %v2734, %v5595
        %v5597 = vsel %vm5428, %v2748, %v5596
        %v5598 = vsel %vm5416, %v2671, %v2657
        %v5599 = vsel %vm5418, %v2685, %v5598
        %v5600 = vsel %vm5420, %v2699, %v5599
        %v5601 = vsel %vm5422, %v2713, %v5600
        %v5602 = vsel %vm5424, %v2727, %v5601
        %v5603 = vsel %vm5426, %v2741, %v5602
        %v5604 = vsel %vm5428, %v2755, %v5603
        %v5605 = vsel %vm5416, %v2776, %v2762
        %v5606 = vsel %vm5418, %v2790, %v5605
        %v5607 = vsel %vm5420, %v2804, %v5606
        %v5608 = vsel %vm5422, %v2818, %v5607
        %v5609 = vsel %vm5424, %v2832, %v5608
        %v5610 = vsel %vm5426, %v2846, %v5609
        %v5611 = vsel %vm5428, %v2860, %v5610
        %v5612 = vsel %vm5416, %v2783, %v2769
        %v5613 = vsel %vm5418, %v2797, %v5612
        %v5614 = vsel %vm5420, %v2811, %v5613
        %v5615 = vsel %vm5422, %v2825, %v5614
        %v5616 = vsel %vm5424, %v2839, %v5615
        %v5617 = vsel %vm5426, %v2853, %v5616
        %v5618 = vsel %vm5428, %v2867, %v5617
        %v5619 = vsel %vm5416, %v2888, %v2874
        %v5620 = vsel %vm5418, %v2902, %v5619
        %v5621 = vsel %vm5420, %v2916, %v5620
        %v5622 = vsel %vm5422, %v2930, %v5621
        %v5623 = vsel %vm5424, %v2944, %v5622
        %v5624 = vsel %vm5426, %v2958, %v5623
        %v5625 = vsel %vm5428, %v2972, %v5624
        %v5626 = vsel %vm5416, %v2895, %v2881
        %v5627 = vsel %vm5418, %v2909, %v5626
        %v5628 = vsel %vm5420, %v2923, %v5627
        %v5629 = vsel %vm5422, %v2937, %v5628
        %v5630 = vsel %vm5424, %v2951, %v5629
        %v5631 = vsel %vm5426, %v2965, %v5630
        %v5632 = vsel %vm5428, %v2979, %v5631
        %v5633 = vsel %vm5416, %v3000, %v2986
        %v5634 = vsel %vm5418, %v3014, %v5633
        %v5635 = vsel %vm5420, %v3028, %v5634
        %v5636 = vsel %vm5422, %v3042, %v5635
        %v5637 = vsel %vm5424, %v3056, %v5636
        %v5638 = vsel %vm5426, %v3070, %v5637
        %v5639 = vsel %vm5428, %v3084, %v5638
        %v5640 = vsel %vm5416, %v3007, %v2993
        %v5641 = vsel %vm5418, %v3021, %v5640
        %v5642 = vsel %vm5420, %v3035, %v5641
        %v5643 = vsel %vm5422, %v3049, %v5642
        %v5644 = vsel %vm5424, %v3063, %v5643
        %v5645 = vsel %vm5426, %v3077, %v5644
        %v5646 = vsel %vm5428, %v3091, %v5645
        %v5647 = vsel %vm5416, %v3112, %v3098
        %v5648 = vsel %vm5418, %v3126, %v5647
        %v5649 = vsel %vm5420, %v3140, %v5648
        %v5650 = vsel %vm5422, %v3154, %v5649
        %v5651 = vsel %vm5424, %v3168, %v5650
        %v5652 = vsel %vm5426, %v3182, %v5651
        %v5653 = vsel %vm5428, %v3196, %v5652
        %v5654 = vsel %vm5416, %v3119, %v3105
        %v5655 = vsel %vm5418, %v3133, %v5654
        %v5656 = vsel %vm5420, %v3147, %v5655
        %v5657 = vsel %vm5422, %v3161, %v5656
        %v5658 = vsel %vm5424, %v3175, %v5657
        %v5659 = vsel %vm5426, %v3189, %v5658
        %v5660 = vsel %vm5428, %v3203, %v5659
        %v5661 = vsel %vm5416, %v3224, %v3210
        %v5662 = vsel %vm5418, %v3238, %v5661
        %v5663 = vsel %vm5420, %v3252, %v5662
        %v5664 = vsel %vm5422, %v3266, %v5663
        %v5665 = vsel %vm5424, %v3280, %v5664
        %v5666 = vsel %vm5426, %v3294, %v5665
        %v5667 = vsel %vm5428, %v3308, %v5666
        %v5668 = vsel %vm5416, %v3231, %v3217
        %v5669 = vsel %vm5418, %v3245, %v5668
        %v5670 = vsel %vm5420, %v3259, %v5669
        %v5671 = vsel %vm5422, %v3273, %v5670
        %v5672 = vsel %vm5424, %v3287, %v5671
        %v5673 = vsel %vm5426, %v3301, %v5672
        %v5674 = vsel %vm5428, %v3315, %v5673
        %v5675 = vsel %vm5416, %v3336, %v3322
        %v5676 = vsel %vm5418, %v3350, %v5675
        %v5677 = vsel %vm5420, %v3364, %v5676
        %v5678 = vsel %vm5422, %v3378, %v5677
        %v5679 = vsel %vm5424, %v3392, %v5678
        %v5680 = vsel %vm5426, %v3406, %v5679
        %v5681 = vsel %vm5428, %v3420, %v5680
        %v5682 = vsel %vm5416, %v3343, %v3329
        %v5683 = vsel %vm5418, %v3357, %v5682
        %v5684 = vsel %vm5420, %v3371, %v5683
        %v5685 = vsel %vm5422, %v3385, %v5684
        %v5686 = vsel %vm5424, %v3399, %v5685
        %v5687 = vsel %vm5426, %v3413, %v5686
        %v5688 = vsel %vm5428, %v3427, %v5687
        %v5689 = vsel %vm5416, %v3448, %v3434
        %v5690 = vsel %vm5418, %v3462, %v5689
        %v5691 = vsel %vm5420, %v3476, %v5690
        %v5692 = vsel %vm5422, %v3490, %v5691
        %v5693 = vsel %vm5424, %v3504, %v5692
        %v5694 = vsel %vm5426, %v3518, %v5693
        %v5695 = vsel %vm5428, %v3532, %v5694
        %v5696 = vsel %vm5416, %v3455, %v3441
        %v5697 = vsel %vm5418, %v3469, %v5696
        %v5698 = vsel %vm5420, %v3483, %v5697
        %v5699 = vsel %vm5422, %v3497, %v5698
        %v5700 = vsel %vm5424, %v3511, %v5699
        %v5701 = vsel %vm5426, %v3525, %v5700
        %v5702 = vsel %vm5428, %v3539, %v5701
        %v5703 = vsel %vm5416, %v3560, %v3546
        %v5704 = vsel %vm5418, %v3574, %v5703
        %v5705 = vsel %vm5420, %v3588, %v5704
        %v5706 = vsel %vm5422, %v3602, %v5705
        %v5707 = vsel %vm5424, %v3616, %v5706
        %v5708 = vsel %vm5426, %v3630, %v5707
        %v5709 = vsel %vm5428, %v3644, %v5708
        %v5710 = vsel %vm5416, %v3567, %v3553
        %v5711 = vsel %vm5418, %v3581, %v5710
        %v5712 = vsel %vm5420, %v3595, %v5711
        %v5713 = vsel %vm5422, %v3609, %v5712
        %v5714 = vsel %vm5424, %v3623, %v5713
        %v5715 = vsel %vm5426, %v3637, %v5714
        %v5716 = vsel %vm5428, %v3651, %v5715
        %v5717 = vsel %vm5416, %v3672, %v3658
        %v5718 = vsel %vm5418, %v3686, %v5717
        %v5719 = vsel %vm5420, %v3700, %v5718
        %v5720 = vsel %vm5422, %v3714, %v5719
        %v5721 = vsel %vm5424, %v3728, %v5720
        %v5722 = vsel %vm5426, %v3742, %v5721
        %v5723 = vsel %vm5428, %v3756, %v5722
        %v5724 = vsel %vm5416, %v3679, %v3665
        %v5725 = vsel %vm5418, %v3693, %v5724
        %v5726 = vsel %vm5420, %v3707, %v5725
        %v5727 = vsel %vm5422, %v3721, %v5726
        %v5728 = vsel %vm5424, %v3735, %v5727
        %v5729 = vsel %vm5426, %v3749, %v5728
        %v5730 = vsel %vm5428, %v3763, %v5729
        %v5731 = vsel %vm5416, %v3784, %v3770
        %v5732 = vsel %vm5418, %v3798, %v5731
        %v5733 = vsel %vm5420, %v3812, %v5732
        %v5734 = vsel %vm5422, %v3826, %v5733
        %v5735 = vsel %vm5424, %v3840, %v5734
        %v5736 = vsel %vm5426, %v3854, %v5735
        %v5737 = vsel %vm5428, %v3868, %v5736
        %v5738 = vsel %vm5416, %v3791, %v3777
        %v5739 = vsel %vm5418, %v3805, %v5738
        %v5740 = vsel %vm5420, %v3819, %v5739
        %v5741 = vsel %vm5422, %v3833, %v5740
        %v5742 = vsel %vm5424, %v3847, %v5741
        %v5743 = vsel %vm5426, %v3861, %v5742
        %v5744 = vsel %vm5428, %v3875, %v5743
        %v5745 = vsel %vm5416, %v3896, %v3882
        %v5746 = vsel %vm5418, %v3910, %v5745
        %v5747 = vsel %vm5420, %v3924, %v5746
        %v5748 = vsel %vm5422, %v3938, %v5747
        %v5749 = vsel %vm5424, %v3952, %v5748
        %v5750 = vsel %vm5426, %v3966, %v5749
        %v5751 = vsel %vm5428, %v3980, %v5750
        %v5752 = vsel %vm5416, %v3903, %v3889
        %v5753 = vsel %vm5418, %v3917, %v5752
        %v5754 = vsel %vm5420, %v3931, %v5753
        %v5755 = vsel %vm5422, %v3945, %v5754
        %v5756 = vsel %vm5424, %v3959, %v5755
        %v5757 = vsel %vm5426, %v3973, %v5756
        %v5758 = vsel %vm5428, %v3987, %v5757
        %v5759 = vsel %vm5416, %v4008, %v3994
        %v5760 = vsel %vm5418, %v4022, %v5759
        %v5761 = vsel %vm5420, %v4036, %v5760
        %v5762 = vsel %vm5422, %v4050, %v5761
        %v5763 = vsel %vm5424, %v4064, %v5762
        %v5764 = vsel %vm5426, %v4078, %v5763
        %v5765 = vsel %vm5428, %v4092, %v5764
        %v5766 = vsel %vm5416, %v4015, %v4001
        %v5767 = vsel %vm5418, %v4029, %v5766
        %v5768 = vsel %vm5420, %v4043, %v5767
        %v5769 = vsel %vm5422, %v4057, %v5768
        %v5770 = vsel %vm5424, %v4071, %v5769
        %v5771 = vsel %vm5426, %v4085, %v5770
        %v5772 = vsel %vm5428, %v4099, %v5771
        %v5773 = vsel %vm5416, %v4120, %v4106
        %v5774 = vsel %vm5418, %v4134, %v5773
        %v5775 = vsel %vm5420, %v4148, %v5774
        %v5776 = vsel %vm5422, %v4162, %v5775
        %v5777 = vsel %vm5424, %v4176, %v5776
        %v5778 = vsel %vm5426, %v4190, %v5777
        %v5779 = vsel %vm5428, %v4204, %v5778
        %v5780 = vsel %vm5416, %v4127, %v4113
        %v5781 = vsel %vm5418, %v4141, %v5780
        %v5782 = vsel %vm5420, %v4155, %v5781
        %v5783 = vsel %vm5422, %v4169, %v5782
        %v5784 = vsel %vm5424, %v4183, %v5783
        %v5785 = vsel %vm5426, %v4197, %v5784
        %v5786 = vsel %vm5428, %v4211, %v5785
        %v5787 = vsel %vm5416, %v4232, %v4218
        %v5788 = vsel %vm5418, %v4246, %v5787
        %v5789 = vsel %vm5420, %v4260, %v5788
        %v5790 = vsel %vm5422, %v4274, %v5789
        %v5791 = vsel %vm5424, %v4288, %v5790
        %v5792 = vsel %vm5426, %v4302, %v5791
        %v5793 = vsel %vm5428, %v4316, %v5792
        %v5794 = vsel %vm5416, %v4239, %v4225
        %v5795 = vsel %vm5418, %v4253, %v5794
        %v5796 = vsel %vm5420, %v4267, %v5795
        %v5797 = vsel %vm5422, %v4281, %v5796
        %v5798 = vsel %vm5424, %v4295, %v5797
        %v5799 = vsel %vm5426, %v4309, %v5798
        %v5800 = vsel %vm5428, %v4323, %v5799
        %v5801 = vsel %vm5416, %v4344, %v4330
        %v5802 = vsel %vm5418, %v4358, %v5801
        %v5803 = vsel %vm5420, %v4372, %v5802
        %v5804 = vsel %vm5422, %v4386, %v5803
        %v5805 = vsel %vm5424, %v4400, %v5804
        %v5806 = vsel %vm5426, %v4414, %v5805
        %v5807 = vsel %vm5428, %v4428, %v5806
        %v5808 = vsel %vm5416, %v4351, %v4337
        %v5809 = vsel %vm5418, %v4365, %v5808
        %v5810 = vsel %vm5420, %v4379, %v5809
        %v5811 = vsel %vm5422, %v4393, %v5810
        %v5812 = vsel %vm5424, %v4407, %v5811
        %v5813 = vsel %vm5426, %v4421, %v5812
        %v5814 = vsel %vm5428, %v4435, %v5813
        %v5815 = vsel %vm5416, %v4456, %v4442
        %v5816 = vsel %vm5418, %v4470, %v5815
        %v5817 = vsel %vm5420, %v4484, %v5816
        %v5818 = vsel %vm5422, %v4498, %v5817
        %v5819 = vsel %vm5424, %v4512, %v5818
        %v5820 = vsel %vm5426, %v4526, %v5819
        %v5821 = vsel %vm5428, %v4540, %v5820
        %v5822 = vsel %vm5416, %v4463, %v4449
        %v5823 = vsel %vm5418, %v4477, %v5822
        %v5824 = vsel %vm5420, %v4491, %v5823
        %v5825 = vsel %vm5422, %v4505, %v5824
        %v5826 = vsel %vm5424, %v4519, %v5825
        %v5827 = vsel %vm5426, %v4533, %v5826
        %v5828 = vsel %vm5428, %v4547, %v5827
        %v5829 = vsel %vm5416, %v4568, %v4554
        %v5830 = vsel %vm5418, %v4582, %v5829
        %v5831 = vsel %vm5420, %v4596, %v5830
        %v5832 = vsel %vm5422, %v4610, %v5831
        %v5833 = vsel %vm5424, %v4624, %v5832
        %v5834 = vsel %vm5426, %v4638, %v5833
        %v5835 = vsel %vm5428, %v4652, %v5834
        %v5836 = vsel %vm5416, %v4575, %v4561
        %v5837 = vsel %vm5418, %v4589, %v5836
        %v5838 = vsel %vm5420, %v4603, %v5837
        %v5839 = vsel %vm5422, %v4617, %v5838
        %v5840 = vsel %vm5424, %v4631, %v5839
        %v5841 = vsel %vm5426, %v4645, %v5840
        %v5842 = vsel %vm5428, %v4659, %v5841
        %v5843 = vsel %vm5416, %v4680, %v4666
        %v5844 = vsel %vm5418, %v4694, %v5843
        %v5845 = vsel %vm5420, %v4708, %v5844
        %v5846 = vsel %vm5422, %v4722, %v5845
        %v5847 = vsel %vm5424, %v4736, %v5846
        %v5848 = vsel %vm5426, %v4750, %v5847
        %v5849 = vsel %vm5428, %v4764, %v5848
        %v5850 = vsel %vm5416, %v4687, %v4673
        %v5851 = vsel %vm5418, %v4701, %v5850
        %v5852 = vsel %vm5420, %v4715, %v5851
        %v5853 = vsel %vm5422, %v4729, %v5852
        %v5854 = vsel %vm5424, %v4743, %v5853
        %v5855 = vsel %vm5426, %v4757, %v5854
        %v5856 = vsel %vm5428, %v4771, %v5855
        %v5857 = vsel %vm5416, %v4792, %v4778
        %v5858 = vsel %vm5418, %v4806, %v5857
        %v5859 = vsel %vm5420, %v4820, %v5858
        %v5860 = vsel %vm5422, %v4834, %v5859
        %v5861 = vsel %vm5424, %v4848, %v5860
        %v5862 = vsel %vm5426, %v4862, %v5861
        %v5863 = vsel %vm5428, %v4876, %v5862
        %v5864 = vsel %vm5416, %v4799, %v4785
        %v5865 = vsel %vm5418, %v4813, %v5864
        %v5866 = vsel %vm5420, %v4827, %v5865
        %v5867 = vsel %vm5422, %v4841, %v5866
        %v5868 = vsel %vm5424, %v4855, %v5867
        %v5869 = vsel %vm5426, %v4869, %v5868
        %v5870 = vsel %vm5428, %v4883, %v5869
        %5935 = vmatpush.msra.mxu0 %v5639
        %5936 = vmatpush.msra.mxu0 %v5625
        %5937 = vmatpush.msra.mxu0 %v5611
        %5938 = vmatpush.msra.mxu0 %v5597
        %5939 = vmatpush.msra.mxu0 %v5583
        %5940 = vmatpush.msra.mxu0 %v5569
        %5941 = vmatpush.msra.mxu0 %v5555
        %5942 = vmatpush.msra.mxu0 %v5541
        %5943 = vmatpush.msra.mxu0 %v5527
        %5944 = vmatpush.msra.mxu0 %v5513
        %5945 = vmatpush.msra.mxu0 %v5499
        %5946 = vmatpush.msra.mxu0 %v5485
        %5947 = vmatpush.msra.mxu0 %v5471
        %5948 = vmatpush.msra.mxu0 %v5457
        %5949 = vmatpush.msra.mxu0 %v5443
        %5950 = vmatpush.msra.mxu0 %v5429
        %5951 = vmatmul.f32.gmra.mxu0 %v4884
        %v5952 = vpop.f32.mrf.mxu0
        %v5953 = vadd.f32 %v4894, %v5952
        %5954 = vmatmul.f32.gmra.mxu0 %v4886
        %v5955 = vpop.f32.mrf.mxu0
        %v5956 = vadd.f32 %v4896, %v5955
        %5957 = vmatmul.f32.gmra.mxu0 %v4888
        %v5958 = vpop.f32.mrf.mxu0
        %v5959 = vadd.f32 %v4898, %v5958
        %5960 = vmatmul.f32.gmra.mxu0 %v4890
        %v5961 = vpop.f32.mrf.mxu0
        %v5962 = vadd.f32 %v4900, %v5961
        %5963 = vmatmul.f32.gmra.mxu0 %v4892
        %v5964 = vpop.f32.mrf.mxu0
        %v5965 = vadd.f32 %v4902, %v5964
        %5966 = vdwg.mxu0
        %5967 = vmatpush.msra.mxu0 %v5863
        %5968 = vmatpush.msra.mxu0 %v5849
        %5969 = vmatpush.msra.mxu0 %v5835
        %5970 = vmatpush.msra.mxu0 %v5821
        %5971 = vmatpush.msra.mxu0 %v5807
        %5972 = vmatpush.msra.mxu0 %v5793
        %5973 = vmatpush.msra.mxu0 %v5779
        %5974 = vmatpush.msra.mxu0 %v5765
        %5975 = vmatpush.msra.mxu0 %v5751
        %5976 = vmatpush.msra.mxu0 %v5737
        %5977 = vmatpush.msra.mxu0 %v5723
        %5978 = vmatpush.msra.mxu0 %v5709
        %5979 = vmatpush.msra.mxu0 %v5695
        %5980 = vmatpush.msra.mxu0 %v5681
        %5981 = vmatpush.msra.mxu0 %v5667
        %5982 = vmatpush.msra.mxu0 %v5653
        %5983 = vmatmul.f32.gmra.mxu0 %v4885
        %v5984 = vpop.f32.mrf.mxu0
        %v5985 = vadd.f32 %v5953, %v5984
        %5986 = vmatmul.f32.gmra.mxu0 %v4887
        %v5987 = vpop.f32.mrf.mxu0
        %v5988 = vadd.f32 %v5956, %v5987
        %5989 = vmatmul.f32.gmra.mxu0 %v4889
        %v5990 = vpop.f32.mrf.mxu0
        %v5991 = vadd.f32 %v5959, %v5990
        %5992 = vmatmul.f32.gmra.mxu0 %v4891
        %v5993 = vpop.f32.mrf.mxu0
        %v5994 = vadd.f32 %v5962, %v5993
        %5995 = vmatmul.f32.gmra.mxu0 %v4893
        %v5996 = vpop.f32.mrf.mxu0
        %v5997 = vadd.f32 %v5965, %v5996
        %5998 = vdwg.mxu0
        %5999 = vmatpush.msra.mxu0 %v5646
        %6000 = vmatpush.msra.mxu0 %v5632
        %6001 = vmatpush.msra.mxu0 %v5618
        %6002 = vmatpush.msra.mxu0 %v5604
        %6003 = vmatpush.msra.mxu0 %v5590
        %6004 = vmatpush.msra.mxu0 %v5576
        %6005 = vmatpush.msra.mxu0 %v5562
        %6006 = vmatpush.msra.mxu0 %v5548
        %6007 = vmatpush.msra.mxu0 %v5534
        %6008 = vmatpush.msra.mxu0 %v5520
        %6009 = vmatpush.msra.mxu0 %v5506
        %6010 = vmatpush.msra.mxu0 %v5492
        %6011 = vmatpush.msra.mxu0 %v5478
        %6012 = vmatpush.msra.mxu0 %v5464
        %6013 = vmatpush.msra.mxu0 %v5450
        %6014 = vmatpush.msra.mxu0 %v5436
        %6015 = vmatmul.f32.gmra.mxu0 %v4884
        %v6016 = vpop.f32.mrf.mxu0
        %v6017 = vadd.f32 %v4895, %v6016
        %6018 = vmatmul.f32.gmra.mxu0 %v4886
        %v6019 = vpop.f32.mrf.mxu0
        %v6020 = vadd.f32 %v4897, %v6019
        %6021 = vmatmul.f32.gmra.mxu0 %v4888
        %v6022 = vpop.f32.mrf.mxu0
        %v6023 = vadd.f32 %v4899, %v6022
        %6024 = vmatmul.f32.gmra.mxu0 %v4890
        %v6025 = vpop.f32.mrf.mxu0
        %v6026 = vadd.f32 %v4901, %v6025
        %6027 = vmatmul.f32.gmra.mxu0 %v4892
        %v6028 = vpop.f32.mrf.mxu0
        %v6029 = vadd.f32 %v4903, %v6028
        %6030 = vdwg.mxu0
        %6031 = vmatpush.msra.mxu0 %v5870
        %6032 = vmatpush.msra.mxu0 %v5856
        %6033 = vmatpush.msra.mxu0 %v5842
        %6034 = vmatpush.msra.mxu0 %v5828
        %6035 = vmatpush.msra.mxu0 %v5814
        %6036 = vmatpush.msra.mxu0 %v5800
        %6037 = vmatpush.msra.mxu0 %v5786
        %6038 = vmatpush.msra.mxu0 %v5772
        %6039 = vmatpush.msra.mxu0 %v5758
        %6040 = vmatpush.msra.mxu0 %v5744
        %6041 = vmatpush.msra.mxu0 %v5730
        %6042 = vmatpush.msra.mxu0 %v5716
        %6043 = vmatpush.msra.mxu0 %v5702
        %6044 = vmatpush.msra.mxu0 %v5688
        %6045 = vmatpush.msra.mxu0 %v5674
        %6046 = vmatpush.msra.mxu0 %v5660
        %6047 = vmatmul.f32.gmra.mxu0 %v4885
        %v6048 = vpop.f32.mrf.mxu0
        %v6049 = vadd.f32 %v6017, %v6048
        %6050 = vmatmul.f32.gmra.mxu0 %v4887
        %v6051 = vpop.f32.mrf.mxu0
        %v6052 = vadd.f32 %v6020, %v6051
        %6053 = vmatmul.f32.gmra.mxu0 %v4889
        %v6054 = vpop.f32.mrf.mxu0
        %v6055 = vadd.f32 %v6023, %v6054
        %6056 = vmatmul.f32.gmra.mxu0 %v4891
        %v6057 = vpop.f32.mrf.mxu0
        %v6058 = vadd.f32 %v6026, %v6057
        %6059 = vmatmul.f32.gmra.mxu0 %v4893
        %v6060 = vpop.f32.mrf.mxu0
        %v6061 = vadd.f32 %v6029, %v6060
        %6062 = vdwg.mxu0
        %v6063 = vmax.f32 %v5985, %v5991
        %v6064 = vmax.f32 %v5988, %v5994
        %vm6065 = vcmask 1040384
        %v6066 = vsel %vm6065, %v5997, -inf
        %v6067 = vmax.f32 %v6063, %v6066
        %v6068 = vmax.f32 %v6067, %v6064
        %v6069 = vrot.slane %v6068, 4
        %v6070 = vmax.f32 %v6068, %v6069
        %v6071 = vrot.slane %v6070, 2
        %v6072 = vmax.f32 %v6070, %v6071
        %v6073 = vrot.slane %v6072, 1
        %v6074 = vmax.f32 %v6072, %v6073
        %v6075 = vmax.f32 %v6049, %v6055
        %v6076 = vmax.f32 %v6052, %v6058
        %v6077 = vsel %vm6065, %v6061, -inf
        %v6078 = vmax.f32 %v6075, %v6077
        %v6079 = vmax.f32 %v6078, %v6076
        %v6080 = vrot.slane %v6079, 4
        %v6081 = vmax.f32 %v6079, %v6080
        %v6082 = vrot.slane %v6081, 2
        %v6083 = vmax.f32 %v6081, %v6082
        %v6084 = vrot.slane %v6083, 1
        %v6085 = vmax.f32 %v6083, %v6084
        %v6086 = vsub.f32 %v5985, %v6074
        %v6087 = vsub.f32 %v6049, %v6085
        %v6088 = vsub.f32 %v5988, %v6074
        %v6089 = vsub.f32 %v6052, %v6085
        %v6090 = vsub.f32 %v5991, %v6074
        %v6091 = vsub.f32 %v6055, %v6085
        %v6092 = vsub.f32 %v5994, %v6074
        %v6093 = vsub.f32 %v6058, %v6085
        %v6094 = vsub.f32 %v5997, %v6074
        %v6095 = vsub.f32 %v6061, %v6085
        %v6096 = vmul.f32 %v6086, 1.442695
        %v6097 = vpow.pop %v6096
        %v6098 = vmul.f32 %v6087, 1.442695
        %v6099 = vpow.pop %v6098
        %v6100 = vmul.f32 %v6088, 1.442695
        %v6101 = vpow.pop %v6100
        %v6102 = vmul.f32 %v6089, 1.442695
        %v6103 = vpow.pop %v6102
        %v6104 = vmul.f32 %v6090, 1.442695
        %v6105 = vpow.pop %v6104
        %v6106 = vmul.f32 %v6091, 1.442695
        %v6107 = vpow.pop %v6106
        %v6108 = vmul.f32 %v6092, 1.442695
        %v6109 = vpow.pop %v6108
        %v6110 = vmul.f32 %v6093, 1.442695
        %v6111 = vpow.pop %v6110
        %v6112 = vmul.f32 %v6094, 1.442695
        %v6113 = vpow.pop %v6112
        %v6114 = vmul.f32 %v6095, 1.442695
        %v6115 = vpow.pop %v6114
        %v6116 = vadd.f32 %v6097, %v6101
        %v6117 = vadd.f32 %v6116, %v6105
        %v6118 = vadd.f32 %v6117, %v6109
        %v6119 = vsel %vm6065, %v6113, 0.0
        %v6120 = vadd.f32 %v6118, %v6119
        %v6121 = vrot.slane %v6120, 4
        %v6122 = vadd.f32 %v6120, %v6121
        %v6123 = vrot.slane %v6122, 2
        %v6124 = vadd.f32 %v6122, %v6123
        %v6125 = vrot.slane %v6124, 1
        %v6126 = vadd.f32 %v6124, %v6125
        %v6127 = vadd.f32 %v6099, %v6103
        %v6128 = vadd.f32 %v6127, %v6107
        %v6129 = vadd.f32 %v6128, %v6111
        %v6130 = vsel %vm6065, %v6115, 0.0
        %v6131 = vadd.f32 %v6129, %v6130
        %v6132 = vrot.slane %v6131, 4
        %v6133 = vadd.f32 %v6131, %v6132
        %v6134 = vrot.slane %v6133, 2
        %v6135 = vadd.f32 %v6133, %v6134
        %v6136 = vrot.slane %v6135, 1
        %v6137 = vadd.f32 %v6135, %v6136
        %v6138 = vlog2.pop %v6126
        %v6139 = vmul.f32 %v6138, 0.6931472
        %v6140 = vlog2.pop %v6137
        %v6141 = vmul.f32 %v6140, 0.6931472
        %v6142 = vsub.f32 %v6086, %v6139
        %v6143 = vsub.f32 %v6087, %v6141
        %v6144 = vsub.f32 %v6088, %v6139
        %v6145 = vsub.f32 %v6089, %v6141
        %v6146 = vsub.f32 %v6090, %v6139
        %v6147 = vsub.f32 %v6091, %v6141
        %v6148 = vsub.f32 %v6092, %v6139
        %v6149 = vsub.f32 %v6093, %v6141
        %v6150 = vsub.f32 %v6094, %v6139
        %v6151 = vsub.f32 %v6095, %v6141
        %6152 = vst [vmem:[%s274] sm:$0xff] %v6142
        %6153 = vst [vmem:[%s274 + $0x8] sm:$0xff] %v6143
        %6154 = vst [vmem:[%s274 + $0x10] sm:$0xff] %v6144
        %6155 = vst [vmem:[%s274 + $0x18] sm:$0xff] %v6145
        %6156 = vst [vmem:[%s274 + $0x20] sm:$0xff] %v6146
        %6157 = vst [vmem:[%s274 + $0x28] sm:$0xff] %v6147
        %6158 = vst [vmem:[%s274 + $0x30] sm:$0xff] %v6148
        %6159 = vst [vmem:[%s274 + $0x38] sm:$0xff] %v6149
        %6160 = vst [vmem:[%s274 + $0x40] sm:$0x1] %v6150
        %6161 = vst [vmem:[%s274 + $0x48] sm:$0x1] %v6151
        %s6162 = smul.u32 2, %s24
        %p6163 = scmp.lt.s32.totalorder %s23, 1
        %s6164 = scalar_select %p6163, %s23, 1
        %p6165 = scmp.lt.s32.totalorder %s6162, 1
        %s6166 = scalar_select %p6165, %s6162, 1
        %s6167 = smul.addr %s6164, 10
        %s6168 = sadd.s32 %s6166, %s6167
        %s6169 = smul.addr %s6168, 8
        %s6170 = scalar_lea.vmem %s3, %s6169
        // Predicated region
        $region45: #{tpu_custom_call.1} parent=31 // pred_check
          %p6171 = pneg %p134
        $region46: #{tpu_custom_call.1} parent=31 // pred_check_branch
          %6173 = sbr.rel (%p6171) target = $region48
        $region47: #{tpu_custom_call.1} parent=31 // pred_region
          %s6174 = smul.u32 2, %s24
        $region48: #{tpu_custom_call.1} parent=31 // pred_fallthru
          _
      $region32: #{tpu_custom_call.1} parent=5 // pred_fallthru
        _
      %p6175 = scmp.le.s32.totalorder 2, %s13
      // Predicated region
      $region49: #{tpu_custom_call.1} parent=5 // pred_check
        %p6176 = pneg %p6175
      $region50: #{tpu_custom_call.1} parent=5 // pred_check_branch
        %6178 = sbr.rel (%p6176) target = $region52
      $region51: #{tpu_custom_call.1} parent=5 // pred_region
        %s6179 = ssub.s32 %s13, 2
        // Predicated region
        $region53: #{tpu_custom_call.1} parent=51 // pred_check
          %p6180 = pneg %p140
        $region54: #{tpu_custom_call.1} parent=51 // pred_check_branch
          %6182 = sbr.rel (%p6180) target = $region56
        $region55: #{tpu_custom_call.1} parent=51 // pred_region
          %s6183 = smul.u32 2, %s27
          %p6184 = scmp.lt.s32.totalorder %s26, 1
          %s6185 = scalar_select %p6184, %s26, 1
          %p6186 = scmp.lt.s32.totalorder %s6183, 1
          %s6187 = scalar_select %p6186, %s6183, 1
          %s6188 = smul.addr %s6185, 10
          %s6189 = sadd.s32 %s6187, %s6188
          %s6190 = smul.addr %s6189, 8
          %s6191 = scalar_lea.vmem %s3, %s6190
        $region56: #{tpu_custom_call.1} parent=51 // pred_fallthru
          _
      $region52: #{tpu_custom_call.1} parent=5 // pred_fallthru
        _
    $region6: #{tpu_custom_call.1} parent=1 // loop_footer
      %s17 = sadd.s32 1, %s13
    $region7: #{tpu_custom_call.1} parent=1 // loop_footer_branch
      %12 = sbr.rel target = $region3
    $region8: #{tpu_custom_call.1} parent=1 // loop_exit
      _
    %6192 = vsyncpa [#allocation3], 1
    %s6193 = scalar_lea.sflag [#allocation3], 1
    %6194 = vsyncpa %s6193, 1
    %6195 = vsyncpa [#allocation5], 1

</llo_original>
